<compile_context>
chip_gen: v7x
topology: tpu7x:2x2x1
jax: 0.10.0
libtpu: 0.0.40
codegen_flags: <defaults>
</compile_context>

<pallas_src>
import functools

import jax
import jax.numpy as jnp
from jax import lax
from jax.experimental import pallas as pl
from jax.experimental.pallas import tpu as pltpu

EPS = 1e-5
LANE = 128


def _round_up(x, m):
    return ((x + m - 1) // m) * m


# ----------------------------------------------------------------------------
# In-kernel helpers
# ----------------------------------------------------------------------------
def _conv3x3_acc(src_ref, w_ref, *, oh, ow, stride, cout, lead):
    """3x3 conv as 9 shifted matmuls, fp32 accumulation.

    src_ref: zero-padded activations, [1, H+2, W+2, Cin] (lead=True) or
             [H+2, W+2, Cin] (lead=False), bf16.
    w_ref:   [9, Cin, Cout] bf16, tap index = dh*3 + dw.
    returns: fp32 [oh*ow, cout].
    """
    cin = src_ref.shape[-1]
    m = oh * ow
    acc = jnp.zeros((m, cout), jnp.float32)
    for dh in range(3):
        for dw in range(3):
            if stride == 1:
                rs, cs = pl.ds(dh, oh), pl.ds(dw, ow)
            else:
                rs, cs = pl.ds(dh, oh, stride), pl.ds(dw, ow, stride)
            if lead:
                tap = src_ref[0, rs, cs, :]
            else:
                tap = src_ref[rs, cs, :]
            acc = acc + jnp.dot(tap.reshape(m, cin), w_ref[dh * 3 + dw],
                                preferred_element_type=jnp.float32)
    return acc


def _write_stats(s_ref, acc):
    # Per-channel sum and sum-of-squares (fp32) for this block; reduced in JAX.
    s_ref[0, 0:1, :] = jnp.sum(acc, axis=0, keepdims=True)
    s_ref[0, 1:2, :] = jnp.sum(acc * acc, axis=0, keepdims=True)


# ----------------------------------------------------------------------------
# Kernel 1: conv1 (3x3, stride) [+ 1x1 shortcut conv] + partial BN stats.
# ----------------------------------------------------------------------------
def _conv1_kernel(*refs, oh, ow, stride, has_sc):
    if has_sc:
        xp_ref, w1_ref, ws_ref, y1_ref, s1_ref, ysc_ref, ssc_ref = refs
    else:
        xp_ref, w1_ref, y1_ref, s1_ref = refs
    cp = y1_ref.shape[-1]

    acc = _conv3x3_acc(xp_ref, w1_ref, oh=oh, ow=ow, stride=stride,
                       cout=cp, lead=True)
    y1_ref[0] = acc.reshape(oh, ow, cp)
    _write_stats(s1_ref, acc)

    if has_sc:
        cin = xp_ref.shape[-1]
        m = oh * ow
        # 1x1 conv, pad=0: centre of the spatially padded block, strided taps.
        if stride == 1:
            rs, cs = pl.ds(1, oh), pl.ds(1, ow)
        else:
            rs, cs = pl.ds(1, oh, stride), pl.ds(1, ow, stride)
        tap = xp_ref[0, rs, cs, :].reshape(m, cin)
        acc_sc = jnp.dot(tap, ws_ref[...], preferred_element_type=jnp.float32)
        ysc_ref[0] = acc_sc.reshape(oh, ow, cp)
        _write_stats(ssc_ref, acc_sc)


# ----------------------------------------------------------------------------
# Kernel 2: fused BN1-apply + ReLU + conv2 (3x3, stride 1) + partial BN2 stats.
# h1 stays in VMEM (zero-padded halo scratch) and never touches HBM.
# ----------------------------------------------------------------------------
def _conv2_kernel(y1_ref, sc1_ref, sh1_ref, w2_ref, y2_ref, s2_ref, hpad_ref,
                  *, oh, ow):
    cp = y1_ref.shape[-1]
    h1 = jnp.maximum(y1_ref[0] * sc1_ref[...] + sh1_ref[...], 0.0)
    hpad_ref[...] = jnp.zeros(hpad_ref.shape, hpad_ref.dtype)
    hpad_ref[pl.ds(1, oh), pl.ds(1, ow), :] = h1.astype(hpad_ref.dtype)
    acc = _conv3x3_acc(hpad_ref, w2_ref, oh=oh, ow=ow, stride=1,
                       cout=cp, lead=False)
    y2_ref[0] = acc.reshape(oh, ow, cp)
    _write_stats(s2_ref, acc)


# ----------------------------------------------------------------------------
# Kernel 3: out = relu( BN2(y2) + BN_sc(res) )   (identity: scs=1, shs=0).
# ----------------------------------------------------------------------------
def _finalize_kernel(y2_ref, sc2_ref, sh2_ref, res_ref, scs_ref, shs_ref, o_ref):
    res = res_ref[0] * scs_ref[...] + shs_ref[...]
    o_ref[0] = jnp.maximum(y2_ref[0] * sc2_ref[...] + sh2_ref[...] + res, 0.0)


# ----------------------------------------------------------------------------
# Wrapper-side glue (weight prep, stats reduction, orchestration).
# ----------------------------------------------------------------------------
def _prep_w3x3(w_oihw, cin_p, cout_p):
    co, ci, kh, kw = w_oihw.shape
    w = jnp.transpose(w_oihw, (2, 3, 1, 0))                 # [3,3,Cin,Cout]
    w = jnp.pad(w, ((0, 0), (0, 0), (0, cin_p - ci), (0, cout_p - co)))
    return w.reshape(kh * kw, cin_p, cout_p).astype(jnp.bfloat16)


def _prep_w1x1(w_oihw, cin_p, cout_p):
    co, ci = w_oihw.shape[0], w_oihw.shape[1]
    w = jnp.transpose(w_oihw[:, :, 0, 0], (1, 0))           # [Cin,Cout]
    w = jnp.pad(w, ((0, cin_p - ci), (0, cout_p - co)))
    return w.astype(jnp.bfloat16)


def _bn_scale_shift(stats, gamma, beta, m_total, cp):
    """Fold batch stats + gamma/beta into per-channel (scale, shift), fp32 [1,cp]."""
    ssum = jnp.sum(stats[:, 0, :], axis=0)
    ssq = jnp.sum(stats[:, 1, :], axis=0)
    mean = ssum / m_total
    var = jnp.maximum(ssq / m_total - mean * mean, 0.0)
    g = jnp.pad(gamma.astype(jnp.float32), (0, cp - gamma.shape[0]))
    b = jnp.pad(beta.astype(jnp.float32), (0, cp - beta.shape[0]))
    scale = g * lax.rsqrt(var + EPS)
    shift = b - mean * scale
    return scale[None, :], shift[None, :]


def resblk_forward(x_nchw, params, stride=1):
    n, cin, h, w = x_nchw.shape
    cout = params["w1"].shape[0]
    has_sc = cin != cout
    if not has_sc and stride != 1:
        # The original nn.Module's identity shortcut would shape-mismatch too.
        raise ValueError("identity shortcut requires stride == 1")

    cin_p = _round_up(cin, LANE)                  # lane-dense K
    cp = _round_up(cout, LANE)                    # lane-dense output channels
    oh = (h - 1) // stride + 1
    ow = (w - 1) // stride + 1
    m_total = n * oh * ow
    hp, wp = h + 2, w + 2

    x_nhwc = jnp.transpose(x_nchw, (0, 2, 3, 1)).astype(jnp.float32)
    # Spatial zero-pad (3x3 halo) + channel pad; bf16 for the MXU inputs.
    xpad = jnp.pad(x_nhwc,
                   ((0, 0), (1, 1), (1, 1), (0, cin_p - cin))).astype(jnp.bfloat16)

    w1 = _prep_w3x3(params["w1"], cin_p, cp)
    w2 = _prep_w3x3(params["w2"], cp, cp)

    par = pltpu.CompilerParams(dimension_semantics=("parallel",))

    # ---- pass 1: conv1 (+ 1x1 shortcut conv) + partial BN stats -------------
    in_specs = [
        pl.BlockSpec((1, hp, wp, cin_p), lambda i: (i, 0, 0, 0)),
        pl.BlockSpec((9, cin_p, cp), lambda i: (0, 0, 0)),
    ]
    args = [xpad, w1]
    out_shape = [
        jax.ShapeDtypeStruct((n, oh, ow, cp), jnp.float32),   # raw conv1 output
        jax.ShapeDtypeStruct((n, 2, cp), jnp.float32),        # sum / sumsq
    ]
    out_specs = [
        pl.BlockSpec((1, oh, ow, cp), lambda i: (i, 0, 0, 0)),
        pl.BlockSpec((1, 2, cp), lambda i: (i, 0, 0)),
    ]
    if has_sc:
        ws = _prep_w1x1(params["ws"], cin_p, cp)
        in_specs.append(pl.BlockSpec((cin_p, cp), lambda i: (0, 0)))
        args.append(ws)
        out_shape += [jax.ShapeDtypeStruct((n, oh, ow, cp), jnp.float32),
                      jax.ShapeDtypeStruct((n, 2, cp), jnp.float32)]
        out_specs += [pl.BlockSpec((1, oh, ow, cp), lambda i: (i, 0, 0, 0)),
                      pl.BlockSpec((1, 2, cp), lambda i: (i, 0, 0))]

    outs = pl.pallas_call(
        functools.partial(_conv1_kernel, oh=oh, ow=ow, stride=stride,
                          has_sc=has_sc),
        grid=(n,),
        in_specs=in_specs,
        out_specs=tuple(out_specs),
        out_shape=tuple(out_shape),
        compiler_params=par,
    )(*args)
    if has_sc:
        y1, s1, ysc, ssc = outs
    else:
        y1, s1 = outs

    sc1, sh1 = _bn_scale_shift(s1, params["g1"], params["be1"], m_total, cp)

    # ---- pass 2: fused BN1+ReLU apply -> conv2 -> partial BN2 stats ---------
    y2, s2 = pl.pallas_call(
        functools.partial(_conv2_kernel, oh=oh, ow=ow),
        grid=(n,),
        in_specs=[
            pl.BlockSpec((1, oh, ow, cp), lambda i: (i, 0, 0, 0)),
            pl.BlockSpec((1, cp), lambda i: (0, 0)),
            pl.BlockSpec((1, cp), lambda i: (0, 0)),
            pl.BlockSpec((9, cp, cp), lambda i: (0, 0, 0)),
        ],
        out_specs=(pl.BlockSpec((1, oh, ow, cp), lambda i: (i, 0, 0, 0)),
                   pl.BlockSpec((1, 2, cp), lambda i: (i, 0, 0))),
        out_shape=(jax.ShapeDtypeStruct((n, oh, ow, cp), jnp.float32),
                   jax.ShapeDtypeStruct((n, 2, cp), jnp.float32)),
        scratch_shapes=[pltpu.VMEM((oh + 2, ow + 2, cp), jnp.bfloat16)],
        compiler_params=par,
    )(y1, sc1, sh1, w2)

    sc2, sh2 = _bn_scale_shift(s2, params["g2"], params["be2"], m_total, cp)

    # ---- pass 3: BN2 apply + (BN'd) shortcut add + ReLU ---------------------
    if has_sc:
        scs, shs = _bn_scale_shift(ssc, params["gs"], params["bes"], m_total, cp)
        res = ysc
    else:
        res = jnp.pad(x_nhwc, ((0, 0), (0, 0), (0, 0), (0, cp - cin)))
        scs = jnp.ones((1, cp), jnp.float32)
        shs = jnp.zeros((1, cp), jnp.float32)

    out = pl.pallas_call(
        _finalize_kernel,
        grid=(n,),
        in_specs=[
            pl.BlockSpec((1, oh, ow, cp), lambda i: (i, 0, 0, 0)),
            pl.BlockSpec((1, cp), lambda i: (0, 0)),
            pl.BlockSpec((1, cp), lambda i: (0, 0)),
            pl.BlockSpec((1, oh, ow, cp), lambda i: (i, 0, 0, 0)),
            pl.BlockSpec((1, cp), lambda i: (0, 0)),
            pl.BlockSpec((1, cp), lambda i: (0, 0)),
        ],
        out_specs=pl.BlockSpec((1, oh, ow, cp), lambda i: (i, 0, 0, 0)),
        out_shape=jax.ShapeDtypeStruct((n, oh, ow, cp), jnp.float32),
        compiler_params=par,
    )(y2, sc2, sh2, res, scs, shs)

    out = out[..., :cout]                          # drop channel padding
    return jnp.transpose(out, (0, 3, 1, 2))        # back to NCHW


# ----------------------------------------------------------------------------
# Pure-JAX reference (same bf16-input / fp32-accumulate conv precision as the
# kernel, so the comparison isolates kernel correctness).  Conv biases are kept
# here to demonstrate they are cancelled by training-mode BN.
# ----------------------------------------------------------------------------
def _ref_conv(x, w, b, stride, pad):
    y = lax.conv_general_dilated(
        x.astype(jnp.bfloat16), w.astype(jnp.bfloat16),
        window_strides=(stride, stride), padding=[(pad, pad), (pad, pad)],
        dimension_numbers=("NCHW", "OIHW", "NCHW"),
        preferred_element_type=jnp.float32)
    return y + b[None, :, None, None]


def _ref_bn(y, g, be):
    mean = jnp.mean(y, axis=(0, 2, 3), keepdims=True)
    var = jnp.mean((y - mean) ** 2, axis=(0, 2, 3), keepdims=True)
    return (y - mean) * lax.rsqrt(var + EPS) * g[None, :, None, None] \
        + be[None, :, None, None]


def resblk_reference(x, p, stride=1):
    cin, cout = x.shape[1], p["w1"].shape[0]
    out = jax.nn.relu(_ref_bn(_ref_conv(x, p["w1"], p["b1"], stride, 1),
                              p["g1"], p["be1"]))
    out = _ref_bn(_ref_conv(out, p["w2"], p["b2"], 1, 1), p["g2"], p["be2"])
    if cin != cout:
        sc = _ref_bn(_ref_conv(x, p["ws"], p["bs"], stride, 0), p["gs"], p["bes"])
    else:
        sc = x
    return jax.nn.relu(sc + out)


# ----------------------------------------------------------------------------
def make_params(key, ch_in, ch_out):
    ks = jax.random.split(key, 6)
    p = {
        "w1": 0.1 * jax.random.normal(ks[0], (ch_out, ch_in, 3, 3), jnp.float32),
        "b1": 0.1 * jax.random.normal(ks[1], (ch_out,), jnp.float32),
        "g1": jnp.ones((ch_out,), jnp.float32),
        "be1": jnp.zeros((ch_out,), jnp.float32),
        "w2": 0.1 * jax.random.normal(ks[2], (ch_out, ch_out, 3, 3), jnp.float32),
        "b2": 0.1 * jax.random.normal(ks[3], (ch_out,), jnp.float32),
        "g2": jnp.ones((ch_out,), jnp.float32),
        "be2": jnp.zeros((ch_out,), jnp.float32),
    }
    if ch_in != ch_out:
        p["ws"] = 0.1 * jax.random.normal(ks[4], (ch_out, ch_in, 1, 1), jnp.float32)
        p["bs"] = 0.1 * jax.random.normal(ks[5], (ch_out,), jnp.float32)
        p["gs"] = jnp.ones((ch_out,), jnp.float32)
        p["bes"] = jnp.zeros((ch_out,), jnp.float32)
    return p


if __name__ == "__main__":
    key = jax.random.PRNGKey(0)
    k1, k2, k3, k4 = jax.random.split(key, 4)

    # Case 1: ch_in != ch_out -> 1x1-conv/BN projection shortcut.
    x = jax.random.normal(k1, (2, 4, 16, 16), jnp.float32)       # NCHW like PyTorch
    params = make_params(k2, 4, 8)
    out = jax.block_until_ready(resblk_forward(x, params, stride=1))
    ref = jax.block_until_ready(resblk_reference(x, params, stride=1))
    assert out.shape == ref.shape == (2, 8, 16, 16)
    # 1e-2 tolerance: kernel uses bf16 MXU inputs (fp32 accumulation).
    assert float(jnp.max(jnp.abs(out - ref))) < 1e-2, "mismatch (projection shortcut)"

    # Case 2: ch_in == ch_out -> identity shortcut.
    x2 = jax.random.normal(k3, (2, 8, 16, 16), jnp.float32)
    params2 = make_params(k4, 8, 8)
    out2 = jax.block_until_ready(resblk_forward(x2, params2, stride=1))
    ref2 = jax.block_until_ready(resblk_reference(x2, params2, stride=1))
    assert out2.shape == ref2.shape == (2, 8, 16, 16)
    assert float(jnp.max(jnp.abs(out2 - ref2))) < 1e-2, "mismatch (identity shortcut)"

    print("KERNEL_OK")
</pallas_src>

<mosaic_0001>
module attributes {stable_mosaic.version = 11 : i64} {
  func.func @_conv1_kernel(%arg0: i32, %arg1: memref<1x18x18x128xbf16, #tpu.memory_space<vmem>>, %arg2: memref<9x128x128xbf16, #tpu.memory_space<vmem>>, %arg3: memref<128x128xbf16, #tpu.memory_space<vmem>>, %arg4: memref<1x16x16x128xf32, #tpu.memory_space<vmem>>, %arg5: memref<1x2x128xf32, #tpu.memory_space<vmem>>, %arg6: memref<1x16x16x128xf32, #tpu.memory_space<vmem>>, %arg7: memref<1x2x128xf32, #tpu.memory_space<vmem>>) attributes {dimension_semantics = [#tpu.dimension_semantics<parallel>], iteration_bounds = array<i64: 2>, scalar_prefetch = 0 : i64, scratch_operands = 0 : i64, tpu.core_type = #tpu.core_type<tc>, window_params = [{transform_indices = @transform_0, window_bounds = array<i64: 1, 18, 18, 128>}, {pipeline_mode = #tpu.pipeline_mode<synchronous>, transform_indices = @transform_1, window_bounds = array<i64: 9, 128, 128>}, {pipeline_mode = #tpu.pipeline_mode<synchronous>, transform_indices = @transform_2, window_bounds = array<i64: 128, 128>}, {transform_indices = @transform_3, window_bounds = array<i64: 1, 16, 16, 128>}, {transform_indices = @transform_4, window_bounds = array<i64: 1, 2, 128>}, {transform_indices = @transform_5, window_bounds = array<i64: 1, 16, 16, 128>}, {transform_indices = @transform_6, window_bounds = array<i64: 1, 2, 128>}]} {
    %cst = arith.constant 0.000000e+00 : f32
    %0 = vector.broadcast %cst : f32 to vector<256x128xf32>
    %c0 = arith.constant 0 : index
    %c0_0 = arith.constant 0 : index
    %c0_1 = arith.constant 0 : index
    %c0_2 = arith.constant 0 : index
    %1 = vector.load %arg1[%c0, %c0_0, %c0_1, %c0_2] : memref<1x18x18x128xbf16, #tpu.memory_space<vmem>>, vector<1x16x16x128xbf16>
    %2 = vector.shape_cast %1 : vector<1x16x16x128xbf16> to vector<16x16x128xbf16>
    %3 = vector.shape_cast %2 : vector<16x16x128xbf16> to vector<256x128xbf16>
    %c0_3 = arith.constant 0 : index
    %c0_4 = arith.constant 0 : index
    %c0_5 = arith.constant 0 : index
    %4 = vector.load %arg2[%c0_3, %c0_4, %c0_5] : memref<9x128x128xbf16, #tpu.memory_space<vmem>>, vector<1x128x128xbf16>
    %5 = vector.shape_cast %4 : vector<1x128x128xbf16> to vector<128x128xbf16>
    %cst_6 = arith.constant dense<0.000000e+00> : vector<256x128xf32>
    %6 = tpu.matmul %3, %5, %cst_6 {dimension_numbers = #tpu.dot_dimension_numbers<[1], [0], [0], [1], [0, 0, 1, 1], [], []>} : vector<256x128xbf16>, vector<128x128xbf16>, vector<256x128xf32> -> vector<256x128xf32>
    %7 = arith.addf %0, %6 : vector<256x128xf32>
    %c0_7 = arith.constant 0 : index
    %c0_8 = arith.constant 0 : index
    %c1 = arith.constant 1 : index
    %c0_9 = arith.constant 0 : index
    %8 = vector.load %arg1[%c0_7, %c0_8, %c1, %c0_9] : memref<1x18x18x128xbf16, #tpu.memory_space<vmem>>, vector<1x16x16x128xbf16>
    %9 = vector.shape_cast %8 : vector<1x16x16x128xbf16> to vector<16x16x128xbf16>
    %10 = vector.shape_cast %9 : vector<16x16x128xbf16> to vector<256x128xbf16>
    %c1_10 = arith.constant 1 : index
    %c0_11 = arith.constant 0 : index
    %c0_12 = arith.constant 0 : index
    %11 = vector.load %arg2[%c1_10, %c0_11, %c0_12] : memref<9x128x128xbf16, #tpu.memory_space<vmem>>, vector<1x128x128xbf16>
    %12 = vector.shape_cast %11 : vector<1x128x128xbf16> to vector<128x128xbf16>
    %cst_13 = arith.constant dense<0.000000e+00> : vector<256x128xf32>
    %13 = tpu.matmul %10, %12, %cst_13 {dimension_numbers = #tpu.dot_dimension_numbers<[1], [0], [0], [1], [0, 0, 1, 1], [], []>} : vector<256x128xbf16>, vector<128x128xbf16>, vector<256x128xf32> -> vector<256x128xf32>
    %14 = arith.addf %7, %13 : vector<256x128xf32>
    %c0_14 = arith.constant 0 : index
    %c0_15 = arith.constant 0 : index
    %c2 = arith.constant 2 : index
    %c0_16 = arith.constant 0 : index
    %15 = vector.load %arg1[%c0_14, %c0_15, %c2, %c0_16] : memref<1x18x18x128xbf16, #tpu.memory_space<vmem>>, vector<1x16x16x128xbf16>
    %16 = vector.shape_cast %15 : vector<1x16x16x128xbf16> to vector<16x16x128xbf16>
    %17 = vector.shape_cast %16 : vector<16x16x128xbf16> to vector<256x128xbf16>
    %c2_17 = arith.constant 2 : index
    %c0_18 = arith.constant 0 : index
    %c0_19 = arith.constant 0 : index
    %18 = vector.load %arg2[%c2_17, %c0_18, %c0_19] : memref<9x128x128xbf16, #tpu.memory_space<vmem>>, vector<1x128x128xbf16>
    %19 = vector.shape_cast %18 : vector<1x128x128xbf16> to vector<128x128xbf16>
    %cst_20 = arith.constant dense<0.000000e+00> : vector<256x128xf32>
    %20 = tpu.matmul %17, %19, %cst_20 {dimension_numbers = #tpu.dot_dimension_numbers<[1], [0], [0], [1], [0, 0, 1, 1], [], []>} : vector<256x128xbf16>, vector<128x128xbf16>, vector<256x128xf32> -> vector<256x128xf32>
    %21 = arith.addf %14, %20 : vector<256x128xf32>
    %c0_21 = arith.constant 0 : index
    %c1_22 = arith.constant 1 : index
    %c0_23 = arith.constant 0 : index
    %c0_24 = arith.constant 0 : index
    %22 = vector.load %arg1[%c0_21, %c1_22, %c0_23, %c0_24] : memref<1x18x18x128xbf16, #tpu.memory_space<vmem>>, vector<1x16x16x128xbf16>
    %23 = vector.shape_cast %22 : vector<1x16x16x128xbf16> to vector<16x16x128xbf16>
    %24 = vector.shape_cast %23 : vector<16x16x128xbf16> to vector<256x128xbf16>
    %c3 = arith.constant 3 : index
    %c0_25 = arith.constant 0 : index
    %c0_26 = arith.constant 0 : index
    %25 = vector.load %arg2[%c3, %c0_25, %c0_26] : memref<9x128x128xbf16, #tpu.memory_space<vmem>>, vector<1x128x128xbf16>
    %26 = vector.shape_cast %25 : vector<1x128x128xbf16> to vector<128x128xbf16>
    %cst_27 = arith.constant dense<0.000000e+00> : vector<256x128xf32>
    %27 = tpu.matmul %24, %26, %cst_27 {dimension_numbers = #tpu.dot_dimension_numbers<[1], [0], [0], [1], [0, 0, 1, 1], [], []>} : vector<256x128xbf16>, vector<128x128xbf16>, vector<256x128xf32> -> vector<256x128xf32>
    %28 = arith.addf %21, %27 : vector<256x128xf32>
    %c0_28 = arith.constant 0 : index
    %c1_29 = arith.constant 1 : index
    %c1_30 = arith.constant 1 : index
    %c0_31 = arith.constant 0 : index
    %29 = vector.load %arg1[%c0_28, %c1_29, %c1_30, %c0_31] : memref<1x18x18x128xbf16, #tpu.memory_space<vmem>>, vector<1x16x16x128xbf16>
    %30 = vector.shape_cast %29 : vector<1x16x16x128xbf16> to vector<16x16x128xbf16>
    %31 = vector.shape_cast %30 : vector<16x16x128xbf16> to vector<256x128xbf16>
    %c4 = arith.constant 4 : index
    %c0_32 = arith.constant 0 : index
    %c0_33 = arith.constant 0 : index
    %32 = vector.load %arg2[%c4, %c0_32, %c0_33] : memref<9x128x128xbf16, #tpu.memory_space<vmem>>, vector<1x128x128xbf16>
    %33 = vector.shape_cast %32 : vector<1x128x128xbf16> to vector<128x128xbf16>
    %cst_34 = arith.constant dense<0.000000e+00> : vector<256x128xf32>
    %34 = tpu.matmul %31, %33, %cst_34 {dimension_numbers = #tpu.dot_dimension_numbers<[1], [0], [0], [1], [0, 0, 1, 1], [], []>} : vector<256x128xbf16>, vector<128x128xbf16>, vector<256x128xf32> -> vector<256x128xf32>
    %35 = arith.addf %28, %34 : vector<256x128xf32>
    %c0_35 = arith.constant 0 : index
    %c1_36 = arith.constant 1 : index
    %c2_37 = arith.constant 2 : index
    %c0_38 = arith.constant 0 : index
    %36 = vector.load %arg1[%c0_35, %c1_36, %c2_37, %c0_38] : memref<1x18x18x128xbf16, #tpu.memory_space<vmem>>, vector<1x16x16x128xbf16>
    %37 = vector.shape_cast %36 : vector<1x16x16x128xbf16> to vector<16x16x128xbf16>
    %38 = vector.shape_cast %37 : vector<16x16x128xbf16> to vector<256x128xbf16>
    %c5 = arith.constant 5 : index
    %c0_39 = arith.constant 0 : index
    %c0_40 = arith.constant 0 : index
    %39 = vector.load %arg2[%c5, %c0_39, %c0_40] : memref<9x128x128xbf16, #tpu.memory_space<vmem>>, vector<1x128x128xbf16>
    %40 = vector.shape_cast %39 : vector<1x128x128xbf16> to vector<128x128xbf16>
    %cst_41 = arith.constant dense<0.000000e+00> : vector<256x128xf32>
    %41 = tpu.matmul %38, %40, %cst_41 {dimension_numbers = #tpu.dot_dimension_numbers<[1], [0], [0], [1], [0, 0, 1, 1], [], []>} : vector<256x128xbf16>, vector<128x128xbf16>, vector<256x128xf32> -> vector<256x128xf32>
    %42 = arith.addf %35, %41 : vector<256x128xf32>
    %c0_42 = arith.constant 0 : index
    %c2_43 = arith.constant 2 : index
    %c0_44 = arith.constant 0 : index
    %c0_45 = arith.constant 0 : index
    %43 = vector.load %arg1[%c0_42, %c2_43, %c0_44, %c0_45] : memref<1x18x18x128xbf16, #tpu.memory_space<vmem>>, vector<1x16x16x128xbf16>
    %44 = vector.shape_cast %43 : vector<1x16x16x128xbf16> to vector<16x16x128xbf16>
    %45 = vector.shape_cast %44 : vector<16x16x128xbf16> to vector<256x128xbf16>
    %c6 = arith.constant 6 : index
    %c0_46 = arith.constant 0 : index
    %c0_47 = arith.constant 0 : index
    %46 = vector.load %arg2[%c6, %c0_46, %c0_47] : memref<9x128x128xbf16, #tpu.memory_space<vmem>>, vector<1x128x128xbf16>
    %47 = vector.shape_cast %46 : vector<1x128x128xbf16> to vector<128x128xbf16>
    %cst_48 = arith.constant dense<0.000000e+00> : vector<256x128xf32>
    %48 = tpu.matmul %45, %47, %cst_48 {dimension_numbers = #tpu.dot_dimension_numbers<[1], [0], [0], [1], [0, 0, 1, 1], [], []>} : vector<256x128xbf16>, vector<128x128xbf16>, vector<256x128xf32> -> vector<256x128xf32>
    %49 = arith.addf %42, %48 : vector<256x128xf32>
    %c0_49 = arith.constant 0 : index
    %c2_50 = arith.constant 2 : index
    %c1_51 = arith.constant 1 : index
    %c0_52 = arith.constant 0 : index
    %50 = vector.load %arg1[%c0_49, %c2_50, %c1_51, %c0_52] : memref<1x18x18x128xbf16, #tpu.memory_space<vmem>>, vector<1x16x16x128xbf16>
    %51 = vector.shape_cast %50 : vector<1x16x16x128xbf16> to vector<16x16x128xbf16>
    %52 = vector.shape_cast %51 : vector<16x16x128xbf16> to vector<256x128xbf16>
    %c7 = arith.constant 7 : index
    %c0_53 = arith.constant 0 : index
    %c0_54 = arith.constant 0 : index
    %53 = vector.load %arg2[%c7, %c0_53, %c0_54] : memref<9x128x128xbf16, #tpu.memory_space<vmem>>, vector<1x128x128xbf16>
    %54 = vector.shape_cast %53 : vector<1x128x128xbf16> to vector<128x128xbf16>
    %cst_55 = arith.constant dense<0.000000e+00> : vector<256x128xf32>
    %55 = tpu.matmul %52, %54, %cst_55 {dimension_numbers = #tpu.dot_dimension_numbers<[1], [0], [0], [1], [0, 0, 1, 1], [], []>} : vector<256x128xbf16>, vector<128x128xbf16>, vector<256x128xf32> -> vector<256x128xf32>
    %56 = arith.addf %49, %55 : vector<256x128xf32>
    %c0_56 = arith.constant 0 : index
    %c2_57 = arith.constant 2 : index
    %c2_58 = arith.constant 2 : index
    %c0_59 = arith.constant 0 : index
    %57 = vector.load %arg1[%c0_56, %c2_57, %c2_58, %c0_59] : memref<1x18x18x128xbf16, #tpu.memory_space<vmem>>, vector<1x16x16x128xbf16>
    %58 = vector.shape_cast %57 : vector<1x16x16x128xbf16> to vector<16x16x128xbf16>
    %59 = vector.shape_cast %58 : vector<16x16x128xbf16> to vector<256x128xbf16>
    %c8 = arith.constant 8 : index
    %c0_60 = arith.constant 0 : index
    %c0_61 = arith.constant 0 : index
    %60 = vector.load %arg2[%c8, %c0_60, %c0_61] : memref<9x128x128xbf16, #tpu.memory_space<vmem>>, vector<1x128x128xbf16>
    %61 = vector.shape_cast %60 : vector<1x128x128xbf16> to vector<128x128xbf16>
    %cst_62 = arith.constant dense<0.000000e+00> : vector<256x128xf32>
    %62 = tpu.matmul %59, %61, %cst_62 {dimension_numbers = #tpu.dot_dimension_numbers<[1], [0], [0], [1], [0, 0, 1, 1], [], []>} : vector<256x128xbf16>, vector<128x128xbf16>, vector<256x128xf32> -> vector<256x128xf32>
    %63 = arith.addf %56, %62 : vector<256x128xf32>
    %64 = vector.shape_cast %63 : vector<256x128xf32> to vector<16x16x128xf32>
    %c0_63 = arith.constant 0 : index
    %c0_64 = arith.constant 0 : index
    %c0_65 = arith.constant 0 : index
    %c0_66 = arith.constant 0 : index
    %65 = vector.load %arg4[%c0_63, %c0_64, %c0_65, %c0_66] : memref<1x16x16x128xf32, #tpu.memory_space<vmem>>, vector<1x16x16x128xf32>
    %66 = vector.shape_cast %65 : vector<1x16x16x128xf32> to vector<16x16x128xf32>
    %67 = vector.shape_cast %64 : vector<16x16x128xf32> to vector<1x16x16x128xf32>
    tpu.vector_store %arg4[%c0_63, %c0_64, %c0_65, %c0_66], %67 {strides = array<i32>} : memref<1x16x16x128xf32, #tpu.memory_space<vmem>>, vector<1x16x16x128xf32>,
    %cst_67 = arith.constant dense<0.000000e+00> : vector<128xf32>
    %68 = vector.multi_reduction <add>, %63, %cst_67 [0] : vector<256x128xf32> to vector<128xf32>
    %69 = vector.shape_cast %68 : vector<128xf32> to vector<1x128xf32>
    %c0_68 = arith.constant 0 : index
    %c0_69 = arith.constant 0 : index
    %c0_70 = arith.constant 0 : index
    %70 = vector.load %arg5[%c0_68, %c0_69, %c0_70] : memref<1x2x128xf32, #tpu.memory_space<vmem>>, vector<1x1x128xf32>
    %71 = vector.shape_cast %70 : vector<1x1x128xf32> to vector<1x128xf32>
    %72 = vector.shape_cast %69 : vector<1x128xf32> to vector<1x1x128xf32>
    tpu.vector_store %arg5[%c0_68, %c0_69, %c0_70], %72 {strides = array<i32>} : memref<1x2x128xf32, #tpu.memory_space<vmem>>, vector<1x1x128xf32>,
    %73 = arith.mulf %63, %63 : vector<256x128xf32>
    %cst_71 = arith.constant dense<0.000000e+00> : vector<128xf32>
    %74 = vector.multi_reduction <add>, %73, %cst_71 [0] : vector<256x128xf32> to vector<128xf32>
    %75 = vector.shape_cast %74 : vector<128xf32> to vector<1x128xf32>
    %c0_72 = arith.constant 0 : index
    %c1_73 = arith.constant 1 : index
    %c0_74 = arith.constant 0 : index
    %76 = vector.load %arg5[%c0_72, %c1_73, %c0_74] : memref<1x2x128xf32, #tpu.memory_space<vmem>>, vector<1x1x128xf32>
    %77 = vector.shape_cast %76 : vector<1x1x128xf32> to vector<1x128xf32>
    %78 = vector.shape_cast %75 : vector<1x128xf32> to vector<1x1x128xf32>
    tpu.vector_store %arg5[%c0_72, %c1_73, %c0_74], %78 {strides = array<i32>} : memref<1x2x128xf32, #tpu.memory_space<vmem>>, vector<1x1x128xf32>,
    %c0_75 = arith.constant 0 : index
    %c1_76 = arith.constant 1 : index
    %c1_77 = arith.constant 1 : index
    %c0_78 = arith.constant 0 : index
    %79 = vector.load %arg1[%c0_75, %c1_76, %c1_77, %c0_78] : memref<1x18x18x128xbf16, #tpu.memory_space<vmem>>, vector<1x16x16x128xbf16>
    %80 = vector.shape_cast %79 : vector<1x16x16x128xbf16> to vector<16x16x128xbf16>
    %81 = vector.shape_cast %80 : vector<16x16x128xbf16> to vector<256x128xbf16>
    %c0_79 = arith.constant 0 : index
    %c0_80 = arith.constant 0 : index
    %82 = vector.load %arg3[%c0_79, %c0_80] : memref<128x128xbf16, #tpu.memory_space<vmem>>, vector<128x128xbf16>
    %cst_81 = arith.constant dense<0.000000e+00> : vector<256x128xf32>
    %83 = tpu.matmul %81, %82, %cst_81 {dimension_numbers = #tpu.dot_dimension_numbers<[1], [0], [0], [1], [0, 0, 1, 1], [], []>} : vector<256x128xbf16>, vector<128x128xbf16>, vector<256x128xf32> -> vector<256x128xf32>
    %84 = vector.shape_cast %83 : vector<256x128xf32> to vector<16x16x128xf32>
    %c0_82 = arith.constant 0 : index
    %c0_83 = arith.constant 0 : index
    %c0_84 = arith.constant 0 : index
    %c0_85 = arith.constant 0 : index
    %85 = vector.load %arg6[%c0_82, %c0_83, %c0_84, %c0_85] : memref<1x16x16x128xf32, #tpu.memory_space<vmem>>, vector<1x16x16x128xf32>
    %86 = vector.shape_cast %85 : vector<1x16x16x128xf32> to vector<16x16x128xf32>
    %87 = vector.shape_cast %84 : vector<16x16x128xf32> to vector<1x16x16x128xf32>
    tpu.vector_store %arg6[%c0_82, %c0_83, %c0_84, %c0_85], %87 {strides = array<i32>} : memref<1x16x16x128xf32, #tpu.memory_space<vmem>>, vector<1x16x16x128xf32>,
    %cst_86 = arith.constant dense<0.000000e+00> : vector<128xf32>
    %88 = vector.multi_reduction <add>, %83, %cst_86 [0] : vector<256x128xf32> to vector<128xf32>
    %89 = vector.shape_cast %88 : vector<128xf32> to vector<1x128xf32>
    %c0_87 = arith.constant 0 : index
    %c0_88 = arith.constant 0 : index
    %c0_89 = arith.constant 0 : index
    %90 = vector.load %arg7[%c0_87, %c0_88, %c0_89] : memref<1x2x128xf32, #tpu.memory_space<vmem>>, vector<1x1x128xf32>
    %91 = vector.shape_cast %90 : vector<1x1x128xf32> to vector<1x128xf32>
    %92 = vector.shape_cast %89 : vector<1x128xf32> to vector<1x1x128xf32>
    tpu.vector_store %arg7[%c0_87, %c0_88, %c0_89], %92 {strides = array<i32>} : memref<1x2x128xf32, #tpu.memory_space<vmem>>, vector<1x1x128xf32>,
    %93 = arith.mulf %83, %83 : vector<256x128xf32>
    %cst_90 = arith.constant dense<0.000000e+00> : vector<128xf32>
    %94 = vector.multi_reduction <add>, %93, %cst_90 [0] : vector<256x128xf32> to vector<128xf32>
    %95 = vector.shape_cast %94 : vector<128xf32> to vector<1x128xf32>
    %c0_91 = arith.constant 0 : index
    %c1_92 = arith.constant 1 : index
    %c0_93 = arith.constant 0 : index
    %96 = vector.load %arg7[%c0_91, %c1_92, %c0_93] : memref<1x2x128xf32, #tpu.memory_space<vmem>>, vector<1x1x128xf32>
    %97 = vector.shape_cast %96 : vector<1x1x128xf32> to vector<1x128xf32>
    %98 = vector.shape_cast %95 : vector<1x128xf32> to vector<1x1x128xf32>
    tpu.vector_store %arg7[%c0_91, %c1_92, %c0_93], %98 {strides = array<i32>} : memref<1x2x128xf32, #tpu.memory_space<vmem>>, vector<1x1x128xf32>,
    return
  }
  func.func @transform_0(%arg0: i32) -> (i32, i32, i32, i32) {
    %c0_i32 = arith.constant 0 : i32
    %c0_i32_0 = arith.constant 0 : i32
    %c0_i32_1 = arith.constant 0 : i32
    %c0_i32_2 = arith.constant 0 : i32
    return %arg0, %c0_i32, %c0_i32_0, %c0_i32_1 : i32, i32, i32, i32
  }
  func.func @transform_1(%arg0: i32) -> (i32, i32, i32) {
    %c0_i32 = arith.constant 0 : i32
    %c0_i32_0 = arith.constant 0 : i32
    %c0_i32_1 = arith.constant 0 : i32
    %c0_i32_2 = arith.constant 0 : i32
    return %c0_i32, %c0_i32_0, %c0_i32_1 : i32, i32, i32
  }
  func.func @transform_2(%arg0: i32) -> (i32, i32) {
    %c0_i32 = arith.constant 0 : i32
    %c0_i32_0 = arith.constant 0 : i32
    %c0_i32_1 = arith.constant 0 : i32
    return %c0_i32, %c0_i32_0 : i32, i32
  }
  func.func @transform_3(%arg0: i32) -> (i32, i32, i32, i32) {
    %c0_i32 = arith.constant 0 : i32
    %c0_i32_0 = arith.constant 0 : i32
    %c0_i32_1 = arith.constant 0 : i32
    %c0_i32_2 = arith.constant 0 : i32
    return %arg0, %c0_i32, %c0_i32_0, %c0_i32_1 : i32, i32, i32, i32
  }
  func.func @transform_4(%arg0: i32) -> (i32, i32, i32) {
    %c0_i32 = arith.constant 0 : i32
    %c0_i32_0 = arith.constant 0 : i32
    %c0_i32_1 = arith.constant 0 : i32
    return %arg0, %c0_i32, %c0_i32_0 : i32, i32, i32
  }
  func.func @transform_5(%arg0: i32) -> (i32, i32, i32, i32) {
    %c0_i32 = arith.constant 0 : i32
    %c0_i32_0 = arith.constant 0 : i32
    %c0_i32_1 = arith.constant 0 : i32
    %c0_i32_2 = arith.constant 0 : i32
    return %arg0, %c0_i32, %c0_i32_0, %c0_i32_1 : i32, i32, i32, i32
  }
  func.func @transform_6(%arg0: i32) -> (i32, i32, i32) {
    %c0_i32 = arith.constant 0 : i32
    %c0_i32_0 = arith.constant 0 : i32
    %c0_i32_1 = arith.constant 0 : i32
    return %arg0, %c0_i32, %c0_i32_0 : i32, i32, i32
  }
}

</mosaic_0001>

<llo_original>
// kernel: tpu_custom_call.1
$region0: #{tpu_custom_call.1}
  #allocation0 [shape = 'u32[]', space=smem, size = 0x4, offset = 0x4, fixed_abs, tag = 'smem constant byte address 0x4 - core index']
  #allocation1 [shape = 'u32[144,128]{1,0:T(1,128)}', space=vmem, size = 0x12000, scoped, tag = 'internal scratch']
  %s0 = inlined_call_operand.vmem [shape: bf16[2,18,18,128], index: 0, kind: input, shape index: {}]
  %s1 = inlined_call_operand.vmem [shape: bf16[9,128,128], index: 1, kind: input, shape index: {}]
  %s2 = inlined_call_operand.vmem [shape: bf16[128,128], index: 2, kind: input, shape index: {}]
  %s3 = inlined_call_operand.hbm [shape: f32[2,16,16,128], index: 3, kind: output, shape index: {0}]
  %s4 = inlined_call_operand.hbm [shape: f32[2,2,128], index: 4, kind: output, shape index: {1}]
  %s5 = inlined_call_operand.hbm [shape: f32[2,16,16,128], index: 5, kind: output, shape index: {2}]
  %s6 = inlined_call_operand.hbm [shape: f32[2,2,128], index: 6, kind: output, shape index: {3}]
  %7 = xla_tuple %s3, %s4, %s5, %s6
  %s8 = sld [smem:[#allocation0]]
  $region69: #{tpu_custom_call.1} parent=0
    _
  %s10 = ssub.s32 1, %s8
  %s11 = scalar_select 0, %s10, %s8
  $region1: #{tpu_custom_call.1} parent=0
    #allocation2 [shape = 'u8[262144]{0}', space=vmem, size = 0x40000, scoped, tag = 'output window, operand 0']
    #allocation3 [shape = 's32[2]{0}', space=sflag, size = 0x8, scoped, tag = 'scoped memory for tpu_custom_call.1']
    #allocation4 [shape = 'u8[2048]{0}', space=vmem, size = 0x800, scoped, tag = 'output window, operand 1']
    #allocation5 [shape = 's32[2]{0}', space=sflag, size = 0x8, scoped, tag = 'scoped memory for tpu_custom_call.1']
    #allocation6 [shape = 'u8[262144]{0}', space=vmem, size = 0x40000, scoped, tag = 'output window, operand 2']
    #allocation7 [shape = 'u8[2048]{0}', space=vmem, size = 0x800, scoped, tag = 'output window, operand 3']
    #allocation8 [shape = 's32[2]{0}', space=sflag, size = 0x8, scoped, tag = 'scoped memory for tpu_custom_call.1']
    %12 = vsyncpa [#allocation3], 0
    %s13 = scalar_lea.sflag [#allocation3], 1
    %14 = vsyncpa %s13, 0
    %15 = vsyncpa [#allocation5], 0
    %s16 = scalar_lea.sflag [#allocation5], 1
    %17 = vsyncpa %s16, 0
    %18 = vsyncpa [#allocation8], 0
    %s19 = scalar_lea.sflag [#allocation8], 1
    %20 = vsyncpa %s19, 0
    loop: start=0, step=1, limit=4
    $region2: #{tpu_custom_call.1} parent=1 // loop_pre_header
      _
    $region3: #{tpu_custom_call.1} parent=1 // loop_header
      %s22 = sphi 0, %s26
      %p23 = scmp.ge.s32.totalorder %s22, 4
      %s32 = sphi 0, %s34
      %s35 = sphi 0, %s32
      %s36 = sphi 0, %s35
      %s52 = sphi 0, %s36
      %s56 = sphi 0, %s56
      %s58 = sphi 0, %s56
      %s59 = sphi 0, %s58
      %s73 = sphi 0, %s59
      %s77 = sphi 0, %s77
      %s79 = sphi 0, %s77
      %s80 = sphi 0, %s79
      %s94 = sphi 0, %s80
      %s100 = sphi 0, %s102
      %s103 = sphi 0, %s100
      %s104 = sphi 0, %s103
      %s120 = sphi 0, %s104
      %s126 = sphi 0, %s128
      %s129 = sphi 0, %s126
      %s130 = sphi 0, %s129
      %s146 = sphi 0, %s130
      %s152 = sphi 0, %s154
      %s155 = sphi 0, %s152
      %s156 = sphi 0, %s155
      %s172 = sphi 0, %s156
      %s178 = sphi 0, %s180
      %s181 = sphi 0, %s178
      %s182 = sphi 0, %s181
      %s198 = sphi 0, %s182
    $region4: #{tpu_custom_call.1} parent=1 // loop_header_branch
      %25 = sbr.rel (%p23) target = $region8
    $region5: #{tpu_custom_call.1} parent=1 // loop_body
      %s27 = ssub.s32 %s22, 1
      %s28 = ssub.s32 %s22, 2
      %s29 = sadd.s32 %s22, 1
      %s30 = ssub.s32 %s22, %s29
      %p31 = scmp.eq.s32.totalorder %s30, 0
      %s33 = sadd.s32 %s32, 1
      %s34 = scalar_select %p31, %s32, %s33
      %p37 = pneg %p31
      %p38 = scmp.eq.s32.totalorder %s22, 1
      %p39 = por %p37, %p38
      %p40 = scmp.ne.s32.totalorder %s32, %s35
      %p41 = scmp.eq.s32.totalorder %s22, 0
      %p42 = por %p40, %p41
      %p43 = scmp.ne.s32.totalorder %s32, %s35
      %p44 = scmp.eq.s32.totalorder %s27, 1
      %p45 = por %p43, %p44
      %p46 = scmp.ne.s32.totalorder %s35, %s36
      %p47 = scmp.eq.s32.totalorder %s27, 0
      %p48 = por %p46, %p47
      %p49 = scmp.ne.s32.totalorder %s35, %s36
      %p50 = scmp.eq.s32.totalorder %s28, 1
      %p51 = por %p49, %p50
      %p53 = scmp.ne.s32.totalorder %s36, %s52
      %p54 = scmp.eq.s32.totalorder %s28, 0
      %p55 = por %p53, %p54
      %s57 = sadd.s32 %s56, 1
      %p60 = scmp.eq.s32.totalorder %s22, 1
      %p61 = scmp.ne.s32.totalorder %s56, %s58
      %p62 = scmp.eq.s32.totalorder %s22, 0
      %p63 = por %p61, %p62
      %p64 = scmp.ne.s32.totalorder %s56, %s58
      %p65 = scmp.eq.s32.totalorder %s27, 1
      %p66 = por %p64, %p65
      %p67 = scmp.ne.s32.totalorder %s58, %s59
      %p68 = scmp.eq.s32.totalorder %s27, 0
      %p69 = por %p67, %p68
      %p70 = scmp.ne.s32.totalorder %s58, %s59
      %p71 = scmp.eq.s32.totalorder %s28, 1
      %p72 = por %p70, %p71
      %p74 = scmp.ne.s32.totalorder %s59, %s73
      %p75 = scmp.eq.s32.totalorder %s28, 0
      %p76 = por %p74, %p75
      %s78 = sadd.s32 %s77, 1
      %p81 = scmp.eq.s32.totalorder %s22, 1
      %p82 = scmp.ne.s32.totalorder %s77, %s79
      %p83 = scmp.eq.s32.totalorder %s22, 0
      %p84 = por %p82, %p83
      %p85 = scmp.ne.s32.totalorder %s77, %s79
      %p86 = scmp.eq.s32.totalorder %s27, 1
      %p87 = por %p85, %p86
      %p88 = scmp.ne.s32.totalorder %s79, %s80
      %p89 = scmp.eq.s32.totalorder %s27, 0
      %p90 = por %p88, %p89
      %p91 = scmp.ne.s32.totalorder %s79, %s80
      %p92 = scmp.eq.s32.totalorder %s28, 1
      %p93 = por %p91, %p92
      %p95 = scmp.ne.s32.totalorder %s80, %s94
      %p96 = scmp.eq.s32.totalorder %s28, 0
      %p97 = por %p95, %p96
      %s98 = ssub.s32 %s22, %s29
      %p99 = scmp.eq.s32.totalorder %s98, 0
      %s101 = sadd.s32 %s100, 1
      %s102 = scalar_select %p99, %s100, %s101
      %p105 = pneg %p99
      %p106 = scmp.eq.s32.totalorder %s22, 1
      %p107 = por %p105, %p106
      %p108 = scmp.ne.s32.totalorder %s100, %s103
      %p109 = scmp.eq.s32.totalorder %s22, 0
      %p110 = por %p108, %p109
      %p111 = scmp.ne.s32.totalorder %s100, %s103
      %p112 = scmp.eq.s32.totalorder %s27, 1
      %p113 = por %p111, %p112
      %p114 = scmp.ne.s32.totalorder %s103, %s104
      %p115 = scmp.eq.s32.totalorder %s27, 0
      %p116 = por %p114, %p115
      %p117 = scmp.ne.s32.totalorder %s103, %s104
      %p118 = scmp.eq.s32.totalorder %s28, 1
      %p119 = por %p117, %p118
      %p121 = scmp.ne.s32.totalorder %s104, %s120
      %p122 = scmp.eq.s32.totalorder %s28, 0
      %p123 = por %p121, %p122
      %s124 = ssub.s32 %s22, %s29
      %p125 = scmp.eq.s32.totalorder %s124, 0
      %s127 = sadd.s32 %s126, 1
      %s128 = scalar_select %p125, %s126, %s127
      %p131 = pneg %p125
      %p132 = scmp.eq.s32.totalorder %s22, 1
      %p133 = por %p131, %p132
      %p134 = scmp.ne.s32.totalorder %s126, %s129
      %p135 = scmp.eq.s32.totalorder %s22, 0
      %p136 = por %p134, %p135
      %p137 = scmp.ne.s32.totalorder %s126, %s129
      %p138 = scmp.eq.s32.totalorder %s27, 1
      %p139 = por %p137, %p138
      %p140 = scmp.ne.s32.totalorder %s129, %s130
      %p141 = scmp.eq.s32.totalorder %s27, 0
      %p142 = por %p140, %p141
      %p143 = scmp.ne.s32.totalorder %s129, %s130
      %p144 = scmp.eq.s32.totalorder %s28, 1
      %p145 = por %p143, %p144
      %p147 = scmp.ne.s32.totalorder %s130, %s146
      %p148 = scmp.eq.s32.totalorder %s28, 0
      %p149 = por %p147, %p148
      %s150 = ssub.s32 %s22, %s29
      %p151 = scmp.eq.s32.totalorder %s150, 0
      %s153 = sadd.s32 %s152, 1
      %s154 = scalar_select %p151, %s152, %s153
      %p157 = pneg %p151
      %p158 = scmp.eq.s32.totalorder %s22, 1
      %p159 = por %p157, %p158
      %p160 = scmp.ne.s32.totalorder %s152, %s155
      %p161 = scmp.eq.s32.totalorder %s22, 0
      %p162 = por %p160, %p161
      %p163 = scmp.ne.s32.totalorder %s152, %s155
      %p164 = scmp.eq.s32.totalorder %s27, 1
      %p165 = por %p163, %p164
      %p166 = scmp.ne.s32.totalorder %s155, %s156
      %p167 = scmp.eq.s32.totalorder %s27, 0
      %p168 = por %p166, %p167
      %p169 = scmp.ne.s32.totalorder %s155, %s156
      %p170 = scmp.eq.s32.totalorder %s28, 1
      %p171 = por %p169, %p170
      %p173 = scmp.ne.s32.totalorder %s156, %s172
      %p174 = scmp.eq.s32.totalorder %s28, 0
      %p175 = por %p173, %p174
      %s176 = ssub.s32 %s22, %s29
      %p177 = scmp.eq.s32.totalorder %s176, 0
      %s179 = sadd.s32 %s178, 1
      %s180 = scalar_select %p177, %s178, %s179
      %p183 = pneg %p177
      %p184 = scmp.eq.s32.totalorder %s22, 1
      %p185 = por %p183, %p184
      %p186 = scmp.ne.s32.totalorder %s178, %s181
      %p187 = scmp.eq.s32.totalorder %s22, 0
      %p188 = por %p186, %p187
      %p189 = scmp.ne.s32.totalorder %s178, %s181
      %p190 = scmp.eq.s32.totalorder %s27, 1
      %p191 = por %p189, %p190
      %p192 = scmp.ne.s32.totalorder %s181, %s182
      %p193 = scmp.eq.s32.totalorder %s27, 0
      %p194 = por %p192, %p193
      %p195 = scmp.ne.s32.totalorder %s181, %s182
      %p196 = scmp.eq.s32.totalorder %s28, 1
      %p197 = por %p195, %p196
      %p199 = scmp.ne.s32.totalorder %s182, %s198
      %p200 = scmp.eq.s32.totalorder %s28, 0
      %p201 = por %p199, %p200
      %p202 = scmp.le.s32.totalorder 1, %s22
      %p203 = scmp.lt.s32.totalorder %s22, 3
      %p204 = pnand %p202, %p203
      %p205 = pneg %p204
      // Predicated region
      $region9: #{tpu_custom_call.1} parent=5 // pred_check
        _
      $region10: #{tpu_custom_call.1} parent=5 // pred_check_branch
        %207 = sbr.rel (%p204) target = $region12
      $region11: #{tpu_custom_call.1} parent=5 // pred_region
        %s208 = ssub.s32 %s22, 1
        // Predicated region
        $region13: #{tpu_custom_call.1} parent=11 // pred_check
          %p209 = pneg %p69
        $region14: #{tpu_custom_call.1} parent=11 // pred_check_branch
          %211 = sbr.rel (%p209) target = $region16
        $region15: #{tpu_custom_call.1} parent=11 // pred_region
          _
        $region16: #{tpu_custom_call.1} parent=11 // pred_fallthru
          _
        // Predicated region
        $region17: #{tpu_custom_call.1} parent=11 // pred_check
          %p212 = pneg %p90
        $region18: #{tpu_custom_call.1} parent=11 // pred_check_branch
          %214 = sbr.rel (%p212) target = $region20
        $region19: #{tpu_custom_call.1} parent=11 // pred_region
          _
        $region20: #{tpu_custom_call.1} parent=11 // pred_fallthru
          _
      $region12: #{tpu_custom_call.1} parent=5 // pred_fallthru
        _
      %p215 = scmp.lt.s32.totalorder %s22, 2
      // Predicated region
      $region21: #{tpu_custom_call.1} parent=5 // pred_check
        %p216 = pneg %p215
      $region22: #{tpu_custom_call.1} parent=5 // pred_check_branch
        %218 = sbr.rel (%p216) target = $region24
      $region23: #{tpu_custom_call.1} parent=5 // pred_region
        // Predicated region
        $region25: #{tpu_custom_call.1} parent=23 // pred_check
          %p219 = pneg %p42
        $region26: #{tpu_custom_call.1} parent=23 // pred_check_branch
          %221 = sbr.rel (%p219) target = $region28
        $region27: #{tpu_custom_call.1} parent=23 // pred_region
          %p222 = scmp.lt.s32.totalorder %s22, 1
          %s223 = scalar_select %p222, %s22, 1
          %s224 = smul.addr %s223, 54
          %s225 = smul.addr %s224, 4
          %s226 = scalar_lea.vmem %s0, %s225
        $region28: #{tpu_custom_call.1} parent=23 // pred_fallthru
          _
      $region24: #{tpu_custom_call.1} parent=5 // pred_fallthru
        _
      %p227 = scmp.le.s32.totalorder 1, %s22
      %p228 = scmp.lt.s32.totalorder %s22, 3
      %p229 = pnand %p227, %p228
      %p230 = pneg %p229
      // Predicated region
      $region29: #{tpu_custom_call.1} parent=5 // pred_check
        _
      $region30: #{tpu_custom_call.1} parent=5 // pred_check_branch
        %232 = sbr.rel (%p229) target = $region32
      $region31: #{tpu_custom_call.1} parent=5 // pred_region
        %s233 = ssub.s32 %s22, 1
        %p234 = scmp.lt.s32.totalorder %s27, 1
        %s235 = scalar_select %p234, %s27, 1
        %s236 = smul.addr %s235, 54
        %s237 = smul.addr %s236, 4
        %s238 = scalar_lea.vmem %s0, %s237
        %p239 = pneg %p48
        %p240 = pneg %p45
        %p241 = pneg %p69
        %p242 = pneg %p66
        %p243 = pneg %p90
        %p244 = pneg %p87
        %p245 = pneg %p116
        %p246 = pneg %p113
        %s247 = sand.u32 %s103, 1
        %s248 = scalar_lea.sflag [#allocation3], %s247
        %s249 = sand.u32 %s103, 1
        %s250 = smul.addr %s249, 256
        %s251 = scalar_lea.vmem [#allocation2], %s250
        %p252 = pneg %p142
        %p253 = pneg %p139
        %s254 = sand.u32 %s27, 1
        %s255 = scalar_lea.sflag [#allocation5], %s254
        %s256 = sand.u32 %s129, 1
        %s257 = smul.addr %s256, 2
        %s258 = scalar_lea.vmem [#allocation4], %s257
        %p259 = pneg %p168
        %p260 = pneg %p165
        %s261 = sand.u32 %s27, 1
        %s262 = scalar_lea.sflag [#allocation5], %s261
        %s263 = sand.u32 %s155, 1
        %s264 = smul.addr %s263, 256
        %s265 = scalar_lea.vmem [#allocation6], %s264
        %p266 = pneg %p194
        %p267 = pneg %p191
        %s268 = sand.u32 %s181, 1
        %s269 = scalar_lea.sflag [#allocation8], %s268
        %s270 = sand.u32 %s181, 1
        %s271 = smul.addr %s270, 2
        %s272 = scalar_lea.vmem [#allocation7], %s271
        %p273 = scmp.lt.s32.totalorder %s27, 1
        %s274 = scalar_select %p273, %s27, 1
        %s275 = smul.addr %s274, 54
        %s276 = smul.addr %s275, 4
        %s277 = scalar_lea.vmem %s0, %s276
        %v279 = vld [vmem:[%s277] sm:$0xf]
        %v280 = vld [vmem:[%s277 + $0x4] sm:$0xf]
        %v281 = vld [vmem:[%s277 + $0xc] sm:$0xf]
        %v282 = vld [vmem:[%s277 + $0x10] sm:$0xf]
        %v283 = vld [vmem:[%s277 + $0x18] sm:$0xf]
        %v284 = vld [vmem:[%s277 + $0x1c] sm:$0xf]
        %v285 = vld [vmem:[%s277 + $0x24] sm:$0xf]
        %v286 = vld [vmem:[%s277 + $0x28] sm:$0xf]
        %v287 = vld [vmem:[%s277 + $0x30] sm:$0xf]
        %v288 = vld [vmem:[%s277 + $0x34] sm:$0xf]
        %v289 = vld [vmem:[%s277 + $0x3c] sm:$0xf]
        %v290 = vld [vmem:[%s277 + $0x40] sm:$0xf]
        %v291 = vld [vmem:[%s277 + $0x48] sm:$0xf]
        %v292 = vld [vmem:[%s277 + $0x4c] sm:$0xf]
        %v293 = vld [vmem:[%s277 + $0x54] sm:$0xf]
        %v294 = vld [vmem:[%s277 + $0x58] sm:$0xf]
        %v295 = vld [vmem:[%s277 + $0x60] sm:$0xf]
        %v296 = vld [vmem:[%s277 + $0x64] sm:$0xf]
        %v297 = vld [vmem:[%s277 + $0x6c] sm:$0xf]
        %v298 = vld [vmem:[%s277 + $0x70] sm:$0xf]
        %v299 = vld [vmem:[%s277 + $0x78] sm:$0xf]
        %v300 = vld [vmem:[%s277 + $0x7c] sm:$0xf]
        %v301 = vld [vmem:[%s277 + $0x84] sm:$0xf]
        %v302 = vld [vmem:[%s277 + $0x88] sm:$0xf]
        %v303 = vld [vmem:[%s277 + $0x90] sm:$0xf]
        %v304 = vld [vmem:[%s277 + $0x94] sm:$0xf]
        %v305 = vld [vmem:[%s277 + $0x9c] sm:$0xf]
        %v306 = vld [vmem:[%s277 + $0xa0] sm:$0xf]
        %v307 = vld [vmem:[%s277 + $0xa8] sm:$0xf]
        %v308 = vld [vmem:[%s277 + $0xac] sm:$0xf]
        %v309 = vld [vmem:[%s277 + $0xb4] sm:$0xf]
        %v310 = vld [vmem:[%s277 + $0xb8] sm:$0xf]
        %v311 = vld [vmem:[%s1] sm:$0xf]
        %v312 = vld [vmem:[%s1 + $0x4] sm:$0xf]
        %v313 = vld [vmem:[%s1 + $0x8] sm:$0xf]
        %v314 = vld [vmem:[%s1 + $0xc] sm:$0xf]
        %v315 = vld [vmem:[%s1 + $0x10] sm:$0xf]
        %v316 = vld [vmem:[%s1 + $0x14] sm:$0xf]
        %v317 = vld [vmem:[%s1 + $0x18] sm:$0xf]
        %v318 = vld [vmem:[%s1 + $0x1c] sm:$0xf]
        %v319 = vld [vmem:[%s1 + $0x20] sm:$0xf]
        %v320 = vld [vmem:[%s1 + $0x24] sm:$0xf]
        %v321 = vld [vmem:[%s1 + $0x28] sm:$0xf]
        %v322 = vld [vmem:[%s1 + $0x2c] sm:$0xf]
        %v323 = vld [vmem:[%s1 + $0x30] sm:$0xf]
        %v324 = vld [vmem:[%s1 + $0x34] sm:$0xf]
        %v325 = vld [vmem:[%s1 + $0x38] sm:$0xf]
        %v326 = vld [vmem:[%s1 + $0x3c] sm:$0xf]
        %v327 = vld [vmem:[%s277 + $0x8] sm:$0x1]
        %v328 = vld [vmem:[%s277 + $0x14] sm:$0x1]
        %v329 = vld [vmem:[%s277 + $0x20] sm:$0x1]
        %v330 = vld [vmem:[%s277 + $0x2c] sm:$0x1]
        %v331 = vld [vmem:[%s277 + $0x38] sm:$0x1]
        %v332 = vld [vmem:[%s277 + $0x44] sm:$0x1]
        %v333 = vld [vmem:[%s277 + $0x50] sm:$0x1]
        %v334 = vld [vmem:[%s277 + $0x5c] sm:$0x1]
        %v335 = vld [vmem:[%s277 + $0x68] sm:$0x1]
        %v336 = vld [vmem:[%s277 + $0x74] sm:$0x1]
        %v337 = vld [vmem:[%s277 + $0x80] sm:$0x1]
        %v338 = vld [vmem:[%s277 + $0x8c] sm:$0x1]
        %v339 = vld [vmem:[%s277 + $0x98] sm:$0x1]
        %v340 = vld [vmem:[%s277 + $0xa4] sm:$0x1]
        %v341 = vld [vmem:[%s277 + $0xb0] sm:$0x1]
        %v342 = vld [vmem:[%s277 + $0xbc] sm:$0x1]
        %vm343 = vsmask.f32 3328
        %vm344 = vsmask.f32 7440
        %vm345 = vmor %vm343, %vm344
        %v347 = vshrl.u32 %v279, 16
        %v349 = vrot.slane %v347, 4
        %v350 = vshll.u32 %v279, 16
        %v352 = vrot.slane %v350, 5
        %v353 = vor.u32 %v349, %v352
        %v354 = vrot.slane %v353, 4
        %v356 = vshll.u32 %v280, 16
        %v358 = vrot.slane %v356, 5
        %v359 = vsel %vm345, %v354, %v358
        %v360 = vshrl.u32 %v280, 16
        %v362 = vrot.slane %v360, 4
        %v363 = vor.u32 %v362, %v358
        %v364 = vrot.slane %v363, 4
        %v366 = vshll.u32 %v327, 16
        %v368 = vrot.slane %v366, 5
        %v369 = vsel %vm345, %v364, %v368
        %v371 = vshrl.u32 %v281, 16
        %v373 = vrot.slane %v371, 4
        %v374 = vshll.u32 %v281, 16
        %v376 = vrot.slane %v374, 5
        %v377 = vor.u32 %v373, %v376
        %v378 = vrot.slane %v377, 4
        %v380 = vshll.u32 %v282, 16
        %v382 = vrot.slane %v380, 5
        %v383 = vsel %vm345, %v378, %v382
        %v384 = vshrl.u32 %v282, 16
        %v386 = vrot.slane %v384, 4
        %v387 = vor.u32 %v386, %v382
        %v388 = vrot.slane %v387, 4
        %v390 = vshll.u32 %v328, 16
        %v392 = vrot.slane %v390, 5
        %v393 = vsel %vm345, %v388, %v392
        %v395 = vshrl.u32 %v283, 16
        %v397 = vrot.slane %v395, 4
        %v398 = vshll.u32 %v283, 16
        %v400 = vrot.slane %v398, 5
        %v401 = vor.u32 %v397, %v400
        %v402 = vrot.slane %v401, 4
        %v404 = vshll.u32 %v284, 16
        %v406 = vrot.slane %v404, 5
        %v407 = vsel %vm345, %v402, %v406
        %v408 = vshrl.u32 %v284, 16
        %v410 = vrot.slane %v408, 4
        %v411 = vor.u32 %v410, %v406
        %v412 = vrot.slane %v411, 4
        %v414 = vshll.u32 %v329, 16
        %v416 = vrot.slane %v414, 5
        %v417 = vsel %vm345, %v412, %v416
        %v419 = vshrl.u32 %v285, 16
        %v421 = vrot.slane %v419, 4
        %v422 = vshll.u32 %v285, 16
        %v424 = vrot.slane %v422, 5
        %v425 = vor.u32 %v421, %v424
        %v426 = vrot.slane %v425, 4
        %v428 = vshll.u32 %v286, 16
        %v430 = vrot.slane %v428, 5
        %v431 = vsel %vm345, %v426, %v430
        %v432 = vshrl.u32 %v286, 16
        %v434 = vrot.slane %v432, 4
        %v435 = vor.u32 %v434, %v430
        %v436 = vrot.slane %v435, 4
        %v438 = vshll.u32 %v330, 16
        %v440 = vrot.slane %v438, 5
        %v441 = vsel %vm345, %v436, %v440
        %v443 = vshrl.u32 %v287, 16
        %v445 = vrot.slane %v443, 4
        %v446 = vshll.u32 %v287, 16
        %v448 = vrot.slane %v446, 5
        %v449 = vor.u32 %v445, %v448
        %v450 = vrot.slane %v449, 4
        %v452 = vshll.u32 %v288, 16
        %v454 = vrot.slane %v452, 5
        %v455 = vsel %vm345, %v450, %v454
        %v456 = vshrl.u32 %v288, 16
        %v458 = vrot.slane %v456, 4
        %v459 = vor.u32 %v458, %v454
        %v460 = vrot.slane %v459, 4
        %v462 = vshll.u32 %v331, 16
        %v464 = vrot.slane %v462, 5
        %v465 = vsel %vm345, %v460, %v464
        %v467 = vshrl.u32 %v289, 16
        %v469 = vrot.slane %v467, 4
        %v470 = vshll.u32 %v289, 16
        %v472 = vrot.slane %v470, 5
        %v473 = vor.u32 %v469, %v472
        %v474 = vrot.slane %v473, 4
        %v476 = vshll.u32 %v290, 16
        %v478 = vrot.slane %v476, 5
        %v479 = vsel %vm345, %v474, %v478
        %v480 = vshrl.u32 %v290, 16
        %v482 = vrot.slane %v480, 4
        %v483 = vor.u32 %v482, %v478
        %v484 = vrot.slane %v483, 4
        %v486 = vshll.u32 %v332, 16
        %v488 = vrot.slane %v486, 5
        %v489 = vsel %vm345, %v484, %v488
        %v491 = vshrl.u32 %v291, 16
        %v493 = vrot.slane %v491, 4
        %v494 = vshll.u32 %v291, 16
        %v496 = vrot.slane %v494, 5
        %v497 = vor.u32 %v493, %v496
        %v498 = vrot.slane %v497, 4
        %v500 = vshll.u32 %v292, 16
        %v502 = vrot.slane %v500, 5
        %v503 = vsel %vm345, %v498, %v502
        %v504 = vshrl.u32 %v292, 16
        %v506 = vrot.slane %v504, 4
        %v507 = vor.u32 %v506, %v502
        %v508 = vrot.slane %v507, 4
        %v510 = vshll.u32 %v333, 16
        %v512 = vrot.slane %v510, 5
        %v513 = vsel %vm345, %v508, %v512
        %v515 = vshrl.u32 %v293, 16
        %v517 = vrot.slane %v515, 4
        %v518 = vshll.u32 %v293, 16
        %v520 = vrot.slane %v518, 5
        %v521 = vor.u32 %v517, %v520
        %v522 = vrot.slane %v521, 4
        %v524 = vshll.u32 %v294, 16
        %v526 = vrot.slane %v524, 5
        %v527 = vsel %vm345, %v522, %v526
        %v528 = vshrl.u32 %v294, 16
        %v530 = vrot.slane %v528, 4
        %v531 = vor.u32 %v530, %v526
        %v532 = vrot.slane %v531, 4
        %v534 = vshll.u32 %v334, 16
        %v536 = vrot.slane %v534, 5
        %v537 = vsel %vm345, %v532, %v536
        %v539 = vshrl.u32 %v295, 16
        %v541 = vrot.slane %v539, 4
        %v542 = vshll.u32 %v295, 16
        %v544 = vrot.slane %v542, 5
        %v545 = vor.u32 %v541, %v544
        %v546 = vrot.slane %v545, 4
        %v548 = vshll.u32 %v296, 16
        %v550 = vrot.slane %v548, 5
        %v551 = vsel %vm345, %v546, %v550
        %v552 = vshrl.u32 %v296, 16
        %v554 = vrot.slane %v552, 4
        %v555 = vor.u32 %v554, %v550
        %v556 = vrot.slane %v555, 4
        %v558 = vshll.u32 %v335, 16
        %v560 = vrot.slane %v558, 5
        %v561 = vsel %vm345, %v556, %v560
        %v563 = vshrl.u32 %v297, 16
        %v565 = vrot.slane %v563, 4
        %v566 = vshll.u32 %v297, 16
        %v568 = vrot.slane %v566, 5
        %v569 = vor.u32 %v565, %v568
        %v570 = vrot.slane %v569, 4
        %v572 = vshll.u32 %v298, 16
        %v574 = vrot.slane %v572, 5
        %v575 = vsel %vm345, %v570, %v574
        %v576 = vshrl.u32 %v298, 16
        %v578 = vrot.slane %v576, 4
        %v579 = vor.u32 %v578, %v574
        %v580 = vrot.slane %v579, 4
        %v582 = vshll.u32 %v336, 16
        %v584 = vrot.slane %v582, 5
        %v585 = vsel %vm345, %v580, %v584
        %v587 = vshrl.u32 %v299, 16
        %v589 = vrot.slane %v587, 4
        %v590 = vshll.u32 %v299, 16
        %v592 = vrot.slane %v590, 5
        %v593 = vor.u32 %v589, %v592
        %v594 = vrot.slane %v593, 4
        %v596 = vshll.u32 %v300, 16
        %v598 = vrot.slane %v596, 5
        %v599 = vsel %vm345, %v594, %v598
        %v600 = vshrl.u32 %v300, 16
        %v602 = vrot.slane %v600, 4
        %v603 = vor.u32 %v602, %v598
        %v604 = vrot.slane %v603, 4
        %v606 = vshll.u32 %v337, 16
        %v608 = vrot.slane %v606, 5
        %v609 = vsel %vm345, %v604, %v608
        %v611 = vshrl.u32 %v301, 16
        %v613 = vrot.slane %v611, 4
        %v614 = vshll.u32 %v301, 16
        %v616 = vrot.slane %v614, 5
        %v617 = vor.u32 %v613, %v616
        %v618 = vrot.slane %v617, 4
        %v620 = vshll.u32 %v302, 16
        %v622 = vrot.slane %v620, 5
        %v623 = vsel %vm345, %v618, %v622
        %v624 = vshrl.u32 %v302, 16
        %v626 = vrot.slane %v624, 4
        %v627 = vor.u32 %v626, %v622
        %v628 = vrot.slane %v627, 4
        %v630 = vshll.u32 %v338, 16
        %v632 = vrot.slane %v630, 5
        %v633 = vsel %vm345, %v628, %v632
        %v635 = vshrl.u32 %v303, 16
        %v637 = vrot.slane %v635, 4
        %v638 = vshll.u32 %v303, 16
        %v640 = vrot.slane %v638, 5
        %v641 = vor.u32 %v637, %v640
        %v642 = vrot.slane %v641, 4
        %v644 = vshll.u32 %v304, 16
        %v646 = vrot.slane %v644, 5
        %v647 = vsel %vm345, %v642, %v646
        %v648 = vshrl.u32 %v304, 16
        %v650 = vrot.slane %v648, 4
        %v651 = vor.u32 %v650, %v646
        %v652 = vrot.slane %v651, 4
        %v654 = vshll.u32 %v339, 16
        %v656 = vrot.slane %v654, 5
        %v657 = vsel %vm345, %v652, %v656
        %v659 = vshrl.u32 %v305, 16
        %v661 = vrot.slane %v659, 4
        %v662 = vshll.u32 %v305, 16
        %v664 = vrot.slane %v662, 5
        %v665 = vor.u32 %v661, %v664
        %v666 = vrot.slane %v665, 4
        %v668 = vshll.u32 %v306, 16
        %v670 = vrot.slane %v668, 5
        %v671 = vsel %vm345, %v666, %v670
        %v672 = vshrl.u32 %v306, 16
        %v674 = vrot.slane %v672, 4
        %v675 = vor.u32 %v674, %v670
        %v676 = vrot.slane %v675, 4
        %v678 = vshll.u32 %v340, 16
        %v680 = vrot.slane %v678, 5
        %v681 = vsel %vm345, %v676, %v680
        %v683 = vshrl.u32 %v307, 16
        %v685 = vrot.slane %v683, 4
        %v686 = vshll.u32 %v307, 16
        %v688 = vrot.slane %v686, 5
        %v689 = vor.u32 %v685, %v688
        %v690 = vrot.slane %v689, 4
        %v692 = vshll.u32 %v308, 16
        %v694 = vrot.slane %v692, 5
        %v695 = vsel %vm345, %v690, %v694
        %v696 = vshrl.u32 %v308, 16
        %v698 = vrot.slane %v696, 4
        %v699 = vor.u32 %v698, %v694
        %v700 = vrot.slane %v699, 4
        %v702 = vshll.u32 %v341, 16
        %v704 = vrot.slane %v702, 5
        %v705 = vsel %vm345, %v700, %v704
        %v707 = vshrl.u32 %v309, 16
        %v709 = vrot.slane %v707, 4
        %v710 = vshll.u32 %v309, 16
        %v712 = vrot.slane %v710, 5
        %v713 = vor.u32 %v709, %v712
        %v714 = vrot.slane %v713, 4
        %v716 = vshll.u32 %v310, 16
        %v718 = vrot.slane %v716, 5
        %v719 = vsel %vm345, %v714, %v718
        %v720 = vshrl.u32 %v310, 16
        %v722 = vrot.slane %v720, 4
        %v723 = vor.u32 %v722, %v718
        %v724 = vrot.slane %v723, 4
        %v726 = vshll.u32 %v342, 16
        %v728 = vrot.slane %v726, 5
        %v729 = vsel %vm345, %v724, %v728
        %s730 = scalar_lea.vmem %s1, 64
        %v731 = vld [vmem:[%s730] sm:$0xf]
        %v732 = vld [vmem:[%s730 + $0x4] sm:$0xf]
        %v733 = vld [vmem:[%s730 + $0x8] sm:$0xf]
        %v734 = vld [vmem:[%s730 + $0xc] sm:$0xf]
        %v735 = vld [vmem:[%s730 + $0x10] sm:$0xf]
        %v736 = vld [vmem:[%s730 + $0x14] sm:$0xf]
        %v737 = vld [vmem:[%s730 + $0x18] sm:$0xf]
        %v738 = vld [vmem:[%s730 + $0x1c] sm:$0xf]
        %v739 = vld [vmem:[%s730 + $0x20] sm:$0xf]
        %v740 = vld [vmem:[%s730 + $0x24] sm:$0xf]
        %v741 = vld [vmem:[%s730 + $0x28] sm:$0xf]
        %v742 = vld [vmem:[%s730 + $0x2c] sm:$0xf]
        %v743 = vld [vmem:[%s730 + $0x30] sm:$0xf]
        %v744 = vld [vmem:[%s730 + $0x34] sm:$0xf]
        %v745 = vld [vmem:[%s730 + $0x38] sm:$0xf]
        %v746 = vld [vmem:[%s730 + $0x3c] sm:$0xf]
        %v747 = vunpack.c.l.b16 %v359
        %v748 = vunpack.c.l.b16 %v369
        %v749 = vunpack.c.l.b16 %v383
        %v750 = vunpack.c.l.b16 %v393
        %v751 = vunpack.c.l.b16 %v407
        %v752 = vunpack.c.l.b16 %v417
        %v753 = vunpack.c.l.b16 %v431
        %v754 = vunpack.c.l.b16 %v441
        %v755 = vunpack.c.l.b16 %v455
        %v756 = vunpack.c.l.b16 %v465
        %v757 = vunpack.c.l.b16 %v479
        %v758 = vunpack.c.l.b16 %v489
        %v759 = vunpack.c.l.b16 %v503
        %v760 = vunpack.c.l.b16 %v513
        %v761 = vunpack.c.l.b16 %v527
        %v762 = vunpack.c.l.b16 %v537
        %v763 = vunpack.c.l.b16 %v551
        %v764 = vunpack.c.l.b16 %v561
        %v765 = vunpack.c.l.b16 %v575
        %v766 = vunpack.c.l.b16 %v585
        %v767 = vunpack.c.l.b16 %v599
        %v768 = vunpack.c.l.b16 %v609
        %v769 = vunpack.c.l.b16 %v623
        %v770 = vunpack.c.l.b16 %v633
        %v771 = vunpack.c.l.b16 %v647
        %v772 = vunpack.c.l.b16 %v657
        %v773 = vunpack.c.l.b16 %v671
        %v774 = vunpack.c.l.b16 %v681
        %v775 = vunpack.c.l.b16 %v695
        %v776 = vunpack.c.l.b16 %v705
        %v777 = vunpack.c.l.b16 %v719
        %v778 = vunpack.c.l.b16 %v729
        %v779 = vpack.c.b16 %v748, %v747
        %v780 = vpack.c.b16 %v750, %v749
        %v781 = vpack.c.b16 %v752, %v751
        %v782 = vpack.c.b16 %v754, %v753
        %v783 = vpack.c.b16 %v756, %v755
        %v784 = vpack.c.b16 %v758, %v757
        %v785 = vpack.c.b16 %v760, %v759
        %v786 = vpack.c.b16 %v762, %v761
        %v787 = vpack.c.b16 %v764, %v763
        %v788 = vpack.c.b16 %v766, %v765
        %v789 = vpack.c.b16 %v768, %v767
        %v790 = vpack.c.b16 %v770, %v769
        %v791 = vpack.c.b16 %v772, %v771
        %v792 = vpack.c.b16 %v774, %v773
        %v793 = vpack.c.b16 %v776, %v775
        %v794 = vpack.c.b16 %v778, %v777
        %v827 = vunpack.c.l.b16 %v731
        %v828 = vunpack.c.l.b16 %v732
        %v829 = vunpack.c.l.b16 %v733
        %v830 = vunpack.c.l.b16 %v734
        %v831 = vunpack.c.l.b16 %v735
        %v832 = vunpack.c.l.b16 %v736
        %v833 = vunpack.c.l.b16 %v737
        %v834 = vunpack.c.l.b16 %v738
        %v835 = vunpack.c.l.b16 %v739
        %v836 = vunpack.c.l.b16 %v740
        %v837 = vunpack.c.l.b16 %v741
        %v838 = vunpack.c.l.b16 %v742
        %v839 = vunpack.c.l.b16 %v743
        %v840 = vunpack.c.l.b16 %v744
        %v841 = vunpack.c.l.b16 %v745
        %v842 = vunpack.c.l.b16 %v746
        %v843 = vpack.c.b16 %v828, %v827
        %v844 = vpack.c.b16 %v830, %v829
        %v845 = vpack.c.b16 %v832, %v831
        %v846 = vpack.c.b16 %v834, %v833
        %v847 = vpack.c.b16 %v836, %v835
        %v848 = vpack.c.b16 %v838, %v837
        %v849 = vpack.c.b16 %v840, %v839
        %v850 = vpack.c.b16 %v842, %v841
        %859 = vmatprep.subr.bf16.mxu0 0
        %860 = vmatpush1.bf16.msra.mxu0 %v843
        %861 = vmatprep.subr.bf16.mxu0 0
        %862 = vmatpush1.bf16.msra.mxu0 %v844
        %863 = vmatprep.subr.bf16.mxu0 0
        %864 = vmatpush1.bf16.msra.mxu0 %v845
        %865 = vmatprep.subr.bf16.mxu0 0
        %866 = vmatpush1.bf16.msra.mxu0 %v846
        %867 = vmatprep.subr.bf16.mxu0 0
        %868 = vmatpush1.bf16.msra.mxu0 %v847
        %869 = vmatprep.subr.bf16.mxu0 0
        %870 = vmatpush1.bf16.msra.mxu0 %v848
        %871 = vmatprep.subr.bf16.mxu0 0
        %872 = vmatpush1.bf16.msra.mxu0 %v849
        %873 = vmatprep.subr.bf16.mxu0 0
        %874 = vmatpush1.bf16.msra.mxu0 %v850
        %875 = vmatprep.subr.bf16.mxu0 0
        %876 = vmatpush1.bf16.msra.mxu0 0
        %877 = vmatprep.subr.bf16.mxu0 0
        %878 = vmatpush1.bf16.msra.mxu0 0
        %879 = vmatprep.subr.bf16.mxu0 0
        %880 = vmatpush1.bf16.msra.mxu0 0
        %881 = vmatprep.subr.bf16.mxu0 0
        %882 = vmatpush1.bf16.msra.mxu0 0
        %883 = vmatprep.subr.bf16.mxu0 0
        %884 = vmatpush1.bf16.msra.mxu0 0
        %885 = vmatprep.subr.bf16.mxu0 0
        %886 = vmatpush1.bf16.msra.mxu0 0
        %887 = vmatprep.subr.bf16.mxu0 0
        %888 = vmatpush1.bf16.msra.mxu0 0
        %889 = vmatprep.subr.bf16.mxu0 0
        %890 = vmatpush1.bf16.msra.mxu0 0
        %891 = vmatprep.mubr.bf16.mxu0 0
        %892 = vmatmul.mubr.bf16.gmra.mrb[0].mxu0 %v779
        %v893 = vpop.f32.mrb[0].mxu0
        %v894 = vadd.f32 0.0, %v893
        %v895 = vpop.f32.mrb[0].mxu0
        %v896 = vpop.f32.mrb[0].mxu0
        %v897 = vadd.f32 0.0, %v896
        %v898 = vpop.f32.mrb[0].mxu0
        %899 = vmatprep.mubr.bf16.mxu0 0
        %900 = vmatmul.mubr.bf16.gmra.mrb[0].mxu0 %v780
        %v901 = vpop.f32.mrb[0].mxu0
        %v902 = vadd.f32 0.0, %v901
        %v903 = vpop.f32.mrb[0].mxu0
        %v904 = vpop.f32.mrb[0].mxu0
        %v905 = vadd.f32 0.0, %v904
        %v906 = vpop.f32.mrb[0].mxu0
        %907 = vmatprep.mubr.bf16.mxu0 0
        %908 = vmatmul.mubr.bf16.gmra.mrb[0].mxu0 %v781
        %v909 = vpop.f32.mrb[0].mxu0
        %v910 = vadd.f32 0.0, %v909
        %v911 = vpop.f32.mrb[0].mxu0
        %v912 = vpop.f32.mrb[0].mxu0
        %v913 = vadd.f32 0.0, %v912
        %v914 = vpop.f32.mrb[0].mxu0
        %915 = vmatprep.mubr.bf16.mxu0 0
        %916 = vmatmul.mubr.bf16.gmra.mrb[0].mxu0 %v782
        %v917 = vpop.f32.mrb[0].mxu0
        %v918 = vadd.f32 0.0, %v917
        %v919 = vpop.f32.mrb[0].mxu0
        %v920 = vpop.f32.mrb[0].mxu0
        %v921 = vadd.f32 0.0, %v920
        %v922 = vpop.f32.mrb[0].mxu0
        %923 = vmatprep.mubr.bf16.mxu0 0
        %924 = vmatmul.mubr.bf16.gmra.mrb[0].mxu0 %v783
        %v925 = vpop.f32.mrb[0].mxu0
        %v926 = vadd.f32 0.0, %v925
        %v927 = vpop.f32.mrb[0].mxu0
        %v928 = vpop.f32.mrb[0].mxu0
        %v929 = vadd.f32 0.0, %v928
        %v930 = vpop.f32.mrb[0].mxu0
        %931 = vmatprep.mubr.bf16.mxu0 0
        %932 = vmatmul.mubr.bf16.gmra.mrb[0].mxu0 %v784
        %v933 = vpop.f32.mrb[0].mxu0
        %v934 = vadd.f32 0.0, %v933
        %v935 = vpop.f32.mrb[0].mxu0
        %v936 = vpop.f32.mrb[0].mxu0
        %v937 = vadd.f32 0.0, %v936
        %v938 = vpop.f32.mrb[0].mxu0
        %939 = vmatprep.mubr.bf16.mxu0 0
        %940 = vmatmul.mubr.bf16.gmra.mrb[0].mxu0 %v785
        %v941 = vpop.f32.mrb[0].mxu0
        %v942 = vadd.f32 0.0, %v941
        %v943 = vpop.f32.mrb[0].mxu0
        %v944 = vpop.f32.mrb[0].mxu0
        %v945 = vadd.f32 0.0, %v944
        %v946 = vpop.f32.mrb[0].mxu0
        %947 = vmatprep.mubr.bf16.mxu0 0
        %948 = vmatmul.mubr.bf16.gmra.mrb[0].mxu0 %v786
        %v949 = vpop.f32.mrb[0].mxu0
        %v950 = vadd.f32 0.0, %v949
        %v951 = vpop.f32.mrb[0].mxu0
        %v952 = vpop.f32.mrb[0].mxu0
        %v953 = vadd.f32 0.0, %v952
        %v954 = vpop.f32.mrb[0].mxu0
        %955 = vmatprep.mubr.bf16.mxu0 0
        %956 = vmatmul.mubr.bf16.gmra.mrb[0].mxu0 %v787
        %v957 = vpop.f32.mrb[0].mxu0
        %v958 = vadd.f32 0.0, %v957
        %v959 = vpop.f32.mrb[0].mxu0
        %v960 = vpop.f32.mrb[0].mxu0
        %v961 = vadd.f32 0.0, %v960
        %v962 = vpop.f32.mrb[0].mxu0
        %963 = vmatprep.mubr.bf16.mxu0 0
        %964 = vmatmul.mubr.bf16.gmra.mrb[0].mxu0 %v788
        %v965 = vpop.f32.mrb[0].mxu0
        %v966 = vadd.f32 0.0, %v965
        %v967 = vpop.f32.mrb[0].mxu0
        %v968 = vpop.f32.mrb[0].mxu0
        %v969 = vadd.f32 0.0, %v968
        %v970 = vpop.f32.mrb[0].mxu0
        %971 = vmatprep.mubr.bf16.mxu0 0
        %972 = vmatmul.mubr.bf16.gmra.mrb[0].mxu0 %v789
        %v973 = vpop.f32.mrb[0].mxu0
        %v974 = vadd.f32 0.0, %v973
        %v975 = vpop.f32.mrb[0].mxu0
        %v976 = vpop.f32.mrb[0].mxu0
        %v977 = vadd.f32 0.0, %v976
        %v978 = vpop.f32.mrb[0].mxu0
        %979 = vmatprep.mubr.bf16.mxu0 0
        %980 = vmatmul.mubr.bf16.gmra.mrb[0].mxu0 %v790
        %v981 = vpop.f32.mrb[0].mxu0
        %v982 = vadd.f32 0.0, %v981
        %v983 = vpop.f32.mrb[0].mxu0
        %v984 = vpop.f32.mrb[0].mxu0
        %v985 = vadd.f32 0.0, %v984
        %v986 = vpop.f32.mrb[0].mxu0
        %987 = vmatprep.mubr.bf16.mxu0 0
        %988 = vmatmul.mubr.bf16.gmra.mrb[0].mxu0 %v791
        %v989 = vpop.f32.mrb[0].mxu0
        %v990 = vadd.f32 0.0, %v989
        %v991 = vpop.f32.mrb[0].mxu0
        %v992 = vpop.f32.mrb[0].mxu0
        %v993 = vadd.f32 0.0, %v992
        %v994 = vpop.f32.mrb[0].mxu0
        %995 = vmatprep.mubr.bf16.mxu0 0
        %996 = vmatmul.mubr.bf16.gmra.mrb[0].mxu0 %v792
        %v997 = vpop.f32.mrb[0].mxu0
        %v998 = vadd.f32 0.0, %v997
        %v999 = vpop.f32.mrb[0].mxu0
        %v1000 = vpop.f32.mrb[0].mxu0
        %v1001 = vadd.f32 0.0, %v1000
        %v1002 = vpop.f32.mrb[0].mxu0
        %1003 = vmatprep.mubr.bf16.mxu0 0
        %1004 = vmatmul.mubr.bf16.gmra.mrb[0].mxu0 %v793
        %v1005 = vpop.f32.mrb[0].mxu0
        %v1006 = vadd.f32 0.0, %v1005
        %v1007 = vpop.f32.mrb[0].mxu0
        %v1008 = vpop.f32.mrb[0].mxu0
        %v1009 = vadd.f32 0.0, %v1008
        %v1010 = vpop.f32.mrb[0].mxu0
        %1011 = vmatprep.mubr.bf16.mxu0 0
        %1012 = vmatmul.mubr.bf16.gmra.mrb[0].mxu0 %v794
        %v1013 = vpop.f32.mrb[0].mxu0
        %v1014 = vadd.f32 0.0, %v1013
        %v1015 = vpop.f32.mrb[0].mxu0
        %v1016 = vpop.f32.mrb[0].mxu0
        %v1017 = vadd.f32 0.0, %v1016
        %v1018 = vpop.f32.mrb[0].mxu0
        %1019 = vdwg.mxu0
        %v1052 = vunpack.c.l.b16 %v279
        %v1053 = vunpack.c.l.b16 %v280
        %v1054 = vunpack.c.l.b16 %v281
        %v1055 = vunpack.c.l.b16 %v282
        %v1056 = vunpack.c.l.b16 %v283
        %v1057 = vunpack.c.l.b16 %v284
        %v1058 = vunpack.c.l.b16 %v285
        %v1059 = vunpack.c.l.b16 %v286
        %v1060 = vunpack.c.l.b16 %v287
        %v1061 = vunpack.c.l.b16 %v288
        %v1062 = vunpack.c.l.b16 %v289
        %v1063 = vunpack.c.l.b16 %v290
        %v1064 = vunpack.c.l.b16 %v291
        %v1065 = vunpack.c.l.b16 %v292
        %v1066 = vunpack.c.l.b16 %v293
        %v1067 = vunpack.c.l.b16 %v294
        %v1068 = vunpack.c.l.b16 %v295
        %v1069 = vunpack.c.l.b16 %v296
        %v1070 = vunpack.c.l.b16 %v297
        %v1071 = vunpack.c.l.b16 %v298
        %v1072 = vunpack.c.l.b16 %v299
        %v1073 = vunpack.c.l.b16 %v300
        %v1074 = vunpack.c.l.b16 %v301
        %v1075 = vunpack.c.l.b16 %v302
        %v1076 = vunpack.c.l.b16 %v303
        %v1077 = vunpack.c.l.b16 %v304
        %v1078 = vunpack.c.l.b16 %v305
        %v1079 = vunpack.c.l.b16 %v306
        %v1080 = vunpack.c.l.b16 %v307
        %v1081 = vunpack.c.l.b16 %v308
        %v1082 = vunpack.c.l.b16 %v309
        %v1083 = vunpack.c.l.b16 %v310
        %v1084 = vpack.c.b16 %v1053, %v1052
        %v1085 = vpack.c.b16 %v1055, %v1054
        %v1086 = vpack.c.b16 %v1057, %v1056
        %v1087 = vpack.c.b16 %v1059, %v1058
        %v1088 = vpack.c.b16 %v1061, %v1060
        %v1089 = vpack.c.b16 %v1063, %v1062
        %v1090 = vpack.c.b16 %v1065, %v1064
        %v1091 = vpack.c.b16 %v1067, %v1066
        %v1092 = vpack.c.b16 %v1069, %v1068
        %v1093 = vpack.c.b16 %v1071, %v1070
        %v1094 = vpack.c.b16 %v1073, %v1072
        %v1095 = vpack.c.b16 %v1075, %v1074
        %v1096 = vpack.c.b16 %v1077, %v1076
        %v1097 = vpack.c.b16 %v1079, %v1078
        %v1098 = vpack.c.b16 %v1081, %v1080
        %v1099 = vpack.c.b16 %v1083, %v1082
        %v1132 = vunpack.c.l.b16 %v311
        %v1133 = vunpack.c.l.b16 %v312
        %v1134 = vunpack.c.l.b16 %v313
        %v1135 = vunpack.c.l.b16 %v314
        %v1136 = vunpack.c.l.b16 %v315
        %v1137 = vunpack.c.l.b16 %v316
        %v1138 = vunpack.c.l.b16 %v317
        %v1139 = vunpack.c.l.b16 %v318
        %v1140 = vunpack.c.l.b16 %v319
        %v1141 = vunpack.c.l.b16 %v320
        %v1142 = vunpack.c.l.b16 %v321
        %v1143 = vunpack.c.l.b16 %v322
        %v1144 = vunpack.c.l.b16 %v323
        %v1145 = vunpack.c.l.b16 %v324
        %v1146 = vunpack.c.l.b16 %v325
        %v1147 = vunpack.c.l.b16 %v326
        %v1148 = vpack.c.b16 %v1133, %v1132
        %v1149 = vpack.c.b16 %v1135, %v1134
        %v1150 = vpack.c.b16 %v1137, %v1136
        %v1151 = vpack.c.b16 %v1139, %v1138
        %v1152 = vpack.c.b16 %v1141, %v1140
        %v1153 = vpack.c.b16 %v1143, %v1142
        %v1154 = vpack.c.b16 %v1145, %v1144
        %v1155 = vpack.c.b16 %v1147, %v1146
        %1164 = vmatprep.subr.bf16.mxu0 0
        %1165 = vmatpush1.bf16.msra.mxu0 %v1148
        %1166 = vmatprep.subr.bf16.mxu0 0
        %1167 = vmatpush1.bf16.msra.mxu0 %v1149
        %1168 = vmatprep.subr.bf16.mxu0 0
        %1169 = vmatpush1.bf16.msra.mxu0 %v1150
        %1170 = vmatprep.subr.bf16.mxu0 0
        %1171 = vmatpush1.bf16.msra.mxu0 %v1151
        %1172 = vmatprep.subr.bf16.mxu0 0
        %1173 = vmatpush1.bf16.msra.mxu0 %v1152
        %1174 = vmatprep.subr.bf16.mxu0 0
        %1175 = vmatpush1.bf16.msra.mxu0 %v1153
        %1176 = vmatprep.subr.bf16.mxu0 0
        %1177 = vmatpush1.bf16.msra.mxu0 %v1154
        %1178 = vmatprep.subr.bf16.mxu0 0
        %1179 = vmatpush1.bf16.msra.mxu0 %v1155
        %1180 = vmatprep.subr.bf16.mxu0 0
        %1181 = vmatpush1.bf16.msra.mxu0 0
        %1182 = vmatprep.subr.bf16.mxu0 0
        %1183 = vmatpush1.bf16.msra.mxu0 0
        %1184 = vmatprep.subr.bf16.mxu0 0
        %1185 = vmatpush1.bf16.msra.mxu0 0
        %1186 = vmatprep.subr.bf16.mxu0 0
        %1187 = vmatpush1.bf16.msra.mxu0 0
        %1188 = vmatprep.subr.bf16.mxu0 0
        %1189 = vmatpush1.bf16.msra.mxu0 0
        %1190 = vmatprep.subr.bf16.mxu0 0
        %1191 = vmatpush1.bf16.msra.mxu0 0
        %1192 = vmatprep.subr.bf16.mxu0 0
        %1193 = vmatpush1.bf16.msra.mxu0 0
        %1194 = vmatprep.subr.bf16.mxu0 0
        %1195 = vmatpush1.bf16.msra.mxu0 0
        %1196 = vmatprep.mubr.bf16.mxu0 0
        %1197 = vmatmul.mubr.bf16.gmra.mrb[0].mxu0 %v1084
        %v1198 = vpop.f32.mrb[0].mxu0
        %v1199 = vadd.f32 %v894, %v1198
        %v1200 = vpop.f32.mrb[0].mxu0
        %v1201 = vpop.f32.mrb[0].mxu0
        %v1202 = vadd.f32 %v897, %v1201
        %v1203 = vpop.f32.mrb[0].mxu0
        %1204 = vmatprep.mubr.bf16.mxu0 0
        %1205 = vmatmul.mubr.bf16.gmra.mrb[0].mxu0 %v1085
        %v1206 = vpop.f32.mrb[0].mxu0
        %v1207 = vadd.f32 %v902, %v1206
        %v1208 = vpop.f32.mrb[0].mxu0
        %v1209 = vpop.f32.mrb[0].mxu0
        %v1210 = vadd.f32 %v905, %v1209
        %v1211 = vpop.f32.mrb[0].mxu0
        %1212 = vmatprep.mubr.bf16.mxu0 0
        %1213 = vmatmul.mubr.bf16.gmra.mrb[0].mxu0 %v1086
        %v1214 = vpop.f32.mrb[0].mxu0
        %v1215 = vadd.f32 %v910, %v1214
        %v1216 = vpop.f32.mrb[0].mxu0
        %v1217 = vpop.f32.mrb[0].mxu0
        %v1218 = vadd.f32 %v913, %v1217
        %v1219 = vpop.f32.mrb[0].mxu0
        %1220 = vmatprep.mubr.bf16.mxu0 0
        %1221 = vmatmul.mubr.bf16.gmra.mrb[0].mxu0 %v1087
        %v1222 = vpop.f32.mrb[0].mxu0
        %v1223 = vadd.f32 %v918, %v1222
        %v1224 = vpop.f32.mrb[0].mxu0
        %v1225 = vpop.f32.mrb[0].mxu0
        %v1226 = vadd.f32 %v921, %v1225
        %v1227 = vpop.f32.mrb[0].mxu0
        %1228 = vmatprep.mubr.bf16.mxu0 0
        %1229 = vmatmul.mubr.bf16.gmra.mrb[0].mxu0 %v1088
        %v1230 = vpop.f32.mrb[0].mxu0
        %v1231 = vadd.f32 %v926, %v1230
        %v1232 = vpop.f32.mrb[0].mxu0
        %v1233 = vpop.f32.mrb[0].mxu0
        %v1234 = vadd.f32 %v929, %v1233
        %v1235 = vpop.f32.mrb[0].mxu0
        %1236 = vmatprep.mubr.bf16.mxu0 0
        %1237 = vmatmul.mubr.bf16.gmra.mrb[0].mxu0 %v1089
        %v1238 = vpop.f32.mrb[0].mxu0
        %v1239 = vadd.f32 %v934, %v1238
        %v1240 = vpop.f32.mrb[0].mxu0
        %v1241 = vpop.f32.mrb[0].mxu0
        %v1242 = vadd.f32 %v937, %v1241
        %v1243 = vpop.f32.mrb[0].mxu0
        %1244 = vmatprep.mubr.bf16.mxu0 0
        %1245 = vmatmul.mubr.bf16.gmra.mrb[0].mxu0 %v1090
        %v1246 = vpop.f32.mrb[0].mxu0
        %v1247 = vadd.f32 %v942, %v1246
        %v1248 = vpop.f32.mrb[0].mxu0
        %v1249 = vpop.f32.mrb[0].mxu0
        %v1250 = vadd.f32 %v945, %v1249
        %v1251 = vpop.f32.mrb[0].mxu0
        %1252 = vmatprep.mubr.bf16.mxu0 0
        %1253 = vmatmul.mubr.bf16.gmra.mrb[0].mxu0 %v1091
        %v1254 = vpop.f32.mrb[0].mxu0
        %v1255 = vadd.f32 %v950, %v1254
        %v1256 = vpop.f32.mrb[0].mxu0
        %v1257 = vpop.f32.mrb[0].mxu0
        %v1258 = vadd.f32 %v953, %v1257
        %v1259 = vpop.f32.mrb[0].mxu0
        %1260 = vmatprep.mubr.bf16.mxu0 0
        %1261 = vmatmul.mubr.bf16.gmra.mrb[0].mxu0 %v1092
        %v1262 = vpop.f32.mrb[0].mxu0
        %v1263 = vadd.f32 %v958, %v1262
        %v1264 = vpop.f32.mrb[0].mxu0
        %v1265 = vpop.f32.mrb[0].mxu0
        %v1266 = vadd.f32 %v961, %v1265
        %v1267 = vpop.f32.mrb[0].mxu0
        %1268 = vmatprep.mubr.bf16.mxu0 0
        %1269 = vmatmul.mubr.bf16.gmra.mrb[0].mxu0 %v1093
        %v1270 = vpop.f32.mrb[0].mxu0
        %v1271 = vadd.f32 %v966, %v1270
        %v1272 = vpop.f32.mrb[0].mxu0
        %v1273 = vpop.f32.mrb[0].mxu0
        %v1274 = vadd.f32 %v969, %v1273
        %v1275 = vpop.f32.mrb[0].mxu0
        %1276 = vmatprep.mubr.bf16.mxu0 0
        %1277 = vmatmul.mubr.bf16.gmra.mrb[0].mxu0 %v1094
        %v1278 = vpop.f32.mrb[0].mxu0
        %v1279 = vadd.f32 %v974, %v1278
        %v1280 = vpop.f32.mrb[0].mxu0
        %v1281 = vpop.f32.mrb[0].mxu0
        %v1282 = vadd.f32 %v977, %v1281
        %v1283 = vpop.f32.mrb[0].mxu0
        %1284 = vmatprep.mubr.bf16.mxu0 0
        %1285 = vmatmul.mubr.bf16.gmra.mrb[0].mxu0 %v1095
        %v1286 = vpop.f32.mrb[0].mxu0
        %v1287 = vadd.f32 %v982, %v1286
        %v1288 = vpop.f32.mrb[0].mxu0
        %v1289 = vpop.f32.mrb[0].mxu0
        %v1290 = vadd.f32 %v985, %v1289
        %v1291 = vpop.f32.mrb[0].mxu0
        %1292 = vmatprep.mubr.bf16.mxu0 0
        %1293 = vmatmul.mubr.bf16.gmra.mrb[0].mxu0 %v1096
        %v1294 = vpop.f32.mrb[0].mxu0
        %v1295 = vadd.f32 %v990, %v1294
        %v1296 = vpop.f32.mrb[0].mxu0
        %v1297 = vpop.f32.mrb[0].mxu0
        %v1298 = vadd.f32 %v993, %v1297
        %v1299 = vpop.f32.mrb[0].mxu0
        %1300 = vmatprep.mubr.bf16.mxu0 0
        %1301 = vmatmul.mubr.bf16.gmra.mrb[0].mxu0 %v1097
        %v1302 = vpop.f32.mrb[0].mxu0
        %v1303 = vadd.f32 %v998, %v1302
        %v1304 = vpop.f32.mrb[0].mxu0
        %v1305 = vpop.f32.mrb[0].mxu0
        %v1306 = vadd.f32 %v1001, %v1305
        %v1307 = vpop.f32.mrb[0].mxu0
        %1308 = vmatprep.mubr.bf16.mxu0 0
        %1309 = vmatmul.mubr.bf16.gmra.mrb[0].mxu0 %v1098
        %v1310 = vpop.f32.mrb[0].mxu0
        %v1311 = vadd.f32 %v1006, %v1310
        %v1312 = vpop.f32.mrb[0].mxu0
        %v1313 = vpop.f32.mrb[0].mxu0
        %v1314 = vadd.f32 %v1009, %v1313
        %v1315 = vpop.f32.mrb[0].mxu0
        %1316 = vmatprep.mubr.bf16.mxu0 0
        %1317 = vmatmul.mubr.bf16.gmra.mrb[0].mxu0 %v1099
        %v1318 = vpop.f32.mrb[0].mxu0
        %v1319 = vadd.f32 %v1014, %v1318
        %v1320 = vpop.f32.mrb[0].mxu0
        %v1321 = vpop.f32.mrb[0].mxu0
        %v1322 = vadd.f32 %v1017, %v1321
        %v1323 = vpop.f32.mrb[0].mxu0
        %1324 = vdwg.mxu0
        %v1325 = vld [vmem:[%s277] sm:$0xe]
        %v1326 = vld [vmem:[%s277 + $0xc] sm:$0xe]
        %v1327 = vld [vmem:[%s277 + $0x18] sm:$0xe]
        %v1328 = vld [vmem:[%s277 + $0x24] sm:$0xe]
        %v1329 = vld [vmem:[%s277 + $0x30] sm:$0xe]
        %v1330 = vld [vmem:[%s277 + $0x3c] sm:$0xe]
        %v1331 = vld [vmem:[%s277 + $0x48] sm:$0xe]
        %v1332 = vld [vmem:[%s277 + $0x54] sm:$0xe]
        %v1333 = vld [vmem:[%s277 + $0x60] sm:$0xe]
        %v1334 = vld [vmem:[%s277 + $0x6c] sm:$0xe]
        %v1335 = vld [vmem:[%s277 + $0x78] sm:$0xe]
        %v1336 = vld [vmem:[%s277 + $0x84] sm:$0xe]
        %v1337 = vld [vmem:[%s277 + $0x90] sm:$0xe]
        %v1338 = vld [vmem:[%s277 + $0x9c] sm:$0xe]
        %v1339 = vld [vmem:[%s277 + $0xa8] sm:$0xe]
        %v1340 = vld [vmem:[%s277 + $0xb4] sm:$0xe]
        %vm1373 = vcmask 1042432
        %vm1374 = vcmask 1046532
        %vm1375 = vmor %vm1373, %vm1374
        %v1376 = vrot.slane %v1325, 5
        %v1377 = vrot.slane %v1376, 4
        %v1378 = vrot.slane %v280, 5
        %v1379 = vsel %vm1375, %v1377, %v1378
        %v1380 = vrot.slane %v1378, 4
        %v1381 = vrot.slane %v327, 5
        %v1382 = vsel %vm1375, %v1380, %v1381
        %v1383 = vrot.slane %v1326, 5
        %v1384 = vrot.slane %v1383, 4
        %v1385 = vrot.slane %v282, 5
        %v1386 = vsel %vm1375, %v1384, %v1385
        %v1387 = vrot.slane %v1385, 4
        %v1388 = vrot.slane %v328, 5
        %v1389 = vsel %vm1375, %v1387, %v1388
        %v1390 = vrot.slane %v1327, 5
        %v1391 = vrot.slane %v1390, 4
        %v1392 = vrot.slane %v284, 5
        %v1393 = vsel %vm1375, %v1391, %v1392
        %v1394 = vrot.slane %v1392, 4
        %v1395 = vrot.slane %v329, 5
        %v1396 = vsel %vm1375, %v1394, %v1395
        %v1397 = vrot.slane %v1328, 5
        %v1398 = vrot.slane %v1397, 4
        %v1399 = vrot.slane %v286, 5
        %v1400 = vsel %vm1375, %v1398, %v1399
        %v1401 = vrot.slane %v1399, 4
        %v1402 = vrot.slane %v330, 5
        %v1403 = vsel %vm1375, %v1401, %v1402
        %v1404 = vrot.slane %v1329, 5
        %v1405 = vrot.slane %v1404, 4
        %v1406 = vrot.slane %v288, 5
        %v1407 = vsel %vm1375, %v1405, %v1406
        %v1408 = vrot.slane %v1406, 4
        %v1409 = vrot.slane %v331, 5
        %v1410 = vsel %vm1375, %v1408, %v1409
        %v1411 = vrot.slane %v1330, 5
        %v1412 = vrot.slane %v1411, 4
        %v1413 = vrot.slane %v290, 5
        %v1414 = vsel %vm1375, %v1412, %v1413
        %v1415 = vrot.slane %v1413, 4
        %v1416 = vrot.slane %v332, 5
        %v1417 = vsel %vm1375, %v1415, %v1416
        %v1418 = vrot.slane %v1331, 5
        %v1419 = vrot.slane %v1418, 4
        %v1420 = vrot.slane %v292, 5
        %v1421 = vsel %vm1375, %v1419, %v1420
        %v1422 = vrot.slane %v1420, 4
        %v1423 = vrot.slane %v333, 5
        %v1424 = vsel %vm1375, %v1422, %v1423
        %v1425 = vrot.slane %v1332, 5
        %v1426 = vrot.slane %v1425, 4
        %v1427 = vrot.slane %v294, 5
        %v1428 = vsel %vm1375, %v1426, %v1427
        %v1429 = vrot.slane %v1427, 4
        %v1430 = vrot.slane %v334, 5
        %v1431 = vsel %vm1375, %v1429, %v1430
        %v1432 = vrot.slane %v1333, 5
        %v1433 = vrot.slane %v1432, 4
        %v1434 = vrot.slane %v296, 5
        %v1435 = vsel %vm1375, %v1433, %v1434
        %v1436 = vrot.slane %v1434, 4
        %v1437 = vrot.slane %v335, 5
        %v1438 = vsel %vm1375, %v1436, %v1437
        %v1439 = vrot.slane %v1334, 5
        %v1440 = vrot.slane %v1439, 4
        %v1441 = vrot.slane %v298, 5
        %v1442 = vsel %vm1375, %v1440, %v1441
        %v1443 = vrot.slane %v1441, 4
        %v1444 = vrot.slane %v336, 5
        %v1445 = vsel %vm1375, %v1443, %v1444
        %v1446 = vrot.slane %v1335, 5
        %v1447 = vrot.slane %v1446, 4
        %v1448 = vrot.slane %v300, 5
        %v1449 = vsel %vm1375, %v1447, %v1448
        %v1450 = vrot.slane %v1448, 4
        %v1451 = vrot.slane %v337, 5
        %v1452 = vsel %vm1375, %v1450, %v1451
        %v1453 = vrot.slane %v1336, 5
        %v1454 = vrot.slane %v1453, 4
        %v1455 = vrot.slane %v302, 5
        %v1456 = vsel %vm1375, %v1454, %v1455
        %v1457 = vrot.slane %v1455, 4
        %v1458 = vrot.slane %v338, 5
        %v1459 = vsel %vm1375, %v1457, %v1458
        %v1460 = vrot.slane %v1337, 5
        %v1461 = vrot.slane %v1460, 4
        %v1462 = vrot.slane %v304, 5
        %v1463 = vsel %vm1375, %v1461, %v1462
        %v1464 = vrot.slane %v1462, 4
        %v1465 = vrot.slane %v339, 5
        %v1466 = vsel %vm1375, %v1464, %v1465
        %v1467 = vrot.slane %v1338, 5
        %v1468 = vrot.slane %v1467, 4
        %v1469 = vrot.slane %v306, 5
        %v1470 = vsel %vm1375, %v1468, %v1469
        %v1471 = vrot.slane %v1469, 4
        %v1472 = vrot.slane %v340, 5
        %v1473 = vsel %vm1375, %v1471, %v1472
        %v1474 = vrot.slane %v1339, 5
        %v1475 = vrot.slane %v1474, 4
        %v1476 = vrot.slane %v308, 5
        %v1477 = vsel %vm1375, %v1475, %v1476
        %v1478 = vrot.slane %v1476, 4
        %v1479 = vrot.slane %v341, 5
        %v1480 = vsel %vm1375, %v1478, %v1479
        %v1481 = vrot.slane %v1340, 5
        %v1482 = vrot.slane %v1481, 4
        %v1483 = vrot.slane %v310, 5
        %v1484 = vsel %vm1375, %v1482, %v1483
        %v1485 = vrot.slane %v1483, 4
        %v1486 = vrot.slane %v342, 5
        %v1487 = vsel %vm1375, %v1485, %v1486
        %s1488 = scalar_lea.vmem %s1, 128
        %v1489 = vld [vmem:[%s1488] sm:$0xf]
        %v1490 = vld [vmem:[%s1488 + $0x4] sm:$0xf]
        %v1491 = vld [vmem:[%s1488 + $0x8] sm:$0xf]
        %v1492 = vld [vmem:[%s1488 + $0xc] sm:$0xf]
        %v1493 = vld [vmem:[%s1488 + $0x10] sm:$0xf]
        %v1494 = vld [vmem:[%s1488 + $0x14] sm:$0xf]
        %v1495 = vld [vmem:[%s1488 + $0x18] sm:$0xf]
        %v1496 = vld [vmem:[%s1488 + $0x1c] sm:$0xf]
        %v1497 = vld [vmem:[%s1488 + $0x20] sm:$0xf]
        %v1498 = vld [vmem:[%s1488 + $0x24] sm:$0xf]
        %v1499 = vld [vmem:[%s1488 + $0x28] sm:$0xf]
        %v1500 = vld [vmem:[%s1488 + $0x2c] sm:$0xf]
        %v1501 = vld [vmem:[%s1488 + $0x30] sm:$0xf]
        %v1502 = vld [vmem:[%s1488 + $0x34] sm:$0xf]
        %v1503 = vld [vmem:[%s1488 + $0x38] sm:$0xf]
        %v1504 = vld [vmem:[%s1488 + $0x3c] sm:$0xf]
        %v1505 = vunpack.c.l.b16 %v1379
        %v1506 = vunpack.c.l.b16 %v1382
        %v1507 = vunpack.c.l.b16 %v1386
        %v1508 = vunpack.c.l.b16 %v1389
        %v1509 = vunpack.c.l.b16 %v1393
        %v1510 = vunpack.c.l.b16 %v1396
        %v1511 = vunpack.c.l.b16 %v1400
        %v1512 = vunpack.c.l.b16 %v1403
        %v1513 = vunpack.c.l.b16 %v1407
        %v1514 = vunpack.c.l.b16 %v1410
        %v1515 = vunpack.c.l.b16 %v1414
        %v1516 = vunpack.c.l.b16 %v1417
        %v1517 = vunpack.c.l.b16 %v1421
        %v1518 = vunpack.c.l.b16 %v1424
        %v1519 = vunpack.c.l.b16 %v1428
        %v1520 = vunpack.c.l.b16 %v1431
        %v1521 = vunpack.c.l.b16 %v1435
        %v1522 = vunpack.c.l.b16 %v1438
        %v1523 = vunpack.c.l.b16 %v1442
        %v1524 = vunpack.c.l.b16 %v1445
        %v1525 = vunpack.c.l.b16 %v1449
        %v1526 = vunpack.c.l.b16 %v1452
        %v1527 = vunpack.c.l.b16 %v1456
        %v1528 = vunpack.c.l.b16 %v1459
        %v1529 = vunpack.c.l.b16 %v1463
        %v1530 = vunpack.c.l.b16 %v1466
        %v1531 = vunpack.c.l.b16 %v1470
        %v1532 = vunpack.c.l.b16 %v1473
        %v1533 = vunpack.c.l.b16 %v1477
        %v1534 = vunpack.c.l.b16 %v1480
        %v1535 = vunpack.c.l.b16 %v1484
        %v1536 = vunpack.c.l.b16 %v1487
        %v1537 = vpack.c.b16 %v1506, %v1505
        %v1538 = vpack.c.b16 %v1508, %v1507
        %v1539 = vpack.c.b16 %v1510, %v1509
        %v1540 = vpack.c.b16 %v1512, %v1511
        %v1541 = vpack.c.b16 %v1514, %v1513
        %v1542 = vpack.c.b16 %v1516, %v1515
        %v1543 = vpack.c.b16 %v1518, %v1517
        %v1544 = vpack.c.b16 %v1520, %v1519
        %v1545 = vpack.c.b16 %v1522, %v1521
        %v1546 = vpack.c.b16 %v1524, %v1523
        %v1547 = vpack.c.b16 %v1526, %v1525
        %v1548 = vpack.c.b16 %v1528, %v1527
        %v1549 = vpack.c.b16 %v1530, %v1529
        %v1550 = vpack.c.b16 %v1532, %v1531
        %v1551 = vpack.c.b16 %v1534, %v1533
        %v1552 = vpack.c.b16 %v1536, %v1535
        %v1585 = vunpack.c.l.b16 %v1489
        %v1586 = vunpack.c.l.b16 %v1490
        %v1587 = vunpack.c.l.b16 %v1491
        %v1588 = vunpack.c.l.b16 %v1492
        %v1589 = vunpack.c.l.b16 %v1493
        %v1590 = vunpack.c.l.b16 %v1494
        %v1591 = vunpack.c.l.b16 %v1495
        %v1592 = vunpack.c.l.b16 %v1496
        %v1593 = vunpack.c.l.b16 %v1497
        %v1594 = vunpack.c.l.b16 %v1498
        %v1595 = vunpack.c.l.b16 %v1499
        %v1596 = vunpack.c.l.b16 %v1500
        %v1597 = vunpack.c.l.b16 %v1501
        %v1598 = vunpack.c.l.b16 %v1502
        %v1599 = vunpack.c.l.b16 %v1503
        %v1600 = vunpack.c.l.b16 %v1504
        %v1601 = vpack.c.b16 %v1586, %v1585
        %v1602 = vpack.c.b16 %v1588, %v1587
        %v1603 = vpack.c.b16 %v1590, %v1589
        %v1604 = vpack.c.b16 %v1592, %v1591
        %v1605 = vpack.c.b16 %v1594, %v1593
        %v1606 = vpack.c.b16 %v1596, %v1595
        %v1607 = vpack.c.b16 %v1598, %v1597
        %v1608 = vpack.c.b16 %v1600, %v1599
        %1617 = vmatprep.subr.bf16.mxu0 0
        %1618 = vmatpush1.bf16.msra.mxu0 %v1601
        %1619 = vmatprep.subr.bf16.mxu0 0
        %1620 = vmatpush1.bf16.msra.mxu0 %v1602
        %1621 = vmatprep.subr.bf16.mxu0 0
        %1622 = vmatpush1.bf16.msra.mxu0 %v1603
        %1623 = vmatprep.subr.bf16.mxu0 0
        %1624 = vmatpush1.bf16.msra.mxu0 %v1604
        %1625 = vmatprep.subr.bf16.mxu0 0
        %1626 = vmatpush1.bf16.msra.mxu0 %v1605
        %1627 = vmatprep.subr.bf16.mxu0 0
        %1628 = vmatpush1.bf16.msra.mxu0 %v1606
        %1629 = vmatprep.subr.bf16.mxu0 0
        %1630 = vmatpush1.bf16.msra.mxu0 %v1607
        %1631 = vmatprep.subr.bf16.mxu0 0
        %1632 = vmatpush1.bf16.msra.mxu0 %v1608
        %1633 = vmatprep.subr.bf16.mxu0 0
        %1634 = vmatpush1.bf16.msra.mxu0 0
        %1635 = vmatprep.subr.bf16.mxu0 0
        %1636 = vmatpush1.bf16.msra.mxu0 0
        %1637 = vmatprep.subr.bf16.mxu0 0
        %1638 = vmatpush1.bf16.msra.mxu0 0
        %1639 = vmatprep.subr.bf16.mxu0 0
        %1640 = vmatpush1.bf16.msra.mxu0 0
        %1641 = vmatprep.subr.bf16.mxu0 0
        %1642 = vmatpush1.bf16.msra.mxu0 0
        %1643 = vmatprep.subr.bf16.mxu0 0
        %1644 = vmatpush1.bf16.msra.mxu0 0
        %1645 = vmatprep.subr.bf16.mxu0 0
        %1646 = vmatpush1.bf16.msra.mxu0 0
        %1647 = vmatprep.subr.bf16.mxu0 0
        %1648 = vmatpush1.bf16.msra.mxu0 0
        %1649 = vmatprep.mubr.bf16.mxu0 0
        %1650 = vmatmul.mubr.bf16.gmra.mrb[0].mxu0 %v1537
        %v1651 = vpop.f32.mrb[0].mxu0
        %v1652 = vadd.f32 0.0, %v1651
        %v1653 = vpop.f32.mrb[0].mxu0
        %v1654 = vpop.f32.mrb[0].mxu0
        %v1655 = vadd.f32 0.0, %v1654
        %v1656 = vpop.f32.mrb[0].mxu0
        %1657 = vmatprep.mubr.bf16.mxu0 0
        %1658 = vmatmul.mubr.bf16.gmra.mrb[0].mxu0 %v1538
        %v1659 = vpop.f32.mrb[0].mxu0
        %v1660 = vadd.f32 0.0, %v1659
        %v1661 = vpop.f32.mrb[0].mxu0
        %v1662 = vpop.f32.mrb[0].mxu0
        %v1663 = vadd.f32 0.0, %v1662
        %v1664 = vpop.f32.mrb[0].mxu0
        %1665 = vmatprep.mubr.bf16.mxu0 0
        %1666 = vmatmul.mubr.bf16.gmra.mrb[0].mxu0 %v1539
        %v1667 = vpop.f32.mrb[0].mxu0
        %v1668 = vadd.f32 0.0, %v1667
        %v1669 = vpop.f32.mrb[0].mxu0
        %v1670 = vpop.f32.mrb[0].mxu0
        %v1671 = vadd.f32 0.0, %v1670
        %v1672 = vpop.f32.mrb[0].mxu0
        %1673 = vmatprep.mubr.bf16.mxu0 0
        %1674 = vmatmul.mubr.bf16.gmra.mrb[0].mxu0 %v1540
        %v1675 = vpop.f32.mrb[0].mxu0
        %v1676 = vadd.f32 0.0, %v1675
        %v1677 = vpop.f32.mrb[0].mxu0
        %v1678 = vpop.f32.mrb[0].mxu0
        %v1679 = vadd.f32 0.0, %v1678
        %v1680 = vpop.f32.mrb[0].mxu0
        %1681 = vmatprep.mubr.bf16.mxu0 0
        %1682 = vmatmul.mubr.bf16.gmra.mrb[0].mxu0 %v1541
        %v1683 = vpop.f32.mrb[0].mxu0
        %v1684 = vadd.f32 0.0, %v1683
        %v1685 = vpop.f32.mrb[0].mxu0
        %v1686 = vpop.f32.mrb[0].mxu0
        %v1687 = vadd.f32 0.0, %v1686
        %v1688 = vpop.f32.mrb[0].mxu0
        %1689 = vmatprep.mubr.bf16.mxu0 0
        %1690 = vmatmul.mubr.bf16.gmra.mrb[0].mxu0 %v1542
        %v1691 = vpop.f32.mrb[0].mxu0
        %v1692 = vadd.f32 0.0, %v1691
        %v1693 = vpop.f32.mrb[0].mxu0
        %v1694 = vpop.f32.mrb[0].mxu0
        %v1695 = vadd.f32 0.0, %v1694
        %v1696 = vpop.f32.mrb[0].mxu0
        %1697 = vmatprep.mubr.bf16.mxu0 0
        %1698 = vmatmul.mubr.bf16.gmra.mrb[0].mxu0 %v1543
        %v1699 = vpop.f32.mrb[0].mxu0
        %v1700 = vadd.f32 0.0, %v1699
        %v1701 = vpop.f32.mrb[0].mxu0
        %v1702 = vpop.f32.mrb[0].mxu0
        %v1703 = vadd.f32 0.0, %v1702
        %v1704 = vpop.f32.mrb[0].mxu0
        %1705 = vmatprep.mubr.bf16.mxu0 0
        %1706 = vmatmul.mubr.bf16.gmra.mrb[0].mxu0 %v1544
        %v1707 = vpop.f32.mrb[0].mxu0
        %v1708 = vadd.f32 0.0, %v1707
        %v1709 = vpop.f32.mrb[0].mxu0
        %v1710 = vpop.f32.mrb[0].mxu0
        %v1711 = vadd.f32 0.0, %v1710
        %v1712 = vpop.f32.mrb[0].mxu0
        %1713 = vmatprep.mubr.bf16.mxu0 0
        %1714 = vmatmul.mubr.bf16.gmra.mrb[0].mxu0 %v1545
        %v1715 = vpop.f32.mrb[0].mxu0
        %v1716 = vadd.f32 0.0, %v1715
        %v1717 = vpop.f32.mrb[0].mxu0
        %v1718 = vpop.f32.mrb[0].mxu0
        %v1719 = vadd.f32 0.0, %v1718
        %v1720 = vpop.f32.mrb[0].mxu0
        %1721 = vmatprep.mubr.bf16.mxu0 0
        %1722 = vmatmul.mubr.bf16.gmra.mrb[0].mxu0 %v1546
        %v1723 = vpop.f32.mrb[0].mxu0
        %v1724 = vadd.f32 0.0, %v1723
        %v1725 = vpop.f32.mrb[0].mxu0
        %v1726 = vpop.f32.mrb[0].mxu0
        %v1727 = vadd.f32 0.0, %v1726
        %v1728 = vpop.f32.mrb[0].mxu0
        %1729 = vmatprep.mubr.bf16.mxu0 0
        %1730 = vmatmul.mubr.bf16.gmra.mrb[0].mxu0 %v1547
        %v1731 = vpop.f32.mrb[0].mxu0
        %v1732 = vadd.f32 0.0, %v1731
        %v1733 = vpop.f32.mrb[0].mxu0
        %v1734 = vpop.f32.mrb[0].mxu0
        %v1735 = vadd.f32 0.0, %v1734
        %v1736 = vpop.f32.mrb[0].mxu0
        %1737 = vmatprep.mubr.bf16.mxu0 0
        %1738 = vmatmul.mubr.bf16.gmra.mrb[0].mxu0 %v1548
        %v1739 = vpop.f32.mrb[0].mxu0
        %v1740 = vadd.f32 0.0, %v1739
        %v1741 = vpop.f32.mrb[0].mxu0
        %v1742 = vpop.f32.mrb[0].mxu0
        %v1743 = vadd.f32 0.0, %v1742
        %v1744 = vpop.f32.mrb[0].mxu0
        %1745 = vmatprep.mubr.bf16.mxu0 0
        %1746 = vmatmul.mubr.bf16.gmra.mrb[0].mxu0 %v1549
        %v1747 = vpop.f32.mrb[0].mxu0
        %v1748 = vadd.f32 0.0, %v1747
        %v1749 = vpop.f32.mrb[0].mxu0
        %v1750 = vpop.f32.mrb[0].mxu0
        %v1751 = vadd.f32 0.0, %v1750
        %v1752 = vpop.f32.mrb[0].mxu0
        %1753 = vmatprep.mubr.bf16.mxu0 0
        %1754 = vmatmul.mubr.bf16.gmra.mrb[0].mxu0 %v1550
        %v1755 = vpop.f32.mrb[0].mxu0
        %v1756 = vadd.f32 0.0, %v1755
        %v1757 = vpop.f32.mrb[0].mxu0
        %v1758 = vpop.f32.mrb[0].mxu0
        %v1759 = vadd.f32 0.0, %v1758
        %v1760 = vpop.f32.mrb[0].mxu0
        %1761 = vmatprep.mubr.bf16.mxu0 0
        %1762 = vmatmul.mubr.bf16.gmra.mrb[0].mxu0 %v1551
        %v1763 = vpop.f32.mrb[0].mxu0
        %v1764 = vadd.f32 0.0, %v1763
        %v1765 = vpop.f32.mrb[0].mxu0
        %v1766 = vpop.f32.mrb[0].mxu0
        %v1767 = vadd.f32 0.0, %v1766
        %v1768 = vpop.f32.mrb[0].mxu0
        %1769 = vmatprep.mubr.bf16.mxu0 0
        %1770 = vmatmul.mubr.bf16.gmra.mrb[0].mxu0 %v1552
        %v1771 = vpop.f32.mrb[0].mxu0
        %v1772 = vadd.f32 0.0, %v1771
        %v1773 = vpop.f32.mrb[0].mxu0
        %v1774 = vpop.f32.mrb[0].mxu0
        %v1775 = vadd.f32 0.0, %v1774
        %v1776 = vpop.f32.mrb[0].mxu0
        %1777 = vdwg.mxu0
        %v1778 = vadd.f32 %v1199, %v1652
        %v1779 = vadd.f32 %v1202, %v1655
        %v1780 = vadd.f32 %v1207, %v1660
        %v1781 = vadd.f32 %v1210, %v1663
        %v1782 = vadd.f32 %v1215, %v1668
        %v1783 = vadd.f32 %v1218, %v1671
        %v1784 = vadd.f32 %v1223, %v1676
        %v1785 = vadd.f32 %v1226, %v1679
        %v1786 = vadd.f32 %v1231, %v1684
        %v1787 = vadd.f32 %v1234, %v1687
        %v1788 = vadd.f32 %v1239, %v1692
        %v1789 = vadd.f32 %v1242, %v1695
        %v1790 = vadd.f32 %v1247, %v1700
        %v1791 = vadd.f32 %v1250, %v1703
        %v1792 = vadd.f32 %v1255, %v1708
        %v1793 = vadd.f32 %v1258, %v1711
        %v1794 = vadd.f32 %v1263, %v1716
        %v1795 = vadd.f32 %v1266, %v1719
        %v1796 = vadd.f32 %v1271, %v1724
        %v1797 = vadd.f32 %v1274, %v1727
        %v1798 = vadd.f32 %v1279, %v1732
        %v1799 = vadd.f32 %v1282, %v1735
        %v1800 = vadd.f32 %v1287, %v1740
        %v1801 = vadd.f32 %v1290, %v1743
        %v1802 = vadd.f32 %v1295, %v1748
        %v1803 = vadd.f32 %v1298, %v1751
        %v1804 = vadd.f32 %v1303, %v1756
        %v1805 = vadd.f32 %v1306, %v1759
        %v1806 = vadd.f32 %v1311, %v1764
        %v1807 = vadd.f32 %v1314, %v1767
        %v1808 = vadd.f32 %v1319, %v1772
        %v1809 = vadd.f32 %v1322, %v1775
        %s1810 = scalar_lea.vmem %s277, 12
        %v1811 = vld [vmem:[%s1810] sm:$0xf]
        %v1812 = vld [vmem:[%s1810 + $0x4] sm:$0xf]
        %v1813 = vld [vmem:[%s1810 + $0xc] sm:$0xf]
        %v1814 = vld [vmem:[%s1810 + $0x10] sm:$0xf]
        %v1815 = vld [vmem:[%s1810 + $0x18] sm:$0xf]
        %v1816 = vld [vmem:[%s1810 + $0x1c] sm:$0xf]
        %v1817 = vld [vmem:[%s1810 + $0x24] sm:$0xf]
        %v1818 = vld [vmem:[%s1810 + $0x28] sm:$0xf]
        %v1819 = vld [vmem:[%s1810 + $0x30] sm:$0xf]
        %v1820 = vld [vmem:[%s1810 + $0x34] sm:$0xf]
        %v1821 = vld [vmem:[%s1810 + $0x3c] sm:$0xf]
        %v1822 = vld [vmem:[%s1810 + $0x40] sm:$0xf]
        %v1823 = vld [vmem:[%s1810 + $0x48] sm:$0xf]
        %v1824 = vld [vmem:[%s1810 + $0x4c] sm:$0xf]
        %v1825 = vld [vmem:[%s1810 + $0x54] sm:$0xf]
        %v1826 = vld [vmem:[%s1810 + $0x58] sm:$0xf]
        %v1827 = vld [vmem:[%s1810 + $0x60] sm:$0xf]
        %v1828 = vld [vmem:[%s1810 + $0x64] sm:$0xf]
        %v1829 = vld [vmem:[%s1810 + $0x6c] sm:$0xf]
        %v1830 = vld [vmem:[%s1810 + $0x70] sm:$0xf]
        %v1831 = vld [vmem:[%s1810 + $0x78] sm:$0xf]
        %v1832 = vld [vmem:[%s1810 + $0x7c] sm:$0xf]
        %v1833 = vld [vmem:[%s1810 + $0x84] sm:$0xf]
        %v1834 = vld [vmem:[%s1810 + $0x88] sm:$0xf]
        %v1835 = vld [vmem:[%s1810 + $0x90] sm:$0xf]
        %v1836 = vld [vmem:[%s1810 + $0x94] sm:$0xf]
        %v1837 = vld [vmem:[%s1810 + $0x9c] sm:$0xf]
        %v1838 = vld [vmem:[%s1810 + $0xa0] sm:$0xf]
        %v1839 = vld [vmem:[%s1810 + $0xa8] sm:$0xf]
        %v1840 = vld [vmem:[%s1810 + $0xac] sm:$0xf]
        %v1841 = vld [vmem:[%s1810 + $0xb4] sm:$0xf]
        %v1842 = vld [vmem:[%s1810 + $0xb8] sm:$0xf]
        %s1843 = scalar_lea.vmem %s1, 192
        %v1844 = vld [vmem:[%s1843] sm:$0xf]
        %v1845 = vld [vmem:[%s1843 + $0x4] sm:$0xf]
        %v1846 = vld [vmem:[%s1843 + $0x8] sm:$0xf]
        %v1847 = vld [vmem:[%s1843 + $0xc] sm:$0xf]
        %v1848 = vld [vmem:[%s1843 + $0x10] sm:$0xf]
        %v1849 = vld [vmem:[%s1843 + $0x14] sm:$0xf]
        %v1850 = vld [vmem:[%s1843 + $0x18] sm:$0xf]
        %v1851 = vld [vmem:[%s1843 + $0x1c] sm:$0xf]
        %v1852 = vld [vmem:[%s1843 + $0x20] sm:$0xf]
        %v1853 = vld [vmem:[%s1843 + $0x24] sm:$0xf]
        %v1854 = vld [vmem:[%s1843 + $0x28] sm:$0xf]
        %v1855 = vld [vmem:[%s1843 + $0x2c] sm:$0xf]
        %v1856 = vld [vmem:[%s1843 + $0x30] sm:$0xf]
        %v1857 = vld [vmem:[%s1843 + $0x34] sm:$0xf]
        %v1858 = vld [vmem:[%s1843 + $0x38] sm:$0xf]
        %v1859 = vld [vmem:[%s1843 + $0x3c] sm:$0xf]
        %v1892 = vunpack.c.l.b16 %v1811
        %v1893 = vunpack.c.l.b16 %v1812
        %v1894 = vunpack.c.l.b16 %v1813
        %v1895 = vunpack.c.l.b16 %v1814
        %v1896 = vunpack.c.l.b16 %v1815
        %v1897 = vunpack.c.l.b16 %v1816
        %v1898 = vunpack.c.l.b16 %v1817
        %v1899 = vunpack.c.l.b16 %v1818
        %v1900 = vunpack.c.l.b16 %v1819
        %v1901 = vunpack.c.l.b16 %v1820
        %v1902 = vunpack.c.l.b16 %v1821
        %v1903 = vunpack.c.l.b16 %v1822
        %v1904 = vunpack.c.l.b16 %v1823
        %v1905 = vunpack.c.l.b16 %v1824
        %v1906 = vunpack.c.l.b16 %v1825
        %v1907 = vunpack.c.l.b16 %v1826
        %v1908 = vunpack.c.l.b16 %v1827
        %v1909 = vunpack.c.l.b16 %v1828
        %v1910 = vunpack.c.l.b16 %v1829
        %v1911 = vunpack.c.l.b16 %v1830
        %v1912 = vunpack.c.l.b16 %v1831
        %v1913 = vunpack.c.l.b16 %v1832
        %v1914 = vunpack.c.l.b16 %v1833
        %v1915 = vunpack.c.l.b16 %v1834
        %v1916 = vunpack.c.l.b16 %v1835
        %v1917 = vunpack.c.l.b16 %v1836
        %v1918 = vunpack.c.l.b16 %v1837
        %v1919 = vunpack.c.l.b16 %v1838
        %v1920 = vunpack.c.l.b16 %v1839
        %v1921 = vunpack.c.l.b16 %v1840
        %v1922 = vunpack.c.l.b16 %v1841
        %v1923 = vunpack.c.l.b16 %v1842
        %v1924 = vpack.c.b16 %v1893, %v1892
        %v1925 = vpack.c.b16 %v1895, %v1894
        %v1926 = vpack.c.b16 %v1897, %v1896
        %v1927 = vpack.c.b16 %v1899, %v1898
        %v1928 = vpack.c.b16 %v1901, %v1900
        %v1929 = vpack.c.b16 %v1903, %v1902
        %v1930 = vpack.c.b16 %v1905, %v1904
        %v1931 = vpack.c.b16 %v1907, %v1906
        %v1932 = vpack.c.b16 %v1909, %v1908
        %v1933 = vpack.c.b16 %v1911, %v1910
        %v1934 = vpack.c.b16 %v1913, %v1912
        %v1935 = vpack.c.b16 %v1915, %v1914
        %v1936 = vpack.c.b16 %v1917, %v1916
        %v1937 = vpack.c.b16 %v1919, %v1918
        %v1938 = vpack.c.b16 %v1921, %v1920
        %v1939 = vpack.c.b16 %v1923, %v1922
        %v1972 = vunpack.c.l.b16 %v1844
        %v1973 = vunpack.c.l.b16 %v1845
        %v1974 = vunpack.c.l.b16 %v1846
        %v1975 = vunpack.c.l.b16 %v1847
        %v1976 = vunpack.c.l.b16 %v1848
        %v1977 = vunpack.c.l.b16 %v1849
        %v1978 = vunpack.c.l.b16 %v1850
        %v1979 = vunpack.c.l.b16 %v1851
        %v1980 = vunpack.c.l.b16 %v1852
        %v1981 = vunpack.c.l.b16 %v1853
        %v1982 = vunpack.c.l.b16 %v1854
        %v1983 = vunpack.c.l.b16 %v1855
        %v1984 = vunpack.c.l.b16 %v1856
        %v1985 = vunpack.c.l.b16 %v1857
        %v1986 = vunpack.c.l.b16 %v1858
        %v1987 = vunpack.c.l.b16 %v1859
        %v1988 = vpack.c.b16 %v1973, %v1972
        %v1989 = vpack.c.b16 %v1975, %v1974
        %v1990 = vpack.c.b16 %v1977, %v1976
        %v1991 = vpack.c.b16 %v1979, %v1978
        %v1992 = vpack.c.b16 %v1981, %v1980
        %v1993 = vpack.c.b16 %v1983, %v1982
        %v1994 = vpack.c.b16 %v1985, %v1984
        %v1995 = vpack.c.b16 %v1987, %v1986
        %2004 = vmatprep.subr.bf16.mxu0 0
        %2005 = vmatpush1.bf16.msra.mxu0 %v1988
        %2006 = vmatprep.subr.bf16.mxu0 0
        %2007 = vmatpush1.bf16.msra.mxu0 %v1989
        %2008 = vmatprep.subr.bf16.mxu0 0
        %2009 = vmatpush1.bf16.msra.mxu0 %v1990
        %2010 = vmatprep.subr.bf16.mxu0 0
        %2011 = vmatpush1.bf16.msra.mxu0 %v1991
        %2012 = vmatprep.subr.bf16.mxu0 0
        %2013 = vmatpush1.bf16.msra.mxu0 %v1992
        %2014 = vmatprep.subr.bf16.mxu0 0
        %2015 = vmatpush1.bf16.msra.mxu0 %v1993
        %2016 = vmatprep.subr.bf16.mxu0 0
        %2017 = vmatpush1.bf16.msra.mxu0 %v1994
        %2018 = vmatprep.subr.bf16.mxu0 0
        %2019 = vmatpush1.bf16.msra.mxu0 %v1995
        %2020 = vmatprep.subr.bf16.mxu0 0
        %2021 = vmatpush1.bf16.msra.mxu0 0
        %2022 = vmatprep.subr.bf16.mxu0 0
        %2023 = vmatpush1.bf16.msra.mxu0 0
        %2024 = vmatprep.subr.bf16.mxu0 0
        %2025 = vmatpush1.bf16.msra.mxu0 0
        %2026 = vmatprep.subr.bf16.mxu0 0
        %2027 = vmatpush1.bf16.msra.mxu0 0
        %2028 = vmatprep.subr.bf16.mxu0 0
        %2029 = vmatpush1.bf16.msra.mxu0 0
        %2030 = vmatprep.subr.bf16.mxu0 0
        %2031 = vmatpush1.bf16.msra.mxu0 0
        %2032 = vmatprep.subr.bf16.mxu0 0
        %2033 = vmatpush1.bf16.msra.mxu0 0
        %2034 = vmatprep.subr.bf16.mxu0 0
        %2035 = vmatpush1.bf16.msra.mxu0 0
        %2036 = vmatprep.mubr.bf16.mxu0 0
        %2037 = vmatmul.mubr.bf16.gmra.mrb[0].mxu0 %v1924
        %v2038 = vpop.f32.mrb[0].mxu0
        %v2039 = vadd.f32 0.0, %v2038
        %v2040 = vpop.f32.mrb[0].mxu0
        %v2041 = vpop.f32.mrb[0].mxu0
        %v2042 = vadd.f32 0.0, %v2041
        %v2043 = vpop.f32.mrb[0].mxu0
        %2044 = vmatprep.mubr.bf16.mxu0 0
        %2045 = vmatmul.mubr.bf16.gmra.mrb[0].mxu0 %v1925
        %v2046 = vpop.f32.mrb[0].mxu0
        %v2047 = vadd.f32 0.0, %v2046
        %v2048 = vpop.f32.mrb[0].mxu0
        %v2049 = vpop.f32.mrb[0].mxu0
        %v2050 = vadd.f32 0.0, %v2049
        %v2051 = vpop.f32.mrb[0].mxu0
        %2052 = vmatprep.mubr.bf16.mxu0 0
        %2053 = vmatmul.mubr.bf16.gmra.mrb[0].mxu0 %v1926
        %v2054 = vpop.f32.mrb[0].mxu0
        %v2055 = vadd.f32 0.0, %v2054
        %v2056 = vpop.f32.mrb[0].mxu0
        %v2057 = vpop.f32.mrb[0].mxu0
        %v2058 = vadd.f32 0.0, %v2057
        %v2059 = vpop.f32.mrb[0].mxu0
        %2060 = vmatprep.mubr.bf16.mxu0 0
        %2061 = vmatmul.mubr.bf16.gmra.mrb[0].mxu0 %v1927
        %v2062 = vpop.f32.mrb[0].mxu0
        %v2063 = vadd.f32 0.0, %v2062
        %v2064 = vpop.f32.mrb[0].mxu0
        %v2065 = vpop.f32.mrb[0].mxu0
        %v2066 = vadd.f32 0.0, %v2065
        %v2067 = vpop.f32.mrb[0].mxu0
        %2068 = vmatprep.mubr.bf16.mxu0 0
        %2069 = vmatmul.mubr.bf16.gmra.mrb[0].mxu0 %v1928
        %v2070 = vpop.f32.mrb[0].mxu0
        %v2071 = vadd.f32 0.0, %v2070
        %v2072 = vpop.f32.mrb[0].mxu0
        %v2073 = vpop.f32.mrb[0].mxu0
        %v2074 = vadd.f32 0.0, %v2073
        %v2075 = vpop.f32.mrb[0].mxu0
        %2076 = vmatprep.mubr.bf16.mxu0 0
        %2077 = vmatmul.mubr.bf16.gmra.mrb[0].mxu0 %v1929
        %v2078 = vpop.f32.mrb[0].mxu0
        %v2079 = vadd.f32 0.0, %v2078
        %v2080 = vpop.f32.mrb[0].mxu0
        %v2081 = vpop.f32.mrb[0].mxu0
        %v2082 = vadd.f32 0.0, %v2081
        %v2083 = vpop.f32.mrb[0].mxu0
        %2084 = vmatprep.mubr.bf16.mxu0 0
        %2085 = vmatmul.mubr.bf16.gmra.mrb[0].mxu0 %v1930
        %v2086 = vpop.f32.mrb[0].mxu0
        %v2087 = vadd.f32 0.0, %v2086
        %v2088 = vpop.f32.mrb[0].mxu0
        %v2089 = vpop.f32.mrb[0].mxu0
        %v2090 = vadd.f32 0.0, %v2089
        %v2091 = vpop.f32.mrb[0].mxu0
        %2092 = vmatprep.mubr.bf16.mxu0 0
        %2093 = vmatmul.mubr.bf16.gmra.mrb[0].mxu0 %v1931
        %v2094 = vpop.f32.mrb[0].mxu0
        %v2095 = vadd.f32 0.0, %v2094
        %v2096 = vpop.f32.mrb[0].mxu0
        %v2097 = vpop.f32.mrb[0].mxu0
        %v2098 = vadd.f32 0.0, %v2097
        %v2099 = vpop.f32.mrb[0].mxu0
        %2100 = vmatprep.mubr.bf16.mxu0 0
        %2101 = vmatmul.mubr.bf16.gmra.mrb[0].mxu0 %v1932
        %v2102 = vpop.f32.mrb[0].mxu0
        %v2103 = vadd.f32 0.0, %v2102
        %v2104 = vpop.f32.mrb[0].mxu0
        %v2105 = vpop.f32.mrb[0].mxu0
        %v2106 = vadd.f32 0.0, %v2105
        %v2107 = vpop.f32.mrb[0].mxu0
        %2108 = vmatprep.mubr.bf16.mxu0 0
        %2109 = vmatmul.mubr.bf16.gmra.mrb[0].mxu0 %v1933
        %v2110 = vpop.f32.mrb[0].mxu0
        %v2111 = vadd.f32 0.0, %v2110
        %v2112 = vpop.f32.mrb[0].mxu0
        %v2113 = vpop.f32.mrb[0].mxu0
        %v2114 = vadd.f32 0.0, %v2113
        %v2115 = vpop.f32.mrb[0].mxu0
        %2116 = vmatprep.mubr.bf16.mxu0 0
        %2117 = vmatmul.mubr.bf16.gmra.mrb[0].mxu0 %v1934
        %v2118 = vpop.f32.mrb[0].mxu0
        %v2119 = vadd.f32 0.0, %v2118
        %v2120 = vpop.f32.mrb[0].mxu0
        %v2121 = vpop.f32.mrb[0].mxu0
        %v2122 = vadd.f32 0.0, %v2121
        %v2123 = vpop.f32.mrb[0].mxu0
        %2124 = vmatprep.mubr.bf16.mxu0 0
        %2125 = vmatmul.mubr.bf16.gmra.mrb[0].mxu0 %v1935
        %v2126 = vpop.f32.mrb[0].mxu0
        %v2127 = vadd.f32 0.0, %v2126
        %v2128 = vpop.f32.mrb[0].mxu0
        %v2129 = vpop.f32.mrb[0].mxu0
        %v2130 = vadd.f32 0.0, %v2129
        %v2131 = vpop.f32.mrb[0].mxu0
        %2132 = vmatprep.mubr.bf16.mxu0 0
        %2133 = vmatmul.mubr.bf16.gmra.mrb[0].mxu0 %v1936
        %v2134 = vpop.f32.mrb[0].mxu0
        %v2135 = vadd.f32 0.0, %v2134
        %v2136 = vpop.f32.mrb[0].mxu0
        %v2137 = vpop.f32.mrb[0].mxu0
        %v2138 = vadd.f32 0.0, %v2137
        %v2139 = vpop.f32.mrb[0].mxu0
        %2140 = vmatprep.mubr.bf16.mxu0 0
        %2141 = vmatmul.mubr.bf16.gmra.mrb[0].mxu0 %v1937
        %v2142 = vpop.f32.mrb[0].mxu0
        %v2143 = vadd.f32 0.0, %v2142
        %v2144 = vpop.f32.mrb[0].mxu0
        %v2145 = vpop.f32.mrb[0].mxu0
        %v2146 = vadd.f32 0.0, %v2145
        %v2147 = vpop.f32.mrb[0].mxu0
        %2148 = vmatprep.mubr.bf16.mxu0 0
        %2149 = vmatmul.mubr.bf16.gmra.mrb[0].mxu0 %v1938
        %v2150 = vpop.f32.mrb[0].mxu0
        %v2151 = vadd.f32 0.0, %v2150
        %v2152 = vpop.f32.mrb[0].mxu0
        %v2153 = vpop.f32.mrb[0].mxu0
        %v2154 = vadd.f32 0.0, %v2153
        %v2155 = vpop.f32.mrb[0].mxu0
        %2156 = vmatprep.mubr.bf16.mxu0 0
        %2157 = vmatmul.mubr.bf16.gmra.mrb[0].mxu0 %v1939
        %v2158 = vpop.f32.mrb[0].mxu0
        %v2159 = vadd.f32 0.0, %v2158
        %v2160 = vpop.f32.mrb[0].mxu0
        %v2161 = vpop.f32.mrb[0].mxu0
        %v2162 = vadd.f32 0.0, %v2161
        %v2163 = vpop.f32.mrb[0].mxu0
        %2164 = vdwg.mxu0
        %v2165 = vadd.f32 %v1778, %v2039
        %v2166 = vadd.f32 %v1779, %v2042
        %v2167 = vadd.f32 %v1780, %v2047
        %v2168 = vadd.f32 %v1781, %v2050
        %v2169 = vadd.f32 %v1782, %v2055
        %v2170 = vadd.f32 %v1783, %v2058
        %v2171 = vadd.f32 %v1784, %v2063
        %v2172 = vadd.f32 %v1785, %v2066
        %v2173 = vadd.f32 %v1786, %v2071
        %v2174 = vadd.f32 %v1787, %v2074
        %v2175 = vadd.f32 %v1788, %v2079
        %v2176 = vadd.f32 %v1789, %v2082
        %v2177 = vadd.f32 %v1790, %v2087
        %v2178 = vadd.f32 %v1791, %v2090
        %v2179 = vadd.f32 %v1792, %v2095
        %v2180 = vadd.f32 %v1793, %v2098
        %v2181 = vadd.f32 %v1794, %v2103
        %v2182 = vadd.f32 %v1795, %v2106
        %v2183 = vadd.f32 %v1796, %v2111
        %v2184 = vadd.f32 %v1797, %v2114
        %v2185 = vadd.f32 %v1798, %v2119
        %v2186 = vadd.f32 %v1799, %v2122
        %v2187 = vadd.f32 %v1800, %v2127
        %v2188 = vadd.f32 %v1801, %v2130
        %v2189 = vadd.f32 %v1802, %v2135
        %v2190 = vadd.f32 %v1803, %v2138
        %v2191 = vadd.f32 %v1804, %v2143
        %v2192 = vadd.f32 %v1805, %v2146
        %v2193 = vadd.f32 %v1806, %v2151
        %v2194 = vadd.f32 %v1807, %v2154
        %v2195 = vadd.f32 %v1808, %v2159
        %v2196 = vadd.f32 %v1809, %v2162
        %v2197 = vld [vmem:[%s1810] sm:$0xf]
        %v2198 = vld [vmem:[%s1810 + $0x4] sm:$0xf]
        %v2199 = vld [vmem:[%s1810 + $0x8] sm:$0x1]
        %v2200 = vld [vmem:[%s1810 + $0xc] sm:$0xf]
        %v2201 = vld [vmem:[%s1810 + $0x10] sm:$0xf]
        %v2202 = vld [vmem:[%s1810 + $0x14] sm:$0x1]
        %v2203 = vld [vmem:[%s1810 + $0x18] sm:$0xf]
        %v2204 = vld [vmem:[%s1810 + $0x1c] sm:$0xf]
        %v2205 = vld [vmem:[%s1810 + $0x20] sm:$0x1]
        %v2206 = vld [vmem:[%s1810 + $0x24] sm:$0xf]
        %v2207 = vld [vmem:[%s1810 + $0x28] sm:$0xf]
        %v2208 = vld [vmem:[%s1810 + $0x2c] sm:$0x1]
        %v2209 = vld [vmem:[%s1810 + $0x30] sm:$0xf]
        %v2210 = vld [vmem:[%s1810 + $0x34] sm:$0xf]
        %v2211 = vld [vmem:[%s1810 + $0x38] sm:$0x1]
        %v2212 = vld [vmem:[%s1810 + $0x3c] sm:$0xf]
        %v2213 = vld [vmem:[%s1810 + $0x40] sm:$0xf]
        %v2214 = vld [vmem:[%s1810 + $0x44] sm:$0x1]
        %v2215 = vld [vmem:[%s1810 + $0x48] sm:$0xf]
        %v2216 = vld [vmem:[%s1810 + $0x4c] sm:$0xf]
        %v2217 = vld [vmem:[%s1810 + $0x50] sm:$0x1]
        %v2218 = vld [vmem:[%s1810 + $0x54] sm:$0xf]
        %v2219 = vld [vmem:[%s1810 + $0x58] sm:$0xf]
        %v2220 = vld [vmem:[%s1810 + $0x5c] sm:$0x1]
        %v2221 = vld [vmem:[%s1810 + $0x60] sm:$0xf]
        %v2222 = vld [vmem:[%s1810 + $0x64] sm:$0xf]
        %v2223 = vld [vmem:[%s1810 + $0x68] sm:$0x1]
        %v2224 = vld [vmem:[%s1810 + $0x6c] sm:$0xf]
        %v2225 = vld [vmem:[%s1810 + $0x70] sm:$0xf]
        %v2226 = vld [vmem:[%s1810 + $0x74] sm:$0x1]
        %v2227 = vld [vmem:[%s1810 + $0x78] sm:$0xf]
        %v2228 = vld [vmem:[%s1810 + $0x7c] sm:$0xf]
        %v2229 = vld [vmem:[%s1810 + $0x80] sm:$0x1]
        %v2230 = vld [vmem:[%s1810 + $0x84] sm:$0xf]
        %v2231 = vld [vmem:[%s1810 + $0x88] sm:$0xf]
        %v2232 = vld [vmem:[%s1810 + $0x8c] sm:$0x1]
        %v2233 = vld [vmem:[%s1810 + $0x90] sm:$0xf]
        %v2234 = vld [vmem:[%s1810 + $0x94] sm:$0xf]
        %v2235 = vld [vmem:[%s1810 + $0x98] sm:$0x1]
        %v2236 = vld [vmem:[%s1810 + $0x9c] sm:$0xf]
        %v2237 = vld [vmem:[%s1810 + $0xa0] sm:$0xf]
        %v2238 = vld [vmem:[%s1810 + $0xa4] sm:$0x1]
        %v2239 = vld [vmem:[%s1810 + $0xa8] sm:$0xf]
        %v2240 = vld [vmem:[%s1810 + $0xac] sm:$0xf]
        %v2241 = vld [vmem:[%s1810 + $0xb0] sm:$0x1]
        %v2242 = vld [vmem:[%s1810 + $0xb4] sm:$0xf]
        %v2243 = vld [vmem:[%s1810 + $0xb8] sm:$0xf]
        %v2244 = vld [vmem:[%s1810 + $0xbc] sm:$0x1]
        %v2246 = vshrl.u32 %v2197, 16
        %v2248 = vrot.slane %v2246, 4
        %v2249 = vshll.u32 %v2197, 16
        %v2251 = vrot.slane %v2249, 5
        %v2252 = vor.u32 %v2248, %v2251
        %v2253 = vrot.slane %v2252, 4
        %v2255 = vshll.u32 %v2198, 16
        %v2257 = vrot.slane %v2255, 5
        %v2258 = vsel %vm345, %v2253, %v2257
        %v2259 = vshrl.u32 %v2198, 16
        %v2261 = vrot.slane %v2259, 4
        %v2262 = vor.u32 %v2261, %v2257
        %v2263 = vrot.slane %v2262, 4
        %v2265 = vshll.u32 %v2199, 16
        %v2267 = vrot.slane %v2265, 5
        %v2268 = vsel %vm345, %v2263, %v2267
        %v2270 = vshrl.u32 %v2200, 16
        %v2272 = vrot.slane %v2270, 4
        %v2273 = vshll.u32 %v2200, 16
        %v2275 = vrot.slane %v2273, 5
        %v2276 = vor.u32 %v2272, %v2275
        %v2277 = vrot.slane %v2276, 4
        %v2279 = vshll.u32 %v2201, 16
        %v2281 = vrot.slane %v2279, 5
        %v2282 = vsel %vm345, %v2277, %v2281
        %v2283 = vshrl.u32 %v2201, 16
        %v2285 = vrot.slane %v2283, 4
        %v2286 = vor.u32 %v2285, %v2281
        %v2287 = vrot.slane %v2286, 4
        %v2289 = vshll.u32 %v2202, 16
        %v2291 = vrot.slane %v2289, 5
        %v2292 = vsel %vm345, %v2287, %v2291
        %v2294 = vshrl.u32 %v2203, 16
        %v2296 = vrot.slane %v2294, 4
        %v2297 = vshll.u32 %v2203, 16
        %v2299 = vrot.slane %v2297, 5
        %v2300 = vor.u32 %v2296, %v2299
        %v2301 = vrot.slane %v2300, 4
        %v2303 = vshll.u32 %v2204, 16
        %v2305 = vrot.slane %v2303, 5
        %v2306 = vsel %vm345, %v2301, %v2305
        %v2307 = vshrl.u32 %v2204, 16
        %v2309 = vrot.slane %v2307, 4
        %v2310 = vor.u32 %v2309, %v2305
        %v2311 = vrot.slane %v2310, 4
        %v2313 = vshll.u32 %v2205, 16
        %v2315 = vrot.slane %v2313, 5
        %v2316 = vsel %vm345, %v2311, %v2315
        %v2318 = vshrl.u32 %v2206, 16
        %v2320 = vrot.slane %v2318, 4
        %v2321 = vshll.u32 %v2206, 16
        %v2323 = vrot.slane %v2321, 5
        %v2324 = vor.u32 %v2320, %v2323
        %v2325 = vrot.slane %v2324, 4
        %v2327 = vshll.u32 %v2207, 16
        %v2329 = vrot.slane %v2327, 5
        %v2330 = vsel %vm345, %v2325, %v2329
        %v2331 = vshrl.u32 %v2207, 16
        %v2333 = vrot.slane %v2331, 4
        %v2334 = vor.u32 %v2333, %v2329
        %v2335 = vrot.slane %v2334, 4
        %v2337 = vshll.u32 %v2208, 16
        %v2339 = vrot.slane %v2337, 5
        %v2340 = vsel %vm345, %v2335, %v2339
        %v2342 = vshrl.u32 %v2209, 16
        %v2344 = vrot.slane %v2342, 4
        %v2345 = vshll.u32 %v2209, 16
        %v2347 = vrot.slane %v2345, 5
        %v2348 = vor.u32 %v2344, %v2347
        %v2349 = vrot.slane %v2348, 4
        %v2351 = vshll.u32 %v2210, 16
        %v2353 = vrot.slane %v2351, 5
        %v2354 = vsel %vm345, %v2349, %v2353
        %v2355 = vshrl.u32 %v2210, 16
        %v2357 = vrot.slane %v2355, 4
        %v2358 = vor.u32 %v2357, %v2353
        %v2359 = vrot.slane %v2358, 4
        %v2361 = vshll.u32 %v2211, 16
        %v2363 = vrot.slane %v2361, 5
        %v2364 = vsel %vm345, %v2359, %v2363
        %v2366 = vshrl.u32 %v2212, 16
        %v2368 = vrot.slane %v2366, 4
        %v2369 = vshll.u32 %v2212, 16
        %v2371 = vrot.slane %v2369, 5
        %v2372 = vor.u32 %v2368, %v2371
        %v2373 = vrot.slane %v2372, 4
        %v2375 = vshll.u32 %v2213, 16
        %v2377 = vrot.slane %v2375, 5
        %v2378 = vsel %vm345, %v2373, %v2377
        %v2379 = vshrl.u32 %v2213, 16
        %v2381 = vrot.slane %v2379, 4
        %v2382 = vor.u32 %v2381, %v2377
        %v2383 = vrot.slane %v2382, 4
        %v2385 = vshll.u32 %v2214, 16
        %v2387 = vrot.slane %v2385, 5
        %v2388 = vsel %vm345, %v2383, %v2387
        %v2390 = vshrl.u32 %v2215, 16
        %v2392 = vrot.slane %v2390, 4
        %v2393 = vshll.u32 %v2215, 16
        %v2395 = vrot.slane %v2393, 5
        %v2396 = vor.u32 %v2392, %v2395
        %v2397 = vrot.slane %v2396, 4
        %v2399 = vshll.u32 %v2216, 16
        %v2401 = vrot.slane %v2399, 5
        %v2402 = vsel %vm345, %v2397, %v2401
        %v2403 = vshrl.u32 %v2216, 16
        %v2405 = vrot.slane %v2403, 4
        %v2406 = vor.u32 %v2405, %v2401
        %v2407 = vrot.slane %v2406, 4
        %v2409 = vshll.u32 %v2217, 16
        %v2411 = vrot.slane %v2409, 5
        %v2412 = vsel %vm345, %v2407, %v2411
        %v2414 = vshrl.u32 %v2218, 16
        %v2416 = vrot.slane %v2414, 4
        %v2417 = vshll.u32 %v2218, 16
        %v2419 = vrot.slane %v2417, 5
        %v2420 = vor.u32 %v2416, %v2419
        %v2421 = vrot.slane %v2420, 4
        %v2423 = vshll.u32 %v2219, 16
        %v2425 = vrot.slane %v2423, 5
        %v2426 = vsel %vm345, %v2421, %v2425
        %v2427 = vshrl.u32 %v2219, 16
        %v2429 = vrot.slane %v2427, 4
        %v2430 = vor.u32 %v2429, %v2425
        %v2431 = vrot.slane %v2430, 4
        %v2433 = vshll.u32 %v2220, 16
        %v2435 = vrot.slane %v2433, 5
        %v2436 = vsel %vm345, %v2431, %v2435
        %v2438 = vshrl.u32 %v2221, 16
        %v2440 = vrot.slane %v2438, 4
        %v2441 = vshll.u32 %v2221, 16
        %v2443 = vrot.slane %v2441, 5
        %v2444 = vor.u32 %v2440, %v2443
        %v2445 = vrot.slane %v2444, 4
        %v2447 = vshll.u32 %v2222, 16
        %v2449 = vrot.slane %v2447, 5
        %v2450 = vsel %vm345, %v2445, %v2449
        %v2451 = vshrl.u32 %v2222, 16
        %v2453 = vrot.slane %v2451, 4
        %v2454 = vor.u32 %v2453, %v2449
        %v2455 = vrot.slane %v2454, 4
        %v2457 = vshll.u32 %v2223, 16
        %v2459 = vrot.slane %v2457, 5
        %v2460 = vsel %vm345, %v2455, %v2459
        %v2462 = vshrl.u32 %v2224, 16
        %v2464 = vrot.slane %v2462, 4
        %v2465 = vshll.u32 %v2224, 16
        %v2467 = vrot.slane %v2465, 5
        %v2468 = vor.u32 %v2464, %v2467
        %v2469 = vrot.slane %v2468, 4
        %v2471 = vshll.u32 %v2225, 16
        %v2473 = vrot.slane %v2471, 5
        %v2474 = vsel %vm345, %v2469, %v2473
        %v2475 = vshrl.u32 %v2225, 16
        %v2477 = vrot.slane %v2475, 4
        %v2478 = vor.u32 %v2477, %v2473
        %v2479 = vrot.slane %v2478, 4
        %v2481 = vshll.u32 %v2226, 16
        %v2483 = vrot.slane %v2481, 5
        %v2484 = vsel %vm345, %v2479, %v2483
        %v2486 = vshrl.u32 %v2227, 16
        %v2488 = vrot.slane %v2486, 4
        %v2489 = vshll.u32 %v2227, 16
        %v2491 = vrot.slane %v2489, 5
        %v2492 = vor.u32 %v2488, %v2491
        %v2493 = vrot.slane %v2492, 4
        %v2495 = vshll.u32 %v2228, 16
        %v2497 = vrot.slane %v2495, 5
        %v2498 = vsel %vm345, %v2493, %v2497
        %v2499 = vshrl.u32 %v2228, 16
        %v2501 = vrot.slane %v2499, 4
        %v2502 = vor.u32 %v2501, %v2497
        %v2503 = vrot.slane %v2502, 4
        %v2505 = vshll.u32 %v2229, 16
        %v2507 = vrot.slane %v2505, 5
        %v2508 = vsel %vm345, %v2503, %v2507
        %v2510 = vshrl.u32 %v2230, 16
        %v2512 = vrot.slane %v2510, 4
        %v2513 = vshll.u32 %v2230, 16
        %v2515 = vrot.slane %v2513, 5
        %v2516 = vor.u32 %v2512, %v2515
        %v2517 = vrot.slane %v2516, 4
        %v2519 = vshll.u32 %v2231, 16
        %v2521 = vrot.slane %v2519, 5
        %v2522 = vsel %vm345, %v2517, %v2521
        %v2523 = vshrl.u32 %v2231, 16
        %v2525 = vrot.slane %v2523, 4
        %v2526 = vor.u32 %v2525, %v2521
        %v2527 = vrot.slane %v2526, 4
        %v2529 = vshll.u32 %v2232, 16
        %v2531 = vrot.slane %v2529, 5
        %v2532 = vsel %vm345, %v2527, %v2531
        %v2534 = vshrl.u32 %v2233, 16
        %v2536 = vrot.slane %v2534, 4
        %v2537 = vshll.u32 %v2233, 16
        %v2539 = vrot.slane %v2537, 5
        %v2540 = vor.u32 %v2536, %v2539
        %v2541 = vrot.slane %v2540, 4
        %v2543 = vshll.u32 %v2234, 16
        %v2545 = vrot.slane %v2543, 5
        %v2546 = vsel %vm345, %v2541, %v2545
        %v2547 = vshrl.u32 %v2234, 16
        %v2549 = vrot.slane %v2547, 4
        %v2550 = vor.u32 %v2549, %v2545
        %v2551 = vrot.slane %v2550, 4
        %v2553 = vshll.u32 %v2235, 16
        %v2555 = vrot.slane %v2553, 5
        %v2556 = vsel %vm345, %v2551, %v2555
        %v2558 = vshrl.u32 %v2236, 16
        %v2560 = vrot.slane %v2558, 4
        %v2561 = vshll.u32 %v2236, 16
        %v2563 = vrot.slane %v2561, 5
        %v2564 = vor.u32 %v2560, %v2563
        %v2565 = vrot.slane %v2564, 4
        %v2567 = vshll.u32 %v2237, 16
        %v2569 = vrot.slane %v2567, 5
        %v2570 = vsel %vm345, %v2565, %v2569
        %v2571 = vshrl.u32 %v2237, 16
        %v2573 = vrot.slane %v2571, 4
        %v2574 = vor.u32 %v2573, %v2569
        %v2575 = vrot.slane %v2574, 4
        %v2577 = vshll.u32 %v2238, 16
        %v2579 = vrot.slane %v2577, 5
        %v2580 = vsel %vm345, %v2575, %v2579
        %v2582 = vshrl.u32 %v2239, 16
        %v2584 = vrot.slane %v2582, 4
        %v2585 = vshll.u32 %v2239, 16
        %v2587 = vrot.slane %v2585, 5
        %v2588 = vor.u32 %v2584, %v2587
        %v2589 = vrot.slane %v2588, 4
        %v2591 = vshll.u32 %v2240, 16
        %v2593 = vrot.slane %v2591, 5
        %v2594 = vsel %vm345, %v2589, %v2593
        %v2595 = vshrl.u32 %v2240, 16
        %v2597 = vrot.slane %v2595, 4
        %v2598 = vor.u32 %v2597, %v2593
        %v2599 = vrot.slane %v2598, 4
        %v2601 = vshll.u32 %v2241, 16
        %v2603 = vrot.slane %v2601, 5
        %v2604 = vsel %vm345, %v2599, %v2603
        %v2606 = vshrl.u32 %v2242, 16
        %v2608 = vrot.slane %v2606, 4
        %v2609 = vshll.u32 %v2242, 16
        %v2611 = vrot.slane %v2609, 5
        %v2612 = vor.u32 %v2608, %v2611
        %v2613 = vrot.slane %v2612, 4
        %v2615 = vshll.u32 %v2243, 16
        %v2617 = vrot.slane %v2615, 5
        %v2618 = vsel %vm345, %v2613, %v2617
        %v2619 = vshrl.u32 %v2243, 16
        %v2621 = vrot.slane %v2619, 4
        %v2622 = vor.u32 %v2621, %v2617
        %v2623 = vrot.slane %v2622, 4
        %v2625 = vshll.u32 %v2244, 16
        %v2627 = vrot.slane %v2625, 5
        %v2628 = vsel %vm345, %v2623, %v2627
        %s2629 = scalar_lea.vmem %s1, 256
        %v2630 = vld [vmem:[%s2629] sm:$0xf]
        %v2631 = vld [vmem:[%s2629 + $0x4] sm:$0xf]
        %v2632 = vld [vmem:[%s2629 + $0x8] sm:$0xf]
        %v2633 = vld [vmem:[%s2629 + $0xc] sm:$0xf]
        %v2634 = vld [vmem:[%s2629 + $0x10] sm:$0xf]
        %v2635 = vld [vmem:[%s2629 + $0x14] sm:$0xf]
        %v2636 = vld [vmem:[%s2629 + $0x18] sm:$0xf]
        %v2637 = vld [vmem:[%s2629 + $0x1c] sm:$0xf]
        %v2638 = vld [vmem:[%s2629 + $0x20] sm:$0xf]
        %v2639 = vld [vmem:[%s2629 + $0x24] sm:$0xf]
        %v2640 = vld [vmem:[%s2629 + $0x28] sm:$0xf]
        %v2641 = vld [vmem:[%s2629 + $0x2c] sm:$0xf]
        %v2642 = vld [vmem:[%s2629 + $0x30] sm:$0xf]
        %v2643 = vld [vmem:[%s2629 + $0x34] sm:$0xf]
        %v2644 = vld [vmem:[%s2629 + $0x38] sm:$0xf]
        %v2645 = vld [vmem:[%s2629 + $0x3c] sm:$0xf]
        %v2646 = vunpack.c.l.b16 %v2258
        %v2647 = vunpack.c.l.b16 %v2268
        %v2648 = vunpack.c.l.b16 %v2282
        %v2649 = vunpack.c.l.b16 %v2292
        %v2650 = vunpack.c.l.b16 %v2306
        %v2651 = vunpack.c.l.b16 %v2316
        %v2652 = vunpack.c.l.b16 %v2330
        %v2653 = vunpack.c.l.b16 %v2340
        %v2654 = vunpack.c.l.b16 %v2354
        %v2655 = vunpack.c.l.b16 %v2364
        %v2656 = vunpack.c.l.b16 %v2378
        %v2657 = vunpack.c.l.b16 %v2388
        %v2658 = vunpack.c.l.b16 %v2402
        %v2659 = vunpack.c.l.b16 %v2412
        %v2660 = vunpack.c.l.b16 %v2426
        %v2661 = vunpack.c.l.b16 %v2436
        %v2662 = vunpack.c.l.b16 %v2450
        %v2663 = vunpack.c.l.b16 %v2460
        %v2664 = vunpack.c.l.b16 %v2474
        %v2665 = vunpack.c.l.b16 %v2484
        %v2666 = vunpack.c.l.b16 %v2498
        %v2667 = vunpack.c.l.b16 %v2508
        %v2668 = vunpack.c.l.b16 %v2522
        %v2669 = vunpack.c.l.b16 %v2532
        %v2670 = vunpack.c.l.b16 %v2546
        %v2671 = vunpack.c.l.b16 %v2556
        %v2672 = vunpack.c.l.b16 %v2570
        %v2673 = vunpack.c.l.b16 %v2580
        %v2674 = vunpack.c.l.b16 %v2594
        %v2675 = vunpack.c.l.b16 %v2604
        %v2676 = vunpack.c.l.b16 %v2618
        %v2677 = vunpack.c.l.b16 %v2628
        %v2678 = vpack.c.b16 %v2647, %v2646
        %v2679 = vpack.c.b16 %v2649, %v2648
        %v2680 = vpack.c.b16 %v2651, %v2650
        %v2681 = vpack.c.b16 %v2653, %v2652
        %v2682 = vpack.c.b16 %v2655, %v2654
        %v2683 = vpack.c.b16 %v2657, %v2656
        %v2684 = vpack.c.b16 %v2659, %v2658
        %v2685 = vpack.c.b16 %v2661, %v2660
        %v2686 = vpack.c.b16 %v2663, %v2662
        %v2687 = vpack.c.b16 %v2665, %v2664
        %v2688 = vpack.c.b16 %v2667, %v2666
        %v2689 = vpack.c.b16 %v2669, %v2668
        %v2690 = vpack.c.b16 %v2671, %v2670
        %v2691 = vpack.c.b16 %v2673, %v2672
        %v2692 = vpack.c.b16 %v2675, %v2674
        %v2693 = vpack.c.b16 %v2677, %v2676
        %v2726 = vunpack.c.l.b16 %v2630
        %v2727 = vunpack.c.l.b16 %v2631
        %v2728 = vunpack.c.l.b16 %v2632
        %v2729 = vunpack.c.l.b16 %v2633
        %v2730 = vunpack.c.l.b16 %v2634
        %v2731 = vunpack.c.l.b16 %v2635
        %v2732 = vunpack.c.l.b16 %v2636
        %v2733 = vunpack.c.l.b16 %v2637
        %v2734 = vunpack.c.l.b16 %v2638
        %v2735 = vunpack.c.l.b16 %v2639
        %v2736 = vunpack.c.l.b16 %v2640
        %v2737 = vunpack.c.l.b16 %v2641
        %v2738 = vunpack.c.l.b16 %v2642
        %v2739 = vunpack.c.l.b16 %v2643
        %v2740 = vunpack.c.l.b16 %v2644
        %v2741 = vunpack.c.l.b16 %v2645
        %v2742 = vpack.c.b16 %v2727, %v2726
        %v2743 = vpack.c.b16 %v2729, %v2728
        %v2744 = vpack.c.b16 %v2731, %v2730
        %v2745 = vpack.c.b16 %v2733, %v2732
        %v2746 = vpack.c.b16 %v2735, %v2734
        %v2747 = vpack.c.b16 %v2737, %v2736
        %v2748 = vpack.c.b16 %v2739, %v2738
        %v2749 = vpack.c.b16 %v2741, %v2740
        %2758 = vmatprep.subr.bf16.mxu0 0
        %2759 = vmatpush1.bf16.msra.mxu0 %v2742
        %2760 = vmatprep.subr.bf16.mxu0 0
        %2761 = vmatpush1.bf16.msra.mxu0 %v2743
        %2762 = vmatprep.subr.bf16.mxu0 0
        %2763 = vmatpush1.bf16.msra.mxu0 %v2744
        %2764 = vmatprep.subr.bf16.mxu0 0
        %2765 = vmatpush1.bf16.msra.mxu0 %v2745
        %2766 = vmatprep.subr.bf16.mxu0 0
        %2767 = vmatpush1.bf16.msra.mxu0 %v2746
        %2768 = vmatprep.subr.bf16.mxu0 0
        %2769 = vmatpush1.bf16.msra.mxu0 %v2747
        %2770 = vmatprep.subr.bf16.mxu0 0
        %2771 = vmatpush1.bf16.msra.mxu0 %v2748
        %2772 = vmatprep.subr.bf16.mxu0 0
        %2773 = vmatpush1.bf16.msra.mxu0 %v2749
        %2774 = vmatprep.subr.bf16.mxu0 0
        %2775 = vmatpush1.bf16.msra.mxu0 0
        %2776 = vmatprep.subr.bf16.mxu0 0
        %2777 = vmatpush1.bf16.msra.mxu0 0
        %2778 = vmatprep.subr.bf16.mxu0 0
        %2779 = vmatpush1.bf16.msra.mxu0 0
        %2780 = vmatprep.subr.bf16.mxu0 0
        %2781 = vmatpush1.bf16.msra.mxu0 0
        %2782 = vmatprep.subr.bf16.mxu0 0
        %2783 = vmatpush1.bf16.msra.mxu0 0
        %2784 = vmatprep.subr.bf16.mxu0 0
        %2785 = vmatpush1.bf16.msra.mxu0 0
        %2786 = vmatprep.subr.bf16.mxu0 0
        %2787 = vmatpush1.bf16.msra.mxu0 0
        %2788 = vmatprep.subr.bf16.mxu0 0
        %2789 = vmatpush1.bf16.msra.mxu0 0
        %2790 = vmatprep.mubr.bf16.mxu0 0
        %2791 = vmatmul.mubr.bf16.gmra.mrb[0].mxu0 %v2678
        %v2792 = vpop.f32.mrb[0].mxu0
        %v2793 = vadd.f32 0.0, %v2792
        %v2794 = vpop.f32.mrb[0].mxu0
        %v2795 = vpop.f32.mrb[0].mxu0
        %v2796 = vadd.f32 0.0, %v2795
        %v2797 = vpop.f32.mrb[0].mxu0
        %2798 = vmatprep.mubr.bf16.mxu0 0
        %2799 = vmatmul.mubr.bf16.gmra.mrb[0].mxu0 %v2679
        %v2800 = vpop.f32.mrb[0].mxu0
        %v2801 = vadd.f32 0.0, %v2800
        %v2802 = vpop.f32.mrb[0].mxu0
        %v2803 = vpop.f32.mrb[0].mxu0
        %v2804 = vadd.f32 0.0, %v2803
        %v2805 = vpop.f32.mrb[0].mxu0
        %2806 = vmatprep.mubr.bf16.mxu0 0
        %2807 = vmatmul.mubr.bf16.gmra.mrb[0].mxu0 %v2680
        %v2808 = vpop.f32.mrb[0].mxu0
        %v2809 = vadd.f32 0.0, %v2808
        %v2810 = vpop.f32.mrb[0].mxu0
        %v2811 = vpop.f32.mrb[0].mxu0
        %v2812 = vadd.f32 0.0, %v2811
        %v2813 = vpop.f32.mrb[0].mxu0
        %2814 = vmatprep.mubr.bf16.mxu0 0
        %2815 = vmatmul.mubr.bf16.gmra.mrb[0].mxu0 %v2681
        %v2816 = vpop.f32.mrb[0].mxu0
        %v2817 = vadd.f32 0.0, %v2816
        %v2818 = vpop.f32.mrb[0].mxu0
        %v2819 = vpop.f32.mrb[0].mxu0
        %v2820 = vadd.f32 0.0, %v2819
        %v2821 = vpop.f32.mrb[0].mxu0
        %2822 = vmatprep.mubr.bf16.mxu0 0
        %2823 = vmatmul.mubr.bf16.gmra.mrb[0].mxu0 %v2682
        %v2824 = vpop.f32.mrb[0].mxu0
        %v2825 = vadd.f32 0.0, %v2824
        %v2826 = vpop.f32.mrb[0].mxu0
        %v2827 = vpop.f32.mrb[0].mxu0
        %v2828 = vadd.f32 0.0, %v2827
        %v2829 = vpop.f32.mrb[0].mxu0
        %2830 = vmatprep.mubr.bf16.mxu0 0
        %2831 = vmatmul.mubr.bf16.gmra.mrb[0].mxu0 %v2683
        %v2832 = vpop.f32.mrb[0].mxu0
        %v2833 = vadd.f32 0.0, %v2832
        %v2834 = vpop.f32.mrb[0].mxu0
        %v2835 = vpop.f32.mrb[0].mxu0
        %v2836 = vadd.f32 0.0, %v2835
        %v2837 = vpop.f32.mrb[0].mxu0
        %2838 = vmatprep.mubr.bf16.mxu0 0
        %2839 = vmatmul.mubr.bf16.gmra.mrb[0].mxu0 %v2684
        %v2840 = vpop.f32.mrb[0].mxu0
        %v2841 = vadd.f32 0.0, %v2840
        %v2842 = vpop.f32.mrb[0].mxu0
        %v2843 = vpop.f32.mrb[0].mxu0
        %v2844 = vadd.f32 0.0, %v2843
        %v2845 = vpop.f32.mrb[0].mxu0
        %2846 = vmatprep.mubr.bf16.mxu0 0
        %2847 = vmatmul.mubr.bf16.gmra.mrb[0].mxu0 %v2685
        %v2848 = vpop.f32.mrb[0].mxu0
        %v2849 = vadd.f32 0.0, %v2848
        %v2850 = vpop.f32.mrb[0].mxu0
        %v2851 = vpop.f32.mrb[0].mxu0
        %v2852 = vadd.f32 0.0, %v2851
        %v2853 = vpop.f32.mrb[0].mxu0
        %2854 = vmatprep.mubr.bf16.mxu0 0
        %2855 = vmatmul.mubr.bf16.gmra.mrb[0].mxu0 %v2686
        %v2856 = vpop.f32.mrb[0].mxu0
        %v2857 = vadd.f32 0.0, %v2856
        %v2858 = vpop.f32.mrb[0].mxu0
        %v2859 = vpop.f32.mrb[0].mxu0
        %v2860 = vadd.f32 0.0, %v2859
        %v2861 = vpop.f32.mrb[0].mxu0
        %2862 = vmatprep.mubr.bf16.mxu0 0
        %2863 = vmatmul.mubr.bf16.gmra.mrb[0].mxu0 %v2687
        %v2864 = vpop.f32.mrb[0].mxu0
        %v2865 = vadd.f32 0.0, %v2864
        %v2866 = vpop.f32.mrb[0].mxu0
        %v2867 = vpop.f32.mrb[0].mxu0
        %v2868 = vadd.f32 0.0, %v2867
        %v2869 = vpop.f32.mrb[0].mxu0
        %2870 = vmatprep.mubr.bf16.mxu0 0
        %2871 = vmatmul.mubr.bf16.gmra.mrb[0].mxu0 %v2688
        %v2872 = vpop.f32.mrb[0].mxu0
        %v2873 = vadd.f32 0.0, %v2872
        %v2874 = vpop.f32.mrb[0].mxu0
        %v2875 = vpop.f32.mrb[0].mxu0
        %v2876 = vadd.f32 0.0, %v2875
        %v2877 = vpop.f32.mrb[0].mxu0
        %2878 = vmatprep.mubr.bf16.mxu0 0
        %2879 = vmatmul.mubr.bf16.gmra.mrb[0].mxu0 %v2689
        %v2880 = vpop.f32.mrb[0].mxu0
        %v2881 = vadd.f32 0.0, %v2880
        %v2882 = vpop.f32.mrb[0].mxu0
        %v2883 = vpop.f32.mrb[0].mxu0
        %v2884 = vadd.f32 0.0, %v2883
        %v2885 = vpop.f32.mrb[0].mxu0
        %2886 = vmatprep.mubr.bf16.mxu0 0
        %2887 = vmatmul.mubr.bf16.gmra.mrb[0].mxu0 %v2690
        %v2888 = vpop.f32.mrb[0].mxu0
        %v2889 = vadd.f32 0.0, %v2888
        %v2890 = vpop.f32.mrb[0].mxu0
        %v2891 = vpop.f32.mrb[0].mxu0
        %v2892 = vadd.f32 0.0, %v2891
        %v2893 = vpop.f32.mrb[0].mxu0
        %2894 = vmatprep.mubr.bf16.mxu0 0
        %2895 = vmatmul.mubr.bf16.gmra.mrb[0].mxu0 %v2691
        %v2896 = vpop.f32.mrb[0].mxu0
        %v2897 = vadd.f32 0.0, %v2896
        %v2898 = vpop.f32.mrb[0].mxu0
        %v2899 = vpop.f32.mrb[0].mxu0
        %v2900 = vadd.f32 0.0, %v2899
        %v2901 = vpop.f32.mrb[0].mxu0
        %2902 = vmatprep.mubr.bf16.mxu0 0
        %2903 = vmatmul.mubr.bf16.gmra.mrb[0].mxu0 %v2692
        %v2904 = vpop.f32.mrb[0].mxu0
        %v2905 = vadd.f32 0.0, %v2904
        %v2906 = vpop.f32.mrb[0].mxu0
        %v2907 = vpop.f32.mrb[0].mxu0
        %v2908 = vadd.f32 0.0, %v2907
        %v2909 = vpop.f32.mrb[0].mxu0
        %2910 = vmatprep.mubr.bf16.mxu0 0
        %2911 = vmatmul.mubr.bf16.gmra.mrb[0].mxu0 %v2693
        %v2912 = vpop.f32.mrb[0].mxu0
        %v2913 = vadd.f32 0.0, %v2912
        %v2914 = vpop.f32.mrb[0].mxu0
        %v2915 = vpop.f32.mrb[0].mxu0
        %v2916 = vadd.f32 0.0, %v2915
        %v2917 = vpop.f32.mrb[0].mxu0
        %2918 = vdwg.mxu0
        %v2919 = vadd.f32 %v2165, %v2793
        %v2920 = vadd.f32 %v2166, %v2796
        %v2921 = vadd.f32 %v2167, %v2801
        %v2922 = vadd.f32 %v2168, %v2804
        %v2923 = vadd.f32 %v2169, %v2809
        %v2924 = vadd.f32 %v2170, %v2812
        %v2925 = vadd.f32 %v2171, %v2817
        %v2926 = vadd.f32 %v2172, %v2820
        %v2927 = vadd.f32 %v2173, %v2825
        %v2928 = vadd.f32 %v2174, %v2828
        %v2929 = vadd.f32 %v2175, %v2833
        %v2930 = vadd.f32 %v2176, %v2836
        %v2931 = vadd.f32 %v2177, %v2841
        %v2932 = vadd.f32 %v2178, %v2844
        %v2933 = vadd.f32 %v2179, %v2849
        %v2934 = vadd.f32 %v2180, %v2852
        %v2935 = vadd.f32 %v2181, %v2857
        %v2936 = vadd.f32 %v2182, %v2860
        %v2937 = vadd.f32 %v2183, %v2865
        %v2938 = vadd.f32 %v2184, %v2868
        %v2939 = vadd.f32 %v2185, %v2873
        %v2940 = vadd.f32 %v2186, %v2876
        %v2941 = vadd.f32 %v2187, %v2881
        %v2942 = vadd.f32 %v2188, %v2884
        %v2943 = vadd.f32 %v2189, %v2889
        %v2944 = vadd.f32 %v2190, %v2892
        %v2945 = vadd.f32 %v2191, %v2897
        %v2946 = vadd.f32 %v2192, %v2900
        %v2947 = vadd.f32 %v2193, %v2905
        %v2948 = vadd.f32 %v2194, %v2908
        %v2949 = vadd.f32 %v2195, %v2913
        %v2950 = vadd.f32 %v2196, %v2916
        %v2951 = vld [vmem:[%s1810] sm:$0xe]
        %v2952 = vld [vmem:[%s1810 + $0xc] sm:$0xe]
        %v2953 = vld [vmem:[%s1810 + $0x18] sm:$0xe]
        %v2954 = vld [vmem:[%s1810 + $0x24] sm:$0xe]
        %v2955 = vld [vmem:[%s1810 + $0x30] sm:$0xe]
        %v2956 = vld [vmem:[%s1810 + $0x3c] sm:$0xe]
        %v2957 = vld [vmem:[%s1810 + $0x48] sm:$0xe]
        %v2958 = vld [vmem:[%s1810 + $0x54] sm:$0xe]
        %v2959 = vld [vmem:[%s1810 + $0x60] sm:$0xe]
        %v2960 = vld [vmem:[%s1810 + $0x6c] sm:$0xe]
        %v2961 = vld [vmem:[%s1810 + $0x78] sm:$0xe]
        %v2962 = vld [vmem:[%s1810 + $0x84] sm:$0xe]
        %v2963 = vld [vmem:[%s1810 + $0x90] sm:$0xe]
        %v2964 = vld [vmem:[%s1810 + $0x9c] sm:$0xe]
        %v2965 = vld [vmem:[%s1810 + $0xa8] sm:$0xe]
        %v2966 = vld [vmem:[%s1810 + $0xb4] sm:$0xe]
        %v3015 = vrot.slane %v2951, 5
        %v3016 = vrot.slane %v3015, 4
        %v3017 = vrot.slane %v2198, 5
        %v3018 = vsel %vm1375, %v3016, %v3017
        %v3019 = vrot.slane %v3017, 4
        %v3020 = vrot.slane %v2199, 5
        %v3021 = vsel %vm1375, %v3019, %v3020
        %v3022 = vrot.slane %v2952, 5
        %v3023 = vrot.slane %v3022, 4
        %v3024 = vrot.slane %v2201, 5
        %v3025 = vsel %vm1375, %v3023, %v3024
        %v3026 = vrot.slane %v3024, 4
        %v3027 = vrot.slane %v2202, 5
        %v3028 = vsel %vm1375, %v3026, %v3027
        %v3029 = vrot.slane %v2953, 5
        %v3030 = vrot.slane %v3029, 4
        %v3031 = vrot.slane %v2204, 5
        %v3032 = vsel %vm1375, %v3030, %v3031
        %v3033 = vrot.slane %v3031, 4
        %v3034 = vrot.slane %v2205, 5
        %v3035 = vsel %vm1375, %v3033, %v3034
        %v3036 = vrot.slane %v2954, 5
        %v3037 = vrot.slane %v3036, 4
        %v3038 = vrot.slane %v2207, 5
        %v3039 = vsel %vm1375, %v3037, %v3038
        %v3040 = vrot.slane %v3038, 4
        %v3041 = vrot.slane %v2208, 5
        %v3042 = vsel %vm1375, %v3040, %v3041
        %v3043 = vrot.slane %v2955, 5
        %v3044 = vrot.slane %v3043, 4
        %v3045 = vrot.slane %v2210, 5
        %v3046 = vsel %vm1375, %v3044, %v3045
        %v3047 = vrot.slane %v3045, 4
        %v3048 = vrot.slane %v2211, 5
        %v3049 = vsel %vm1375, %v3047, %v3048
        %v3050 = vrot.slane %v2956, 5
        %v3051 = vrot.slane %v3050, 4
        %v3052 = vrot.slane %v2213, 5
        %v3053 = vsel %vm1375, %v3051, %v3052
        %v3054 = vrot.slane %v3052, 4
        %v3055 = vrot.slane %v2214, 5
        %v3056 = vsel %vm1375, %v3054, %v3055
        %v3057 = vrot.slane %v2957, 5
        %v3058 = vrot.slane %v3057, 4
        %v3059 = vrot.slane %v2216, 5
        %v3060 = vsel %vm1375, %v3058, %v3059
        %v3061 = vrot.slane %v3059, 4
        %v3062 = vrot.slane %v2217, 5
        %v3063 = vsel %vm1375, %v3061, %v3062
        %v3064 = vrot.slane %v2958, 5
        %v3065 = vrot.slane %v3064, 4
        %v3066 = vrot.slane %v2219, 5
        %v3067 = vsel %vm1375, %v3065, %v3066
        %v3068 = vrot.slane %v3066, 4
        %v3069 = vrot.slane %v2220, 5
        %v3070 = vsel %vm1375, %v3068, %v3069
        %v3071 = vrot.slane %v2959, 5
        %v3072 = vrot.slane %v3071, 4
        %v3073 = vrot.slane %v2222, 5
        %v3074 = vsel %vm1375, %v3072, %v3073
        %v3075 = vrot.slane %v3073, 4
        %v3076 = vrot.slane %v2223, 5
        %v3077 = vsel %vm1375, %v3075, %v3076
        %v3078 = vrot.slane %v2960, 5
        %v3079 = vrot.slane %v3078, 4
        %v3080 = vrot.slane %v2225, 5
        %v3081 = vsel %vm1375, %v3079, %v3080
        %v3082 = vrot.slane %v3080, 4
        %v3083 = vrot.slane %v2226, 5
        %v3084 = vsel %vm1375, %v3082, %v3083
        %v3085 = vrot.slane %v2961, 5
        %v3086 = vrot.slane %v3085, 4
        %v3087 = vrot.slane %v2228, 5
        %v3088 = vsel %vm1375, %v3086, %v3087
        %v3089 = vrot.slane %v3087, 4
        %v3090 = vrot.slane %v2229, 5
        %v3091 = vsel %vm1375, %v3089, %v3090
        %v3092 = vrot.slane %v2962, 5
        %v3093 = vrot.slane %v3092, 4
        %v3094 = vrot.slane %v2231, 5
        %v3095 = vsel %vm1375, %v3093, %v3094
        %v3096 = vrot.slane %v3094, 4
        %v3097 = vrot.slane %v2232, 5
        %v3098 = vsel %vm1375, %v3096, %v3097
        %v3099 = vrot.slane %v2963, 5
        %v3100 = vrot.slane %v3099, 4
        %v3101 = vrot.slane %v2234, 5
        %v3102 = vsel %vm1375, %v3100, %v3101
        %v3103 = vrot.slane %v3101, 4
        %v3104 = vrot.slane %v2235, 5
        %v3105 = vsel %vm1375, %v3103, %v3104
        %v3106 = vrot.slane %v2964, 5
        %v3107 = vrot.slane %v3106, 4
        %v3108 = vrot.slane %v2237, 5
        %v3109 = vsel %vm1375, %v3107, %v3108
        %v3110 = vrot.slane %v3108, 4
        %v3111 = vrot.slane %v2238, 5
        %v3112 = vsel %vm1375, %v3110, %v3111
        %v3113 = vrot.slane %v2965, 5
        %v3114 = vrot.slane %v3113, 4
        %v3115 = vrot.slane %v2240, 5
        %v3116 = vsel %vm1375, %v3114, %v3115
        %v3117 = vrot.slane %v3115, 4
        %v3118 = vrot.slane %v2241, 5
        %v3119 = vsel %vm1375, %v3117, %v3118
        %v3120 = vrot.slane %v2966, 5
        %v3121 = vrot.slane %v3120, 4
        %v3122 = vrot.slane %v2243, 5
        %v3123 = vsel %vm1375, %v3121, %v3122
        %v3124 = vrot.slane %v3122, 4
        %v3125 = vrot.slane %v2244, 5
        %v3126 = vsel %vm1375, %v3124, %v3125
        %s3127 = scalar_lea.vmem %s1, 320
        %v3128 = vld [vmem:[%s3127] sm:$0xf]
        %v3129 = vld [vmem:[%s3127 + $0x4] sm:$0xf]
        %v3130 = vld [vmem:[%s3127 + $0x8] sm:$0xf]
        %v3131 = vld [vmem:[%s3127 + $0xc] sm:$0xf]
        %v3132 = vld [vmem:[%s3127 + $0x10] sm:$0xf]
        %v3133 = vld [vmem:[%s3127 + $0x14] sm:$0xf]
        %v3134 = vld [vmem:[%s3127 + $0x18] sm:$0xf]
        %v3135 = vld [vmem:[%s3127 + $0x1c] sm:$0xf]
        %v3136 = vld [vmem:[%s3127 + $0x20] sm:$0xf]
        %v3137 = vld [vmem:[%s3127 + $0x24] sm:$0xf]
        %v3138 = vld [vmem:[%s3127 + $0x28] sm:$0xf]
        %v3139 = vld [vmem:[%s3127 + $0x2c] sm:$0xf]
        %v3140 = vld [vmem:[%s3127 + $0x30] sm:$0xf]
        %v3141 = vld [vmem:[%s3127 + $0x34] sm:$0xf]
        %v3142 = vld [vmem:[%s3127 + $0x38] sm:$0xf]
        %v3143 = vld [vmem:[%s3127 + $0x3c] sm:$0xf]
        %v3144 = vunpack.c.l.b16 %v3018
        %v3145 = vunpack.c.l.b16 %v3021
        %v3146 = vunpack.c.l.b16 %v3025
        %v3147 = vunpack.c.l.b16 %v3028
        %v3148 = vunpack.c.l.b16 %v3032
        %v3149 = vunpack.c.l.b16 %v3035
        %v3150 = vunpack.c.l.b16 %v3039
        %v3151 = vunpack.c.l.b16 %v3042
        %v3152 = vunpack.c.l.b16 %v3046
        %v3153 = vunpack.c.l.b16 %v3049
        %v3154 = vunpack.c.l.b16 %v3053
        %v3155 = vunpack.c.l.b16 %v3056
        %v3156 = vunpack.c.l.b16 %v3060
        %v3157 = vunpack.c.l.b16 %v3063
        %v3158 = vunpack.c.l.b16 %v3067
        %v3159 = vunpack.c.l.b16 %v3070
        %v3160 = vunpack.c.l.b16 %v3074
        %v3161 = vunpack.c.l.b16 %v3077
        %v3162 = vunpack.c.l.b16 %v3081
        %v3163 = vunpack.c.l.b16 %v3084
        %v3164 = vunpack.c.l.b16 %v3088
        %v3165 = vunpack.c.l.b16 %v3091
        %v3166 = vunpack.c.l.b16 %v3095
        %v3167 = vunpack.c.l.b16 %v3098
        %v3168 = vunpack.c.l.b16 %v3102
        %v3169 = vunpack.c.l.b16 %v3105
        %v3170 = vunpack.c.l.b16 %v3109
        %v3171 = vunpack.c.l.b16 %v3112
        %v3172 = vunpack.c.l.b16 %v3116
        %v3173 = vunpack.c.l.b16 %v3119
        %v3174 = vunpack.c.l.b16 %v3123
        %v3175 = vunpack.c.l.b16 %v3126
        %v3176 = vpack.c.b16 %v3145, %v3144
        %v3177 = vpack.c.b16 %v3147, %v3146
        %v3178 = vpack.c.b16 %v3149, %v3148
        %v3179 = vpack.c.b16 %v3151, %v3150
        %v3180 = vpack.c.b16 %v3153, %v3152
        %v3181 = vpack.c.b16 %v3155, %v3154
        %v3182 = vpack.c.b16 %v3157, %v3156
        %v3183 = vpack.c.b16 %v3159, %v3158
        %v3184 = vpack.c.b16 %v3161, %v3160
        %v3185 = vpack.c.b16 %v3163, %v3162
        %v3186 = vpack.c.b16 %v3165, %v3164
        %v3187 = vpack.c.b16 %v3167, %v3166
        %v3188 = vpack.c.b16 %v3169, %v3168
        %v3189 = vpack.c.b16 %v3171, %v3170
        %v3190 = vpack.c.b16 %v3173, %v3172
        %v3191 = vpack.c.b16 %v3175, %v3174
        %v3224 = vunpack.c.l.b16 %v3128
        %v3225 = vunpack.c.l.b16 %v3129
        %v3226 = vunpack.c.l.b16 %v3130
        %v3227 = vunpack.c.l.b16 %v3131
        %v3228 = vunpack.c.l.b16 %v3132
        %v3229 = vunpack.c.l.b16 %v3133
        %v3230 = vunpack.c.l.b16 %v3134
        %v3231 = vunpack.c.l.b16 %v3135
        %v3232 = vunpack.c.l.b16 %v3136
        %v3233 = vunpack.c.l.b16 %v3137
        %v3234 = vunpack.c.l.b16 %v3138
        %v3235 = vunpack.c.l.b16 %v3139
        %v3236 = vunpack.c.l.b16 %v3140
        %v3237 = vunpack.c.l.b16 %v3141
        %v3238 = vunpack.c.l.b16 %v3142
        %v3239 = vunpack.c.l.b16 %v3143
        %v3240 = vpack.c.b16 %v3225, %v3224
        %v3241 = vpack.c.b16 %v3227, %v3226
        %v3242 = vpack.c.b16 %v3229, %v3228
        %v3243 = vpack.c.b16 %v3231, %v3230
        %v3244 = vpack.c.b16 %v3233, %v3232
        %v3245 = vpack.c.b16 %v3235, %v3234
        %v3246 = vpack.c.b16 %v3237, %v3236
        %v3247 = vpack.c.b16 %v3239, %v3238
        %3256 = vmatprep.subr.bf16.mxu0 0
        %3257 = vmatpush1.bf16.msra.mxu0 %v3240
        %3258 = vmatprep.subr.bf16.mxu0 0
        %3259 = vmatpush1.bf16.msra.mxu0 %v3241
        %3260 = vmatprep.subr.bf16.mxu0 0
        %3261 = vmatpush1.bf16.msra.mxu0 %v3242
        %3262 = vmatprep.subr.bf16.mxu0 0
        %3263 = vmatpush1.bf16.msra.mxu0 %v3243
        %3264 = vmatprep.subr.bf16.mxu0 0
        %3265 = vmatpush1.bf16.msra.mxu0 %v3244
        %3266 = vmatprep.subr.bf16.mxu0 0
        %3267 = vmatpush1.bf16.msra.mxu0 %v3245
        %3268 = vmatprep.subr.bf16.mxu0 0
        %3269 = vmatpush1.bf16.msra.mxu0 %v3246
        %3270 = vmatprep.subr.bf16.mxu0 0
        %3271 = vmatpush1.bf16.msra.mxu0 %v3247
        %3272 = vmatprep.subr.bf16.mxu0 0
        %3273 = vmatpush1.bf16.msra.mxu0 0
        %3274 = vmatprep.subr.bf16.mxu0 0
        %3275 = vmatpush1.bf16.msra.mxu0 0
        %3276 = vmatprep.subr.bf16.mxu0 0
        %3277 = vmatpush1.bf16.msra.mxu0 0
        %3278 = vmatprep.subr.bf16.mxu0 0
        %3279 = vmatpush1.bf16.msra.mxu0 0
        %3280 = vmatprep.subr.bf16.mxu0 0
        %3281 = vmatpush1.bf16.msra.mxu0 0
        %3282 = vmatprep.subr.bf16.mxu0 0
        %3283 = vmatpush1.bf16.msra.mxu0 0
        %3284 = vmatprep.subr.bf16.mxu0 0
        %3285 = vmatpush1.bf16.msra.mxu0 0
        %3286 = vmatprep.subr.bf16.mxu0 0
        %3287 = vmatpush1.bf16.msra.mxu0 0
        %3288 = vmatprep.mubr.bf16.mxu0 0
        %3289 = vmatmul.mubr.bf16.gmra.mrb[0].mxu0 %v3176
        %v3290 = vpop.f32.mrb[0].mxu0
        %v3291 = vadd.f32 0.0, %v3290
        %v3292 = vpop.f32.mrb[0].mxu0
        %v3293 = vpop.f32.mrb[0].mxu0
        %v3294 = vadd.f32 0.0, %v3293
        %v3295 = vpop.f32.mrb[0].mxu0
        %3296 = vmatprep.mubr.bf16.mxu0 0
        %3297 = vmatmul.mubr.bf16.gmra.mrb[0].mxu0 %v3177
        %v3298 = vpop.f32.mrb[0].mxu0
        %v3299 = vadd.f32 0.0, %v3298
        %v3300 = vpop.f32.mrb[0].mxu0
        %v3301 = vpop.f32.mrb[0].mxu0
        %v3302 = vadd.f32 0.0, %v3301
        %v3303 = vpop.f32.mrb[0].mxu0
        %3304 = vmatprep.mubr.bf16.mxu0 0
        %3305 = vmatmul.mubr.bf16.gmra.mrb[0].mxu0 %v3178
        %v3306 = vpop.f32.mrb[0].mxu0
        %v3307 = vadd.f32 0.0, %v3306
        %v3308 = vpop.f32.mrb[0].mxu0
        %v3309 = vpop.f32.mrb[0].mxu0
        %v3310 = vadd.f32 0.0, %v3309
        %v3311 = vpop.f32.mrb[0].mxu0
        %3312 = vmatprep.mubr.bf16.mxu0 0
        %3313 = vmatmul.mubr.bf16.gmra.mrb[0].mxu0 %v3179
        %v3314 = vpop.f32.mrb[0].mxu0
        %v3315 = vadd.f32 0.0, %v3314
        %v3316 = vpop.f32.mrb[0].mxu0
        %v3317 = vpop.f32.mrb[0].mxu0
        %v3318 = vadd.f32 0.0, %v3317
        %v3319 = vpop.f32.mrb[0].mxu0
        %3320 = vmatprep.mubr.bf16.mxu0 0
        %3321 = vmatmul.mubr.bf16.gmra.mrb[0].mxu0 %v3180
        %v3322 = vpop.f32.mrb[0].mxu0
        %v3323 = vadd.f32 0.0, %v3322
        %v3324 = vpop.f32.mrb[0].mxu0
        %v3325 = vpop.f32.mrb[0].mxu0
        %v3326 = vadd.f32 0.0, %v3325
        %v3327 = vpop.f32.mrb[0].mxu0
        %3328 = vmatprep.mubr.bf16.mxu0 0
        %3329 = vmatmul.mubr.bf16.gmra.mrb[0].mxu0 %v3181
        %v3330 = vpop.f32.mrb[0].mxu0
        %v3331 = vadd.f32 0.0, %v3330
        %v3332 = vpop.f32.mrb[0].mxu0
        %v3333 = vpop.f32.mrb[0].mxu0
        %v3334 = vadd.f32 0.0, %v3333
        %v3335 = vpop.f32.mrb[0].mxu0
        %3336 = vmatprep.mubr.bf16.mxu0 0
        %3337 = vmatmul.mubr.bf16.gmra.mrb[0].mxu0 %v3182
        %v3338 = vpop.f32.mrb[0].mxu0
        %v3339 = vadd.f32 0.0, %v3338
        %v3340 = vpop.f32.mrb[0].mxu0
        %v3341 = vpop.f32.mrb[0].mxu0
        %v3342 = vadd.f32 0.0, %v3341
        %v3343 = vpop.f32.mrb[0].mxu0
        %3344 = vmatprep.mubr.bf16.mxu0 0
        %3345 = vmatmul.mubr.bf16.gmra.mrb[0].mxu0 %v3183
        %v3346 = vpop.f32.mrb[0].mxu0
        %v3347 = vadd.f32 0.0, %v3346
        %v3348 = vpop.f32.mrb[0].mxu0
        %v3349 = vpop.f32.mrb[0].mxu0
        %v3350 = vadd.f32 0.0, %v3349
        %v3351 = vpop.f32.mrb[0].mxu0
        %3352 = vmatprep.mubr.bf16.mxu0 0
        %3353 = vmatmul.mubr.bf16.gmra.mrb[0].mxu0 %v3184
        %v3354 = vpop.f32.mrb[0].mxu0
        %v3355 = vadd.f32 0.0, %v3354
        %v3356 = vpop.f32.mrb[0].mxu0
        %v3357 = vpop.f32.mrb[0].mxu0
        %v3358 = vadd.f32 0.0, %v3357
        %v3359 = vpop.f32.mrb[0].mxu0
        %3360 = vmatprep.mubr.bf16.mxu0 0
        %3361 = vmatmul.mubr.bf16.gmra.mrb[0].mxu0 %v3185
        %v3362 = vpop.f32.mrb[0].mxu0
        %v3363 = vadd.f32 0.0, %v3362
        %v3364 = vpop.f32.mrb[0].mxu0
        %v3365 = vpop.f32.mrb[0].mxu0
        %v3366 = vadd.f32 0.0, %v3365
        %v3367 = vpop.f32.mrb[0].mxu0
        %3368 = vmatprep.mubr.bf16.mxu0 0
        %3369 = vmatmul.mubr.bf16.gmra.mrb[0].mxu0 %v3186
        %v3370 = vpop.f32.mrb[0].mxu0
        %v3371 = vadd.f32 0.0, %v3370
        %v3372 = vpop.f32.mrb[0].mxu0
        %v3373 = vpop.f32.mrb[0].mxu0
        %v3374 = vadd.f32 0.0, %v3373
        %v3375 = vpop.f32.mrb[0].mxu0
        %3376 = vmatprep.mubr.bf16.mxu0 0
        %3377 = vmatmul.mubr.bf16.gmra.mrb[0].mxu0 %v3187
        %v3378 = vpop.f32.mrb[0].mxu0
        %v3379 = vadd.f32 0.0, %v3378
        %v3380 = vpop.f32.mrb[0].mxu0
        %v3381 = vpop.f32.mrb[0].mxu0
        %v3382 = vadd.f32 0.0, %v3381
        %v3383 = vpop.f32.mrb[0].mxu0
        %3384 = vmatprep.mubr.bf16.mxu0 0
        %3385 = vmatmul.mubr.bf16.gmra.mrb[0].mxu0 %v3188
        %v3386 = vpop.f32.mrb[0].mxu0
        %v3387 = vadd.f32 0.0, %v3386
        %v3388 = vpop.f32.mrb[0].mxu0
        %v3389 = vpop.f32.mrb[0].mxu0
        %v3390 = vadd.f32 0.0, %v3389
        %v3391 = vpop.f32.mrb[0].mxu0
        %3392 = vmatprep.mubr.bf16.mxu0 0
        %3393 = vmatmul.mubr.bf16.gmra.mrb[0].mxu0 %v3189
        %v3394 = vpop.f32.mrb[0].mxu0
        %v3395 = vadd.f32 0.0, %v3394
        %v3396 = vpop.f32.mrb[0].mxu0
        %v3397 = vpop.f32.mrb[0].mxu0
        %v3398 = vadd.f32 0.0, %v3397
        %v3399 = vpop.f32.mrb[0].mxu0
        %3400 = vmatprep.mubr.bf16.mxu0 0
        %3401 = vmatmul.mubr.bf16.gmra.mrb[0].mxu0 %v3190
        %v3402 = vpop.f32.mrb[0].mxu0
        %v3403 = vadd.f32 0.0, %v3402
        %v3404 = vpop.f32.mrb[0].mxu0
        %v3405 = vpop.f32.mrb[0].mxu0
        %v3406 = vadd.f32 0.0, %v3405
        %v3407 = vpop.f32.mrb[0].mxu0
        %3408 = vmatprep.mubr.bf16.mxu0 0
        %3409 = vmatmul.mubr.bf16.gmra.mrb[0].mxu0 %v3191
        %v3410 = vpop.f32.mrb[0].mxu0
        %v3411 = vadd.f32 0.0, %v3410
        %v3412 = vpop.f32.mrb[0].mxu0
        %v3413 = vpop.f32.mrb[0].mxu0
        %v3414 = vadd.f32 0.0, %v3413
        %v3415 = vpop.f32.mrb[0].mxu0
        %3416 = vdwg.mxu0
        %v3417 = vadd.f32 %v2919, %v3291
        %v3418 = vadd.f32 %v2920, %v3294
        %v3419 = vadd.f32 %v2921, %v3299
        %v3420 = vadd.f32 %v2922, %v3302
        %v3421 = vadd.f32 %v2923, %v3307
        %v3422 = vadd.f32 %v2924, %v3310
        %v3423 = vadd.f32 %v2925, %v3315
        %v3424 = vadd.f32 %v2926, %v3318
        %v3425 = vadd.f32 %v2927, %v3323
        %v3426 = vadd.f32 %v2928, %v3326
        %v3427 = vadd.f32 %v2929, %v3331
        %v3428 = vadd.f32 %v2930, %v3334
        %v3429 = vadd.f32 %v2931, %v3339
        %v3430 = vadd.f32 %v2932, %v3342
        %v3431 = vadd.f32 %v2933, %v3347
        %v3432 = vadd.f32 %v2934, %v3350
        %v3433 = vadd.f32 %v2935, %v3355
        %v3434 = vadd.f32 %v2936, %v3358
        %v3435 = vadd.f32 %v2937, %v3363
        %v3436 = vadd.f32 %v2938, %v3366
        %v3437 = vadd.f32 %v2939, %v3371
        %v3438 = vadd.f32 %v2940, %v3374
        %v3439 = vadd.f32 %v2941, %v3379
        %v3440 = vadd.f32 %v2942, %v3382
        %v3441 = vadd.f32 %v2943, %v3387
        %v3442 = vadd.f32 %v2944, %v3390
        %v3443 = vadd.f32 %v2945, %v3395
        %v3444 = vadd.f32 %v2946, %v3398
        %v3445 = vadd.f32 %v2947, %v3403
        %v3446 = vadd.f32 %v2948, %v3406
        %v3447 = vadd.f32 %v2949, %v3411
        %v3448 = vadd.f32 %v2950, %v3414
        %s3449 = scalar_lea.vmem %s277, 24
        %v3450 = vld [vmem:[%s3449] sm:$0xf]
        %v3451 = vld [vmem:[%s3449 + $0x4] sm:$0xf]
        %v3452 = vld [vmem:[%s3449 + $0xc] sm:$0xf]
        %v3453 = vld [vmem:[%s3449 + $0x10] sm:$0xf]
        %v3454 = vld [vmem:[%s3449 + $0x18] sm:$0xf]
        %v3455 = vld [vmem:[%s3449 + $0x1c] sm:$0xf]
        %v3456 = vld [vmem:[%s3449 + $0x24] sm:$0xf]
        %v3457 = vld [vmem:[%s3449 + $0x28] sm:$0xf]
        %v3458 = vld [vmem:[%s3449 + $0x30] sm:$0xf]
        %v3459 = vld [vmem:[%s3449 + $0x34] sm:$0xf]
        %v3460 = vld [vmem:[%s3449 + $0x3c] sm:$0xf]
        %v3461 = vld [vmem:[%s3449 + $0x40] sm:$0xf]
        %v3462 = vld [vmem:[%s3449 + $0x48] sm:$0xf]
        %v3463 = vld [vmem:[%s3449 + $0x4c] sm:$0xf]
        %v3464 = vld [vmem:[%s3449 + $0x54] sm:$0xf]
        %v3465 = vld [vmem:[%s3449 + $0x58] sm:$0xf]
        %v3466 = vld [vmem:[%s3449 + $0x60] sm:$0xf]
        %v3467 = vld [vmem:[%s3449 + $0x64] sm:$0xf]
        %v3468 = vld [vmem:[%s3449 + $0x6c] sm:$0xf]
        %v3469 = vld [vmem:[%s3449 + $0x70] sm:$0xf]
        %v3470 = vld [vmem:[%s3449 + $0x78] sm:$0xf]
        %v3471 = vld [vmem:[%s3449 + $0x7c] sm:$0xf]
        %v3472 = vld [vmem:[%s3449 + $0x84] sm:$0xf]
        %v3473 = vld [vmem:[%s3449 + $0x88] sm:$0xf]
        %v3474 = vld [vmem:[%s3449 + $0x90] sm:$0xf]
        %v3475 = vld [vmem:[%s3449 + $0x94] sm:$0xf]
        %v3476 = vld [vmem:[%s3449 + $0x9c] sm:$0xf]
        %v3477 = vld [vmem:[%s3449 + $0xa0] sm:$0xf]
        %v3478 = vld [vmem:[%s3449 + $0xa8] sm:$0xf]
        %v3479 = vld [vmem:[%s3449 + $0xac] sm:$0xf]
        %v3480 = vld [vmem:[%s3449 + $0xb4] sm:$0xf]
        %v3481 = vld [vmem:[%s3449 + $0xb8] sm:$0xf]
        %s3482 = scalar_lea.vmem %s1, 384
        %v3483 = vld [vmem:[%s3482] sm:$0xf]
        %v3484 = vld [vmem:[%s3482 + $0x4] sm:$0xf]
        %v3485 = vld [vmem:[%s3482 + $0x8] sm:$0xf]
        %v3486 = vld [vmem:[%s3482 + $0xc] sm:$0xf]
        %v3487 = vld [vmem:[%s3482 + $0x10] sm:$0xf]
        %v3488 = vld [vmem:[%s3482 + $0x14] sm:$0xf]
        %v3489 = vld [vmem:[%s3482 + $0x18] sm:$0xf]
        %v3490 = vld [vmem:[%s3482 + $0x1c] sm:$0xf]
        %v3491 = vld [vmem:[%s3482 + $0x20] sm:$0xf]
        %v3492 = vld [vmem:[%s3482 + $0x24] sm:$0xf]
        %v3493 = vld [vmem:[%s3482 + $0x28] sm:$0xf]
        %v3494 = vld [vmem:[%s3482 + $0x2c] sm:$0xf]
        %v3495 = vld [vmem:[%s3482 + $0x30] sm:$0xf]
        %v3496 = vld [vmem:[%s3482 + $0x34] sm:$0xf]
        %v3497 = vld [vmem:[%s3482 + $0x38] sm:$0xf]
        %v3498 = vld [vmem:[%s3482 + $0x3c] sm:$0xf]
        %v3531 = vunpack.c.l.b16 %v3450
        %v3532 = vunpack.c.l.b16 %v3451
        %v3533 = vunpack.c.l.b16 %v3452
        %v3534 = vunpack.c.l.b16 %v3453
        %v3535 = vunpack.c.l.b16 %v3454
        %v3536 = vunpack.c.l.b16 %v3455
        %v3537 = vunpack.c.l.b16 %v3456
        %v3538 = vunpack.c.l.b16 %v3457
        %v3539 = vunpack.c.l.b16 %v3458
        %v3540 = vunpack.c.l.b16 %v3459
        %v3541 = vunpack.c.l.b16 %v3460
        %v3542 = vunpack.c.l.b16 %v3461
        %v3543 = vunpack.c.l.b16 %v3462
        %v3544 = vunpack.c.l.b16 %v3463
        %v3545 = vunpack.c.l.b16 %v3464
        %v3546 = vunpack.c.l.b16 %v3465
        %v3547 = vunpack.c.l.b16 %v3466
        %v3548 = vunpack.c.l.b16 %v3467
        %v3549 = vunpack.c.l.b16 %v3468
        %v3550 = vunpack.c.l.b16 %v3469
        %v3551 = vunpack.c.l.b16 %v3470
        %v3552 = vunpack.c.l.b16 %v3471
        %v3553 = vunpack.c.l.b16 %v3472
        %v3554 = vunpack.c.l.b16 %v3473
        %v3555 = vunpack.c.l.b16 %v3474
        %v3556 = vunpack.c.l.b16 %v3475
        %v3557 = vunpack.c.l.b16 %v3476
        %v3558 = vunpack.c.l.b16 %v3477
        %v3559 = vunpack.c.l.b16 %v3478
        %v3560 = vunpack.c.l.b16 %v3479
        %v3561 = vunpack.c.l.b16 %v3480
        %v3562 = vunpack.c.l.b16 %v3481
        %v3563 = vpack.c.b16 %v3532, %v3531
        %v3564 = vpack.c.b16 %v3534, %v3533
        %v3565 = vpack.c.b16 %v3536, %v3535
        %v3566 = vpack.c.b16 %v3538, %v3537
        %v3567 = vpack.c.b16 %v3540, %v3539
        %v3568 = vpack.c.b16 %v3542, %v3541
        %v3569 = vpack.c.b16 %v3544, %v3543
        %v3570 = vpack.c.b16 %v3546, %v3545
        %v3571 = vpack.c.b16 %v3548, %v3547
        %v3572 = vpack.c.b16 %v3550, %v3549
        %v3573 = vpack.c.b16 %v3552, %v3551
        %v3574 = vpack.c.b16 %v3554, %v3553
        %v3575 = vpack.c.b16 %v3556, %v3555
        %v3576 = vpack.c.b16 %v3558, %v3557
        %v3577 = vpack.c.b16 %v3560, %v3559
        %v3578 = vpack.c.b16 %v3562, %v3561
        %v3611 = vunpack.c.l.b16 %v3483
        %v3612 = vunpack.c.l.b16 %v3484
        %v3613 = vunpack.c.l.b16 %v3485
        %v3614 = vunpack.c.l.b16 %v3486
        %v3615 = vunpack.c.l.b16 %v3487
        %v3616 = vunpack.c.l.b16 %v3488
        %v3617 = vunpack.c.l.b16 %v3489
        %v3618 = vunpack.c.l.b16 %v3490
        %v3619 = vunpack.c.l.b16 %v3491
        %v3620 = vunpack.c.l.b16 %v3492
        %v3621 = vunpack.c.l.b16 %v3493
        %v3622 = vunpack.c.l.b16 %v3494
        %v3623 = vunpack.c.l.b16 %v3495
        %v3624 = vunpack.c.l.b16 %v3496
        %v3625 = vunpack.c.l.b16 %v3497
        %v3626 = vunpack.c.l.b16 %v3498
        %v3627 = vpack.c.b16 %v3612, %v3611
        %v3628 = vpack.c.b16 %v3614, %v3613
        %v3629 = vpack.c.b16 %v3616, %v3615
        %v3630 = vpack.c.b16 %v3618, %v3617
        %v3631 = vpack.c.b16 %v3620, %v3619
        %v3632 = vpack.c.b16 %v3622, %v3621
        %v3633 = vpack.c.b16 %v3624, %v3623
        %v3634 = vpack.c.b16 %v3626, %v3625
        %3643 = vmatprep.subr.bf16.mxu0 0
        %3644 = vmatpush1.bf16.msra.mxu0 %v3627
        %3645 = vmatprep.subr.bf16.mxu0 0
        %3646 = vmatpush1.bf16.msra.mxu0 %v3628
        %3647 = vmatprep.subr.bf16.mxu0 0
        %3648 = vmatpush1.bf16.msra.mxu0 %v3629
        %3649 = vmatprep.subr.bf16.mxu0 0
        %3650 = vmatpush1.bf16.msra.mxu0 %v3630
        %3651 = vmatprep.subr.bf16.mxu0 0
        %3652 = vmatpush1.bf16.msra.mxu0 %v3631
        %3653 = vmatprep.subr.bf16.mxu0 0
        %3654 = vmatpush1.bf16.msra.mxu0 %v3632
        %3655 = vmatprep.subr.bf16.mxu0 0
        %3656 = vmatpush1.bf16.msra.mxu0 %v3633
        %3657 = vmatprep.subr.bf16.mxu0 0
        %3658 = vmatpush1.bf16.msra.mxu0 %v3634
        %3659 = vmatprep.subr.bf16.mxu0 0
        %3660 = vmatpush1.bf16.msra.mxu0 0
        %3661 = vmatprep.subr.bf16.mxu0 0
        %3662 = vmatpush1.bf16.msra.mxu0 0
        %3663 = vmatprep.subr.bf16.mxu0 0
        %3664 = vmatpush1.bf16.msra.mxu0 0
        %3665 = vmatprep.subr.bf16.mxu0 0
        %3666 = vmatpush1.bf16.msra.mxu0 0
        %3667 = vmatprep.subr.bf16.mxu0 0
        %3668 = vmatpush1.bf16.msra.mxu0 0
        %3669 = vmatprep.subr.bf16.mxu0 0
        %3670 = vmatpush1.bf16.msra.mxu0 0
        %3671 = vmatprep.subr.bf16.mxu0 0
        %3672 = vmatpush1.bf16.msra.mxu0 0
        %3673 = vmatprep.subr.bf16.mxu0 0
        %3674 = vmatpush1.bf16.msra.mxu0 0
        %3675 = vmatprep.mubr.bf16.mxu0 0
        %3676 = vmatmul.mubr.bf16.gmra.mrb[0].mxu0 %v3563
        %v3677 = vpop.f32.mrb[0].mxu0
        %v3678 = vadd.f32 0.0, %v3677
        %v3679 = vpop.f32.mrb[0].mxu0
        %v3680 = vpop.f32.mrb[0].mxu0
        %v3681 = vadd.f32 0.0, %v3680
        %v3682 = vpop.f32.mrb[0].mxu0
        %3683 = vmatprep.mubr.bf16.mxu0 0
        %3684 = vmatmul.mubr.bf16.gmra.mrb[0].mxu0 %v3564
        %v3685 = vpop.f32.mrb[0].mxu0
        %v3686 = vadd.f32 0.0, %v3685
        %v3687 = vpop.f32.mrb[0].mxu0
        %v3688 = vpop.f32.mrb[0].mxu0
        %v3689 = vadd.f32 0.0, %v3688
        %v3690 = vpop.f32.mrb[0].mxu0
        %3691 = vmatprep.mubr.bf16.mxu0 0
        %3692 = vmatmul.mubr.bf16.gmra.mrb[0].mxu0 %v3565
        %v3693 = vpop.f32.mrb[0].mxu0
        %v3694 = vadd.f32 0.0, %v3693
        %v3695 = vpop.f32.mrb[0].mxu0
        %v3696 = vpop.f32.mrb[0].mxu0
        %v3697 = vadd.f32 0.0, %v3696
        %v3698 = vpop.f32.mrb[0].mxu0
        %3699 = vmatprep.mubr.bf16.mxu0 0
        %3700 = vmatmul.mubr.bf16.gmra.mrb[0].mxu0 %v3566
        %v3701 = vpop.f32.mrb[0].mxu0
        %v3702 = vadd.f32 0.0, %v3701
        %v3703 = vpop.f32.mrb[0].mxu0
        %v3704 = vpop.f32.mrb[0].mxu0
        %v3705 = vadd.f32 0.0, %v3704
        %v3706 = vpop.f32.mrb[0].mxu0
        %3707 = vmatprep.mubr.bf16.mxu0 0
        %3708 = vmatmul.mubr.bf16.gmra.mrb[0].mxu0 %v3567
        %v3709 = vpop.f32.mrb[0].mxu0
        %v3710 = vadd.f32 0.0, %v3709
        %v3711 = vpop.f32.mrb[0].mxu0
        %v3712 = vpop.f32.mrb[0].mxu0
        %v3713 = vadd.f32 0.0, %v3712
        %v3714 = vpop.f32.mrb[0].mxu0
        %3715 = vmatprep.mubr.bf16.mxu0 0
        %3716 = vmatmul.mubr.bf16.gmra.mrb[0].mxu0 %v3568
        %v3717 = vpop.f32.mrb[0].mxu0
        %v3718 = vadd.f32 0.0, %v3717
        %v3719 = vpop.f32.mrb[0].mxu0
        %v3720 = vpop.f32.mrb[0].mxu0
        %v3721 = vadd.f32 0.0, %v3720
        %v3722 = vpop.f32.mrb[0].mxu0
        %3723 = vmatprep.mubr.bf16.mxu0 0
        %3724 = vmatmul.mubr.bf16.gmra.mrb[0].mxu0 %v3569
        %v3725 = vpop.f32.mrb[0].mxu0
        %v3726 = vadd.f32 0.0, %v3725
        %v3727 = vpop.f32.mrb[0].mxu0
        %v3728 = vpop.f32.mrb[0].mxu0
        %v3729 = vadd.f32 0.0, %v3728
        %v3730 = vpop.f32.mrb[0].mxu0
        %3731 = vmatprep.mubr.bf16.mxu0 0
        %3732 = vmatmul.mubr.bf16.gmra.mrb[0].mxu0 %v3570
        %v3733 = vpop.f32.mrb[0].mxu0
        %v3734 = vadd.f32 0.0, %v3733
        %v3735 = vpop.f32.mrb[0].mxu0
        %v3736 = vpop.f32.mrb[0].mxu0
        %v3737 = vadd.f32 0.0, %v3736
        %v3738 = vpop.f32.mrb[0].mxu0
        %3739 = vmatprep.mubr.bf16.mxu0 0
        %3740 = vmatmul.mubr.bf16.gmra.mrb[0].mxu0 %v3571
        %v3741 = vpop.f32.mrb[0].mxu0
        %v3742 = vadd.f32 0.0, %v3741
        %v3743 = vpop.f32.mrb[0].mxu0
        %v3744 = vpop.f32.mrb[0].mxu0
        %v3745 = vadd.f32 0.0, %v3744
        %v3746 = vpop.f32.mrb[0].mxu0
        %3747 = vmatprep.mubr.bf16.mxu0 0
        %3748 = vmatmul.mubr.bf16.gmra.mrb[0].mxu0 %v3572
        %v3749 = vpop.f32.mrb[0].mxu0
        %v3750 = vadd.f32 0.0, %v3749
        %v3751 = vpop.f32.mrb[0].mxu0
        %v3752 = vpop.f32.mrb[0].mxu0
        %v3753 = vadd.f32 0.0, %v3752
        %v3754 = vpop.f32.mrb[0].mxu0
        %3755 = vmatprep.mubr.bf16.mxu0 0
        %3756 = vmatmul.mubr.bf16.gmra.mrb[0].mxu0 %v3573
        %v3757 = vpop.f32.mrb[0].mxu0
        %v3758 = vadd.f32 0.0, %v3757
        %v3759 = vpop.f32.mrb[0].mxu0
        %v3760 = vpop.f32.mrb[0].mxu0
        %v3761 = vadd.f32 0.0, %v3760
        %v3762 = vpop.f32.mrb[0].mxu0
        %3763 = vmatprep.mubr.bf16.mxu0 0
        %3764 = vmatmul.mubr.bf16.gmra.mrb[0].mxu0 %v3574
        %v3765 = vpop.f32.mrb[0].mxu0
        %v3766 = vadd.f32 0.0, %v3765
        %v3767 = vpop.f32.mrb[0].mxu0
        %v3768 = vpop.f32.mrb[0].mxu0
        %v3769 = vadd.f32 0.0, %v3768
        %v3770 = vpop.f32.mrb[0].mxu0
        %3771 = vmatprep.mubr.bf16.mxu0 0
        %3772 = vmatmul.mubr.bf16.gmra.mrb[0].mxu0 %v3575
        %v3773 = vpop.f32.mrb[0].mxu0
        %v3774 = vadd.f32 0.0, %v3773
        %v3775 = vpop.f32.mrb[0].mxu0
        %v3776 = vpop.f32.mrb[0].mxu0
        %v3777 = vadd.f32 0.0, %v3776
        %v3778 = vpop.f32.mrb[0].mxu0
        %3779 = vmatprep.mubr.bf16.mxu0 0
        %3780 = vmatmul.mubr.bf16.gmra.mrb[0].mxu0 %v3576
        %v3781 = vpop.f32.mrb[0].mxu0
        %v3782 = vadd.f32 0.0, %v3781
        %v3783 = vpop.f32.mrb[0].mxu0
        %v3784 = vpop.f32.mrb[0].mxu0
        %v3785 = vadd.f32 0.0, %v3784
        %v3786 = vpop.f32.mrb[0].mxu0
        %3787 = vmatprep.mubr.bf16.mxu0 0
        %3788 = vmatmul.mubr.bf16.gmra.mrb[0].mxu0 %v3577
        %v3789 = vpop.f32.mrb[0].mxu0
        %v3790 = vadd.f32 0.0, %v3789
        %v3791 = vpop.f32.mrb[0].mxu0
        %v3792 = vpop.f32.mrb[0].mxu0
        %v3793 = vadd.f32 0.0, %v3792
        %v3794 = vpop.f32.mrb[0].mxu0
        %3795 = vmatprep.mubr.bf16.mxu0 0
        %3796 = vmatmul.mubr.bf16.gmra.mrb[0].mxu0 %v3578
        %v3797 = vpop.f32.mrb[0].mxu0
        %v3798 = vadd.f32 0.0, %v3797
        %v3799 = vpop.f32.mrb[0].mxu0
        %v3800 = vpop.f32.mrb[0].mxu0
        %v3801 = vadd.f32 0.0, %v3800
        %v3802 = vpop.f32.mrb[0].mxu0
        %3803 = vdwg.mxu0
        %v3804 = vadd.f32 %v3417, %v3678
        %v3805 = vadd.f32 %v3418, %v3681
        %v3806 = vadd.f32 %v3419, %v3686
        %v3807 = vadd.f32 %v3420, %v3689
        %v3808 = vadd.f32 %v3421, %v3694
        %v3809 = vadd.f32 %v3422, %v3697
        %v3810 = vadd.f32 %v3423, %v3702
        %v3811 = vadd.f32 %v3424, %v3705
        %v3812 = vadd.f32 %v3425, %v3710
        %v3813 = vadd.f32 %v3426, %v3713
        %v3814 = vadd.f32 %v3427, %v3718
        %v3815 = vadd.f32 %v3428, %v3721
        %v3816 = vadd.f32 %v3429, %v3726
        %v3817 = vadd.f32 %v3430, %v3729
        %v3818 = vadd.f32 %v3431, %v3734
        %v3819 = vadd.f32 %v3432, %v3737
        %v3820 = vadd.f32 %v3433, %v3742
        %v3821 = vadd.f32 %v3434, %v3745
        %v3822 = vadd.f32 %v3435, %v3750
        %v3823 = vadd.f32 %v3436, %v3753
        %v3824 = vadd.f32 %v3437, %v3758
        %v3825 = vadd.f32 %v3438, %v3761
        %v3826 = vadd.f32 %v3439, %v3766
        %v3827 = vadd.f32 %v3440, %v3769
        %v3828 = vadd.f32 %v3441, %v3774
        %v3829 = vadd.f32 %v3442, %v3777
        %v3830 = vadd.f32 %v3443, %v3782
        %v3831 = vadd.f32 %v3444, %v3785
        %v3832 = vadd.f32 %v3445, %v3790
        %v3833 = vadd.f32 %v3446, %v3793
        %v3834 = vadd.f32 %v3447, %v3798
        %v3835 = vadd.f32 %v3448, %v3801
        %v3836 = vld [vmem:[%s3449] sm:$0xf]
        %v3837 = vld [vmem:[%s3449 + $0x4] sm:$0xf]
        %v3838 = vld [vmem:[%s3449 + $0x8] sm:$0x1]
        %v3839 = vld [vmem:[%s3449 + $0xc] sm:$0xf]
        %v3840 = vld [vmem:[%s3449 + $0x10] sm:$0xf]
        %v3841 = vld [vmem:[%s3449 + $0x14] sm:$0x1]
        %v3842 = vld [vmem:[%s3449 + $0x18] sm:$0xf]
        %v3843 = vld [vmem:[%s3449 + $0x1c] sm:$0xf]
        %v3844 = vld [vmem:[%s3449 + $0x20] sm:$0x1]
        %v3845 = vld [vmem:[%s3449 + $0x24] sm:$0xf]
        %v3846 = vld [vmem:[%s3449 + $0x28] sm:$0xf]
        %v3847 = vld [vmem:[%s3449 + $0x2c] sm:$0x1]
        %v3848 = vld [vmem:[%s3449 + $0x30] sm:$0xf]
        %v3849 = vld [vmem:[%s3449 + $0x34] sm:$0xf]
        %v3850 = vld [vmem:[%s3449 + $0x38] sm:$0x1]
        %v3851 = vld [vmem:[%s3449 + $0x3c] sm:$0xf]
        %v3852 = vld [vmem:[%s3449 + $0x40] sm:$0xf]
        %v3853 = vld [vmem:[%s3449 + $0x44] sm:$0x1]
        %v3854 = vld [vmem:[%s3449 + $0x48] sm:$0xf]
        %v3855 = vld [vmem:[%s3449 + $0x4c] sm:$0xf]
        %v3856 = vld [vmem:[%s3449 + $0x50] sm:$0x1]
        %v3857 = vld [vmem:[%s3449 + $0x54] sm:$0xf]
        %v3858 = vld [vmem:[%s3449 + $0x58] sm:$0xf]
        %v3859 = vld [vmem:[%s3449 + $0x5c] sm:$0x1]
        %v3860 = vld [vmem:[%s3449 + $0x60] sm:$0xf]
        %v3861 = vld [vmem:[%s3449 + $0x64] sm:$0xf]
        %v3862 = vld [vmem:[%s3449 + $0x68] sm:$0x1]
        %v3863 = vld [vmem:[%s3449 + $0x6c] sm:$0xf]
        %v3864 = vld [vmem:[%s3449 + $0x70] sm:$0xf]
        %v3865 = vld [vmem:[%s3449 + $0x74] sm:$0x1]
        %v3866 = vld [vmem:[%s3449 + $0x78] sm:$0xf]
        %v3867 = vld [vmem:[%s3449 + $0x7c] sm:$0xf]
        %v3868 = vld [vmem:[%s3449 + $0x80] sm:$0x1]
        %v3869 = vld [vmem:[%s3449 + $0x84] sm:$0xf]
        %v3870 = vld [vmem:[%s3449 + $0x88] sm:$0xf]
        %v3871 = vld [vmem:[%s3449 + $0x8c] sm:$0x1]
        %v3872 = vld [vmem:[%s3449 + $0x90] sm:$0xf]
        %v3873 = vld [vmem:[%s3449 + $0x94] sm:$0xf]
        %v3874 = vld [vmem:[%s3449 + $0x98] sm:$0x1]
        %v3875 = vld [vmem:[%s3449 + $0x9c] sm:$0xf]
        %v3876 = vld [vmem:[%s3449 + $0xa0] sm:$0xf]
        %v3877 = vld [vmem:[%s3449 + $0xa4] sm:$0x1]
        %v3878 = vld [vmem:[%s3449 + $0xa8] sm:$0xf]
        %v3879 = vld [vmem:[%s3449 + $0xac] sm:$0xf]
        %v3880 = vld [vmem:[%s3449 + $0xb0] sm:$0x1]
        %v3881 = vld [vmem:[%s3449 + $0xb4] sm:$0xf]
        %v3882 = vld [vmem:[%s3449 + $0xb8] sm:$0xf]
        %v3883 = vld [vmem:[%s3449 + $0xbc] sm:$0x1]
        %v3885 = vshrl.u32 %v3836, 16
        %v3887 = vrot.slane %v3885, 4
        %v3888 = vshll.u32 %v3836, 16
        %v3890 = vrot.slane %v3888, 5
        %v3891 = vor.u32 %v3887, %v3890
        %v3892 = vrot.slane %v3891, 4
        %v3894 = vshll.u32 %v3837, 16
        %v3896 = vrot.slane %v3894, 5
        %v3897 = vsel %vm345, %v3892, %v3896
        %v3898 = vshrl.u32 %v3837, 16
        %v3900 = vrot.slane %v3898, 4
        %v3901 = vor.u32 %v3900, %v3896
        %v3902 = vrot.slane %v3901, 4
        %v3904 = vshll.u32 %v3838, 16
        %v3906 = vrot.slane %v3904, 5
        %v3907 = vsel %vm345, %v3902, %v3906
        %v3909 = vshrl.u32 %v3839, 16
        %v3911 = vrot.slane %v3909, 4
        %v3912 = vshll.u32 %v3839, 16
        %v3914 = vrot.slane %v3912, 5
        %v3915 = vor.u32 %v3911, %v3914
        %v3916 = vrot.slane %v3915, 4
        %v3918 = vshll.u32 %v3840, 16
        %v3920 = vrot.slane %v3918, 5
        %v3921 = vsel %vm345, %v3916, %v3920
        %v3922 = vshrl.u32 %v3840, 16
        %v3924 = vrot.slane %v3922, 4
        %v3925 = vor.u32 %v3924, %v3920
        %v3926 = vrot.slane %v3925, 4
        %v3928 = vshll.u32 %v3841, 16
        %v3930 = vrot.slane %v3928, 5
        %v3931 = vsel %vm345, %v3926, %v3930
        %v3933 = vshrl.u32 %v3842, 16
        %v3935 = vrot.slane %v3933, 4
        %v3936 = vshll.u32 %v3842, 16
        %v3938 = vrot.slane %v3936, 5
        %v3939 = vor.u32 %v3935, %v3938
        %v3940 = vrot.slane %v3939, 4
        %v3942 = vshll.u32 %v3843, 16
        %v3944 = vrot.slane %v3942, 5
        %v3945 = vsel %vm345, %v3940, %v3944
        %v3946 = vshrl.u32 %v3843, 16
        %v3948 = vrot.slane %v3946, 4
        %v3949 = vor.u32 %v3948, %v3944
        %v3950 = vrot.slane %v3949, 4
        %v3952 = vshll.u32 %v3844, 16
        %v3954 = vrot.slane %v3952, 5
        %v3955 = vsel %vm345, %v3950, %v3954
        %v3957 = vshrl.u32 %v3845, 16
        %v3959 = vrot.slane %v3957, 4
        %v3960 = vshll.u32 %v3845, 16
        %v3962 = vrot.slane %v3960, 5
        %v3963 = vor.u32 %v3959, %v3962
        %v3964 = vrot.slane %v3963, 4
        %v3966 = vshll.u32 %v3846, 16
        %v3968 = vrot.slane %v3966, 5
        %v3969 = vsel %vm345, %v3964, %v3968
        %v3970 = vshrl.u32 %v3846, 16
        %v3972 = vrot.slane %v3970, 4
        %v3973 = vor.u32 %v3972, %v3968
        %v3974 = vrot.slane %v3973, 4
        %v3976 = vshll.u32 %v3847, 16
        %v3978 = vrot.slane %v3976, 5
        %v3979 = vsel %vm345, %v3974, %v3978
        %v3981 = vshrl.u32 %v3848, 16
        %v3983 = vrot.slane %v3981, 4
        %v3984 = vshll.u32 %v3848, 16
        %v3986 = vrot.slane %v3984, 5
        %v3987 = vor.u32 %v3983, %v3986
        %v3988 = vrot.slane %v3987, 4
        %v3990 = vshll.u32 %v3849, 16
        %v3992 = vrot.slane %v3990, 5
        %v3993 = vsel %vm345, %v3988, %v3992
        %v3994 = vshrl.u32 %v3849, 16
        %v3996 = vrot.slane %v3994, 4
        %v3997 = vor.u32 %v3996, %v3992
        %v3998 = vrot.slane %v3997, 4
        %v4000 = vshll.u32 %v3850, 16
        %v4002 = vrot.slane %v4000, 5
        %v4003 = vsel %vm345, %v3998, %v4002
        %v4005 = vshrl.u32 %v3851, 16
        %v4007 = vrot.slane %v4005, 4
        %v4008 = vshll.u32 %v3851, 16
        %v4010 = vrot.slane %v4008, 5
        %v4011 = vor.u32 %v4007, %v4010
        %v4012 = vrot.slane %v4011, 4
        %v4014 = vshll.u32 %v3852, 16
        %v4016 = vrot.slane %v4014, 5
        %v4017 = vsel %vm345, %v4012, %v4016
        %v4018 = vshrl.u32 %v3852, 16
        %v4020 = vrot.slane %v4018, 4
        %v4021 = vor.u32 %v4020, %v4016
        %v4022 = vrot.slane %v4021, 4
        %v4024 = vshll.u32 %v3853, 16
        %v4026 = vrot.slane %v4024, 5
        %v4027 = vsel %vm345, %v4022, %v4026
        %v4029 = vshrl.u32 %v3854, 16
        %v4031 = vrot.slane %v4029, 4
        %v4032 = vshll.u32 %v3854, 16
        %v4034 = vrot.slane %v4032, 5
        %v4035 = vor.u32 %v4031, %v4034
        %v4036 = vrot.slane %v4035, 4
        %v4038 = vshll.u32 %v3855, 16
        %v4040 = vrot.slane %v4038, 5
        %v4041 = vsel %vm345, %v4036, %v4040
        %v4042 = vshrl.u32 %v3855, 16
        %v4044 = vrot.slane %v4042, 4
        %v4045 = vor.u32 %v4044, %v4040
        %v4046 = vrot.slane %v4045, 4
        %v4048 = vshll.u32 %v3856, 16
        %v4050 = vrot.slane %v4048, 5
        %v4051 = vsel %vm345, %v4046, %v4050
        %v4053 = vshrl.u32 %v3857, 16
        %v4055 = vrot.slane %v4053, 4
        %v4056 = vshll.u32 %v3857, 16
        %v4058 = vrot.slane %v4056, 5
        %v4059 = vor.u32 %v4055, %v4058
        %v4060 = vrot.slane %v4059, 4
        %v4062 = vshll.u32 %v3858, 16
        %v4064 = vrot.slane %v4062, 5
        %v4065 = vsel %vm345, %v4060, %v4064
        %v4066 = vshrl.u32 %v3858, 16
        %v4068 = vrot.slane %v4066, 4
        %v4069 = vor.u32 %v4068, %v4064
        %v4070 = vrot.slane %v4069, 4
        %v4072 = vshll.u32 %v3859, 16
        %v4074 = vrot.slane %v4072, 5
        %v4075 = vsel %vm345, %v4070, %v4074
        %v4077 = vshrl.u32 %v3860, 16
        %v4079 = vrot.slane %v4077, 4
        %v4080 = vshll.u32 %v3860, 16
        %v4082 = vrot.slane %v4080, 5
        %v4083 = vor.u32 %v4079, %v4082
        %v4084 = vrot.slane %v4083, 4
        %v4086 = vshll.u32 %v3861, 16
        %v4088 = vrot.slane %v4086, 5
        %v4089 = vsel %vm345, %v4084, %v4088
        %v4090 = vshrl.u32 %v3861, 16
        %v4092 = vrot.slane %v4090, 4
        %v4093 = vor.u32 %v4092, %v4088
        %v4094 = vrot.slane %v4093, 4
        %v4096 = vshll.u32 %v3862, 16
        %v4098 = vrot.slane %v4096, 5
        %v4099 = vsel %vm345, %v4094, %v4098
        %v4101 = vshrl.u32 %v3863, 16
        %v4103 = vrot.slane %v4101, 4
        %v4104 = vshll.u32 %v3863, 16
        %v4106 = vrot.slane %v4104, 5
        %v4107 = vor.u32 %v4103, %v4106
        %v4108 = vrot.slane %v4107, 4
        %v4110 = vshll.u32 %v3864, 16
        %v4112 = vrot.slane %v4110, 5
        %v4113 = vsel %vm345, %v4108, %v4112
        %v4114 = vshrl.u32 %v3864, 16
        %v4116 = vrot.slane %v4114, 4
        %v4117 = vor.u32 %v4116, %v4112
        %v4118 = vrot.slane %v4117, 4
        %v4120 = vshll.u32 %v3865, 16
        %v4122 = vrot.slane %v4120, 5
        %v4123 = vsel %vm345, %v4118, %v4122
        %v4125 = vshrl.u32 %v3866, 16
        %v4127 = vrot.slane %v4125, 4
        %v4128 = vshll.u32 %v3866, 16
        %v4130 = vrot.slane %v4128, 5
        %v4131 = vor.u32 %v4127, %v4130
        %v4132 = vrot.slane %v4131, 4
        %v4134 = vshll.u32 %v3867, 16
        %v4136 = vrot.slane %v4134, 5
        %v4137 = vsel %vm345, %v4132, %v4136
        %v4138 = vshrl.u32 %v3867, 16
        %v4140 = vrot.slane %v4138, 4
        %v4141 = vor.u32 %v4140, %v4136
        %v4142 = vrot.slane %v4141, 4
        %v4144 = vshll.u32 %v3868, 16
        %v4146 = vrot.slane %v4144, 5
        %v4147 = vsel %vm345, %v4142, %v4146
        %v4149 = vshrl.u32 %v3869, 16
        %v4151 = vrot.slane %v4149, 4
        %v4152 = vshll.u32 %v3869, 16
        %v4154 = vrot.slane %v4152, 5
        %v4155 = vor.u32 %v4151, %v4154
        %v4156 = vrot.slane %v4155, 4
        %v4158 = vshll.u32 %v3870, 16
        %v4160 = vrot.slane %v4158, 5
        %v4161 = vsel %vm345, %v4156, %v4160
        %v4162 = vshrl.u32 %v3870, 16
        %v4164 = vrot.slane %v4162, 4
        %v4165 = vor.u32 %v4164, %v4160
        %v4166 = vrot.slane %v4165, 4
        %v4168 = vshll.u32 %v3871, 16
        %v4170 = vrot.slane %v4168, 5
        %v4171 = vsel %vm345, %v4166, %v4170
        %v4173 = vshrl.u32 %v3872, 16
        %v4175 = vrot.slane %v4173, 4
        %v4176 = vshll.u32 %v3872, 16
        %v4178 = vrot.slane %v4176, 5
        %v4179 = vor.u32 %v4175, %v4178
        %v4180 = vrot.slane %v4179, 4
        %v4182 = vshll.u32 %v3873, 16
        %v4184 = vrot.slane %v4182, 5
        %v4185 = vsel %vm345, %v4180, %v4184
        %v4186 = vshrl.u32 %v3873, 16
        %v4188 = vrot.slane %v4186, 4
        %v4189 = vor.u32 %v4188, %v4184
        %v4190 = vrot.slane %v4189, 4
        %v4192 = vshll.u32 %v3874, 16
        %v4194 = vrot.slane %v4192, 5
        %v4195 = vsel %vm345, %v4190, %v4194
        %v4197 = vshrl.u32 %v3875, 16
        %v4199 = vrot.slane %v4197, 4
        %v4200 = vshll.u32 %v3875, 16
        %v4202 = vrot.slane %v4200, 5
        %v4203 = vor.u32 %v4199, %v4202
        %v4204 = vrot.slane %v4203, 4
        %v4206 = vshll.u32 %v3876, 16
        %v4208 = vrot.slane %v4206, 5
        %v4209 = vsel %vm345, %v4204, %v4208
        %v4210 = vshrl.u32 %v3876, 16
        %v4212 = vrot.slane %v4210, 4
        %v4213 = vor.u32 %v4212, %v4208
        %v4214 = vrot.slane %v4213, 4
        %v4216 = vshll.u32 %v3877, 16
        %v4218 = vrot.slane %v4216, 5
        %v4219 = vsel %vm345, %v4214, %v4218
        %v4221 = vshrl.u32 %v3878, 16
        %v4223 = vrot.slane %v4221, 4
        %v4224 = vshll.u32 %v3878, 16
        %v4226 = vrot.slane %v4224, 5
        %v4227 = vor.u32 %v4223, %v4226
        %v4228 = vrot.slane %v4227, 4
        %v4230 = vshll.u32 %v3879, 16
        %v4232 = vrot.slane %v4230, 5
        %v4233 = vsel %vm345, %v4228, %v4232
        %v4234 = vshrl.u32 %v3879, 16
        %v4236 = vrot.slane %v4234, 4
        %v4237 = vor.u32 %v4236, %v4232
        %v4238 = vrot.slane %v4237, 4
        %v4240 = vshll.u32 %v3880, 16
        %v4242 = vrot.slane %v4240, 5
        %v4243 = vsel %vm345, %v4238, %v4242
        %v4245 = vshrl.u32 %v3881, 16
        %v4247 = vrot.slane %v4245, 4
        %v4248 = vshll.u32 %v3881, 16
        %v4250 = vrot.slane %v4248, 5
        %v4251 = vor.u32 %v4247, %v4250
        %v4252 = vrot.slane %v4251, 4
        %v4254 = vshll.u32 %v3882, 16
        %v4256 = vrot.slane %v4254, 5
        %v4257 = vsel %vm345, %v4252, %v4256
        %v4258 = vshrl.u32 %v3882, 16
        %v4260 = vrot.slane %v4258, 4
        %v4261 = vor.u32 %v4260, %v4256
        %v4262 = vrot.slane %v4261, 4
        %v4264 = vshll.u32 %v3883, 16
        %v4266 = vrot.slane %v4264, 5
        %v4267 = vsel %vm345, %v4262, %v4266
        %s4268 = scalar_lea.vmem %s1, 448
        %v4269 = vld [vmem:[%s4268] sm:$0xf]
        %v4270 = vld [vmem:[%s4268 + $0x4] sm:$0xf]
        %v4271 = vld [vmem:[%s4268 + $0x8] sm:$0xf]
        %v4272 = vld [vmem:[%s4268 + $0xc] sm:$0xf]
        %v4273 = vld [vmem:[%s4268 + $0x10] sm:$0xf]
        %v4274 = vld [vmem:[%s4268 + $0x14] sm:$0xf]
        %v4275 = vld [vmem:[%s4268 + $0x18] sm:$0xf]
        %v4276 = vld [vmem:[%s4268 + $0x1c] sm:$0xf]
        %v4277 = vld [vmem:[%s4268 + $0x20] sm:$0xf]
        %v4278 = vld [vmem:[%s4268 + $0x24] sm:$0xf]
        %v4279 = vld [vmem:[%s4268 + $0x28] sm:$0xf]
        %v4280 = vld [vmem:[%s4268 + $0x2c] sm:$0xf]
        %v4281 = vld [vmem:[%s4268 + $0x30] sm:$0xf]
        %v4282 = vld [vmem:[%s4268 + $0x34] sm:$0xf]
        %v4283 = vld [vmem:[%s4268 + $0x38] sm:$0xf]
        %v4284 = vld [vmem:[%s4268 + $0x3c] sm:$0xf]
        %v4285 = vunpack.c.l.b16 %v3897
        %v4286 = vunpack.c.l.b16 %v3907
        %v4287 = vunpack.c.l.b16 %v3921
        %v4288 = vunpack.c.l.b16 %v3931
        %v4289 = vunpack.c.l.b16 %v3945
        %v4290 = vunpack.c.l.b16 %v3955
        %v4291 = vunpack.c.l.b16 %v3969
        %v4292 = vunpack.c.l.b16 %v3979
        %v4293 = vunpack.c.l.b16 %v3993
        %v4294 = vunpack.c.l.b16 %v4003
        %v4295 = vunpack.c.l.b16 %v4017
        %v4296 = vunpack.c.l.b16 %v4027
        %v4297 = vunpack.c.l.b16 %v4041
        %v4298 = vunpack.c.l.b16 %v4051
        %v4299 = vunpack.c.l.b16 %v4065
        %v4300 = vunpack.c.l.b16 %v4075
        %v4301 = vunpack.c.l.b16 %v4089
        %v4302 = vunpack.c.l.b16 %v4099
        %v4303 = vunpack.c.l.b16 %v4113
        %v4304 = vunpack.c.l.b16 %v4123
        %v4305 = vunpack.c.l.b16 %v4137
        %v4306 = vunpack.c.l.b16 %v4147
        %v4307 = vunpack.c.l.b16 %v4161
        %v4308 = vunpack.c.l.b16 %v4171
        %v4309 = vunpack.c.l.b16 %v4185
        %v4310 = vunpack.c.l.b16 %v4195
        %v4311 = vunpack.c.l.b16 %v4209
        %v4312 = vunpack.c.l.b16 %v4219
        %v4313 = vunpack.c.l.b16 %v4233
        %v4314 = vunpack.c.l.b16 %v4243
        %v4315 = vunpack.c.l.b16 %v4257
        %v4316 = vunpack.c.l.b16 %v4267
        %v4317 = vpack.c.b16 %v4286, %v4285
        %v4318 = vpack.c.b16 %v4288, %v4287
        %v4319 = vpack.c.b16 %v4290, %v4289
        %v4320 = vpack.c.b16 %v4292, %v4291
        %v4321 = vpack.c.b16 %v4294, %v4293
        %v4322 = vpack.c.b16 %v4296, %v4295
        %v4323 = vpack.c.b16 %v4298, %v4297
        %v4324 = vpack.c.b16 %v4300, %v4299
        %v4325 = vpack.c.b16 %v4302, %v4301
        %v4326 = vpack.c.b16 %v4304, %v4303
        %v4327 = vpack.c.b16 %v4306, %v4305
        %v4328 = vpack.c.b16 %v4308, %v4307
        %v4329 = vpack.c.b16 %v4310, %v4309
        %v4330 = vpack.c.b16 %v4312, %v4311
        %v4331 = vpack.c.b16 %v4314, %v4313
        %v4332 = vpack.c.b16 %v4316, %v4315
        %v4365 = vunpack.c.l.b16 %v4269
        %v4366 = vunpack.c.l.b16 %v4270
        %v4367 = vunpack.c.l.b16 %v4271
        %v4368 = vunpack.c.l.b16 %v4272
        %v4369 = vunpack.c.l.b16 %v4273
        %v4370 = vunpack.c.l.b16 %v4274
        %v4371 = vunpack.c.l.b16 %v4275
        %v4372 = vunpack.c.l.b16 %v4276
        %v4373 = vunpack.c.l.b16 %v4277
        %v4374 = vunpack.c.l.b16 %v4278
        %v4375 = vunpack.c.l.b16 %v4279
        %v4376 = vunpack.c.l.b16 %v4280
        %v4377 = vunpack.c.l.b16 %v4281
        %v4378 = vunpack.c.l.b16 %v4282
        %v4379 = vunpack.c.l.b16 %v4283
        %v4380 = vunpack.c.l.b16 %v4284
        %v4381 = vpack.c.b16 %v4366, %v4365
        %v4382 = vpack.c.b16 %v4368, %v4367
        %v4383 = vpack.c.b16 %v4370, %v4369
        %v4384 = vpack.c.b16 %v4372, %v4371
        %v4385 = vpack.c.b16 %v4374, %v4373
        %v4386 = vpack.c.b16 %v4376, %v4375
        %v4387 = vpack.c.b16 %v4378, %v4377
        %v4388 = vpack.c.b16 %v4380, %v4379
        %4397 = vmatprep.subr.bf16.mxu0 0
        %4398 = vmatpush1.bf16.msra.mxu0 %v4381
        %4399 = vmatprep.subr.bf16.mxu0 0
        %4400 = vmatpush1.bf16.msra.mxu0 %v4382
        %4401 = vmatprep.subr.bf16.mxu0 0
        %4402 = vmatpush1.bf16.msra.mxu0 %v4383
        %4403 = vmatprep.subr.bf16.mxu0 0
        %4404 = vmatpush1.bf16.msra.mxu0 %v4384
        %4405 = vmatprep.subr.bf16.mxu0 0
        %4406 = vmatpush1.bf16.msra.mxu0 %v4385
        %4407 = vmatprep.subr.bf16.mxu0 0
        %4408 = vmatpush1.bf16.msra.mxu0 %v4386
        %4409 = vmatprep.subr.bf16.mxu0 0
        %4410 = vmatpush1.bf16.msra.mxu0 %v4387
        %4411 = vmatprep.subr.bf16.mxu0 0
        %4412 = vmatpush1.bf16.msra.mxu0 %v4388
        %4413 = vmatprep.subr.bf16.mxu0 0
        %4414 = vmatpush1.bf16.msra.mxu0 0
        %4415 = vmatprep.subr.bf16.mxu0 0
        %4416 = vmatpush1.bf16.msra.mxu0 0
        %4417 = vmatprep.subr.bf16.mxu0 0
        %4418 = vmatpush1.bf16.msra.mxu0 0
        %4419 = vmatprep.subr.bf16.mxu0 0
        %4420 = vmatpush1.bf16.msra.mxu0 0
        %4421 = vmatprep.subr.bf16.mxu0 0
        %4422 = vmatpush1.bf16.msra.mxu0 0
        %4423 = vmatprep.subr.bf16.mxu0 0
        %4424 = vmatpush1.bf16.msra.mxu0 0
        %4425 = vmatprep.subr.bf16.mxu0 0
        %4426 = vmatpush1.bf16.msra.mxu0 0
        %4427 = vmatprep.subr.bf16.mxu0 0
        %4428 = vmatpush1.bf16.msra.mxu0 0
        %4429 = vmatprep.mubr.bf16.mxu0 0
        %4430 = vmatmul.mubr.bf16.gmra.mrb[0].mxu0 %v4317
        %v4431 = vpop.f32.mrb[0].mxu0
        %v4432 = vadd.f32 0.0, %v4431
        %v4433 = vpop.f32.mrb[0].mxu0
        %v4434 = vpop.f32.mrb[0].mxu0
        %v4435 = vadd.f32 0.0, %v4434
        %v4436 = vpop.f32.mrb[0].mxu0
        %4437 = vmatprep.mubr.bf16.mxu0 0
        %4438 = vmatmul.mubr.bf16.gmra.mrb[0].mxu0 %v4318
        %v4439 = vpop.f32.mrb[0].mxu0
        %v4440 = vadd.f32 0.0, %v4439
        %v4441 = vpop.f32.mrb[0].mxu0
        %v4442 = vpop.f32.mrb[0].mxu0
        %v4443 = vadd.f32 0.0, %v4442
        %v4444 = vpop.f32.mrb[0].mxu0
        %4445 = vmatprep.mubr.bf16.mxu0 0
        %4446 = vmatmul.mubr.bf16.gmra.mrb[0].mxu0 %v4319
        %v4447 = vpop.f32.mrb[0].mxu0
        %v4448 = vadd.f32 0.0, %v4447
        %v4449 = vpop.f32.mrb[0].mxu0
        %v4450 = vpop.f32.mrb[0].mxu0
        %v4451 = vadd.f32 0.0, %v4450
        %v4452 = vpop.f32.mrb[0].mxu0
        %4453 = vmatprep.mubr.bf16.mxu0 0
        %4454 = vmatmul.mubr.bf16.gmra.mrb[0].mxu0 %v4320
        %v4455 = vpop.f32.mrb[0].mxu0
        %v4456 = vadd.f32 0.0, %v4455
        %v4457 = vpop.f32.mrb[0].mxu0
        %v4458 = vpop.f32.mrb[0].mxu0
        %v4459 = vadd.f32 0.0, %v4458
        %v4460 = vpop.f32.mrb[0].mxu0
        %4461 = vmatprep.mubr.bf16.mxu0 0
        %4462 = vmatmul.mubr.bf16.gmra.mrb[0].mxu0 %v4321
        %v4463 = vpop.f32.mrb[0].mxu0
        %v4464 = vadd.f32 0.0, %v4463
        %v4465 = vpop.f32.mrb[0].mxu0
        %v4466 = vpop.f32.mrb[0].mxu0
        %v4467 = vadd.f32 0.0, %v4466
        %v4468 = vpop.f32.mrb[0].mxu0
        %4469 = vmatprep.mubr.bf16.mxu0 0
        %4470 = vmatmul.mubr.bf16.gmra.mrb[0].mxu0 %v4322
        %v4471 = vpop.f32.mrb[0].mxu0
        %v4472 = vadd.f32 0.0, %v4471
        %v4473 = vpop.f32.mrb[0].mxu0
        %v4474 = vpop.f32.mrb[0].mxu0
        %v4475 = vadd.f32 0.0, %v4474
        %v4476 = vpop.f32.mrb[0].mxu0
        %4477 = vmatprep.mubr.bf16.mxu0 0
        %4478 = vmatmul.mubr.bf16.gmra.mrb[0].mxu0 %v4323
        %v4479 = vpop.f32.mrb[0].mxu0
        %v4480 = vadd.f32 0.0, %v4479
        %v4481 = vpop.f32.mrb[0].mxu0
        %v4482 = vpop.f32.mrb[0].mxu0
        %v4483 = vadd.f32 0.0, %v4482
        %v4484 = vpop.f32.mrb[0].mxu0
        %4485 = vmatprep.mubr.bf16.mxu0 0
        %4486 = vmatmul.mubr.bf16.gmra.mrb[0].mxu0 %v4324
        %v4487 = vpop.f32.mrb[0].mxu0
        %v4488 = vadd.f32 0.0, %v4487
        %v4489 = vpop.f32.mrb[0].mxu0
        %v4490 = vpop.f32.mrb[0].mxu0
        %v4491 = vadd.f32 0.0, %v4490
        %v4492 = vpop.f32.mrb[0].mxu0
        %4493 = vmatprep.mubr.bf16.mxu0 0
        %4494 = vmatmul.mubr.bf16.gmra.mrb[0].mxu0 %v4325
        %v4495 = vpop.f32.mrb[0].mxu0
        %v4496 = vadd.f32 0.0, %v4495
        %v4497 = vpop.f32.mrb[0].mxu0
        %v4498 = vpop.f32.mrb[0].mxu0
        %v4499 = vadd.f32 0.0, %v4498
        %v4500 = vpop.f32.mrb[0].mxu0
        %4501 = vmatprep.mubr.bf16.mxu0 0
        %4502 = vmatmul.mubr.bf16.gmra.mrb[0].mxu0 %v4326
        %v4503 = vpop.f32.mrb[0].mxu0
        %v4504 = vadd.f32 0.0, %v4503
        %v4505 = vpop.f32.mrb[0].mxu0
        %v4506 = vpop.f32.mrb[0].mxu0
        %v4507 = vadd.f32 0.0, %v4506
        %v4508 = vpop.f32.mrb[0].mxu0
        %4509 = vmatprep.mubr.bf16.mxu0 0
        %4510 = vmatmul.mubr.bf16.gmra.mrb[0].mxu0 %v4327
        %v4511 = vpop.f32.mrb[0].mxu0
        %v4512 = vadd.f32 0.0, %v4511
        %v4513 = vpop.f32.mrb[0].mxu0
        %v4514 = vpop.f32.mrb[0].mxu0
        %v4515 = vadd.f32 0.0, %v4514
        %v4516 = vpop.f32.mrb[0].mxu0
        %4517 = vmatprep.mubr.bf16.mxu0 0
        %4518 = vmatmul.mubr.bf16.gmra.mrb[0].mxu0 %v4328
        %v4519 = vpop.f32.mrb[0].mxu0
        %v4520 = vadd.f32 0.0, %v4519
        %v4521 = vpop.f32.mrb[0].mxu0
        %v4522 = vpop.f32.mrb[0].mxu0
        %v4523 = vadd.f32 0.0, %v4522
        %v4524 = vpop.f32.mrb[0].mxu0
        %4525 = vmatprep.mubr.bf16.mxu0 0
        %4526 = vmatmul.mubr.bf16.gmra.mrb[0].mxu0 %v4329
        %v4527 = vpop.f32.mrb[0].mxu0
        %v4528 = vadd.f32 0.0, %v4527
        %v4529 = vpop.f32.mrb[0].mxu0
        %v4530 = vpop.f32.mrb[0].mxu0
        %v4531 = vadd.f32 0.0, %v4530
        %v4532 = vpop.f32.mrb[0].mxu0
        %4533 = vmatprep.mubr.bf16.mxu0 0
        %4534 = vmatmul.mubr.bf16.gmra.mrb[0].mxu0 %v4330
        %v4535 = vpop.f32.mrb[0].mxu0
        %v4536 = vadd.f32 0.0, %v4535
        %v4537 = vpop.f32.mrb[0].mxu0
        %v4538 = vpop.f32.mrb[0].mxu0
        %v4539 = vadd.f32 0.0, %v4538
        %v4540 = vpop.f32.mrb[0].mxu0
        %4541 = vmatprep.mubr.bf16.mxu0 0
        %4542 = vmatmul.mubr.bf16.gmra.mrb[0].mxu0 %v4331
        %v4543 = vpop.f32.mrb[0].mxu0
        %v4544 = vadd.f32 0.0, %v4543
        %v4545 = vpop.f32.mrb[0].mxu0
        %v4546 = vpop.f32.mrb[0].mxu0
        %v4547 = vadd.f32 0.0, %v4546
        %v4548 = vpop.f32.mrb[0].mxu0
        %4549 = vmatprep.mubr.bf16.mxu0 0
        %4550 = vmatmul.mubr.bf16.gmra.mrb[0].mxu0 %v4332
        %v4551 = vpop.f32.mrb[0].mxu0
        %v4552 = vadd.f32 0.0, %v4551
        %v4553 = vpop.f32.mrb[0].mxu0
        %v4554 = vpop.f32.mrb[0].mxu0
        %v4555 = vadd.f32 0.0, %v4554
        %v4556 = vpop.f32.mrb[0].mxu0
        %4557 = vdwg.mxu0
        %v4558 = vadd.f32 %v3804, %v4432
        %v4559 = vadd.f32 %v3805, %v4435
        %v4560 = vadd.f32 %v3806, %v4440
        %v4561 = vadd.f32 %v3807, %v4443
        %v4562 = vadd.f32 %v3808, %v4448
        %v4563 = vadd.f32 %v3809, %v4451
        %v4564 = vadd.f32 %v3810, %v4456
        %v4565 = vadd.f32 %v3811, %v4459
        %v4566 = vadd.f32 %v3812, %v4464
        %v4567 = vadd.f32 %v3813, %v4467
        %v4568 = vadd.f32 %v3814, %v4472
        %v4569 = vadd.f32 %v3815, %v4475
        %v4570 = vadd.f32 %v3816, %v4480
        %v4571 = vadd.f32 %v3817, %v4483
        %v4572 = vadd.f32 %v3818, %v4488
        %v4573 = vadd.f32 %v3819, %v4491
        %v4574 = vadd.f32 %v3820, %v4496
        %v4575 = vadd.f32 %v3821, %v4499
        %v4576 = vadd.f32 %v3822, %v4504
        %v4577 = vadd.f32 %v3823, %v4507
        %v4578 = vadd.f32 %v3824, %v4512
        %v4579 = vadd.f32 %v3825, %v4515
        %v4580 = vadd.f32 %v3826, %v4520
        %v4581 = vadd.f32 %v3827, %v4523
        %v4582 = vadd.f32 %v3828, %v4528
        %v4583 = vadd.f32 %v3829, %v4531
        %v4584 = vadd.f32 %v3830, %v4536
        %v4585 = vadd.f32 %v3831, %v4539
        %v4586 = vadd.f32 %v3832, %v4544
        %v4587 = vadd.f32 %v3833, %v4547
        %v4588 = vadd.f32 %v3834, %v4552
        %v4589 = vadd.f32 %v3835, %v4555
        %v4590 = vld [vmem:[%s3449] sm:$0xe]
        %v4591 = vld [vmem:[%s3449 + $0xc] sm:$0xe]
        %v4592 = vld [vmem:[%s3449 + $0x18] sm:$0xe]
        %v4593 = vld [vmem:[%s3449 + $0x24] sm:$0xe]
        %v4594 = vld [vmem:[%s3449 + $0x30] sm:$0xe]
        %v4595 = vld [vmem:[%s3449 + $0x3c] sm:$0xe]
        %v4596 = vld [vmem:[%s3449 + $0x48] sm:$0xe]
        %v4597 = vld [vmem:[%s3449 + $0x54] sm:$0xe]
        %v4598 = vld [vmem:[%s3449 + $0x60] sm:$0xe]
        %v4599 = vld [vmem:[%s3449 + $0x6c] sm:$0xe]
        %v4600 = vld [vmem:[%s3449 + $0x78] sm:$0xe]
        %v4601 = vld [vmem:[%s3449 + $0x84] sm:$0xe]
        %v4602 = vld [vmem:[%s3449 + $0x90] sm:$0xe]
        %v4603 = vld [vmem:[%s3449 + $0x9c] sm:$0xe]
        %v4604 = vld [vmem:[%s3449 + $0xa8] sm:$0xe]
        %v4605 = vld [vmem:[%s3449 + $0xb4] sm:$0xe]
        %v4654 = vrot.slane %v4590, 5
        %v4655 = vrot.slane %v4654, 4
        %v4656 = vrot.slane %v3837, 5
        %v4657 = vsel %vm1375, %v4655, %v4656
        %v4658 = vrot.slane %v4656, 4
        %v4659 = vrot.slane %v3838, 5
        %v4660 = vsel %vm1375, %v4658, %v4659
        %v4661 = vrot.slane %v4591, 5
        %v4662 = vrot.slane %v4661, 4
        %v4663 = vrot.slane %v3840, 5
        %v4664 = vsel %vm1375, %v4662, %v4663
        %v4665 = vrot.slane %v4663, 4
        %v4666 = vrot.slane %v3841, 5
        %v4667 = vsel %vm1375, %v4665, %v4666
        %v4668 = vrot.slane %v4592, 5
        %v4669 = vrot.slane %v4668, 4
        %v4670 = vrot.slane %v3843, 5
        %v4671 = vsel %vm1375, %v4669, %v4670
        %v4672 = vrot.slane %v4670, 4
        %v4673 = vrot.slane %v3844, 5
        %v4674 = vsel %vm1375, %v4672, %v4673
        %v4675 = vrot.slane %v4593, 5
        %v4676 = vrot.slane %v4675, 4
        %v4677 = vrot.slane %v3846, 5
        %v4678 = vsel %vm1375, %v4676, %v4677
        %v4679 = vrot.slane %v4677, 4
        %v4680 = vrot.slane %v3847, 5
        %v4681 = vsel %vm1375, %v4679, %v4680
        %v4682 = vrot.slane %v4594, 5
        %v4683 = vrot.slane %v4682, 4
        %v4684 = vrot.slane %v3849, 5
        %v4685 = vsel %vm1375, %v4683, %v4684
        %v4686 = vrot.slane %v4684, 4
        %v4687 = vrot.slane %v3850, 5
        %v4688 = vsel %vm1375, %v4686, %v4687
        %v4689 = vrot.slane %v4595, 5
        %v4690 = vrot.slane %v4689, 4
        %v4691 = vrot.slane %v3852, 5
        %v4692 = vsel %vm1375, %v4690, %v4691
        %v4693 = vrot.slane %v4691, 4
        %v4694 = vrot.slane %v3853, 5
        %v4695 = vsel %vm1375, %v4693, %v4694
        %v4696 = vrot.slane %v4596, 5
        %v4697 = vrot.slane %v4696, 4
        %v4698 = vrot.slane %v3855, 5
        %v4699 = vsel %vm1375, %v4697, %v4698
        %v4700 = vrot.slane %v4698, 4
        %v4701 = vrot.slane %v3856, 5
        %v4702 = vsel %vm1375, %v4700, %v4701
        %v4703 = vrot.slane %v4597, 5
        %v4704 = vrot.slane %v4703, 4
        %v4705 = vrot.slane %v3858, 5
        %v4706 = vsel %vm1375, %v4704, %v4705
        %v4707 = vrot.slane %v4705, 4
        %v4708 = vrot.slane %v3859, 5
        %v4709 = vsel %vm1375, %v4707, %v4708
        %v4710 = vrot.slane %v4598, 5
        %v4711 = vrot.slane %v4710, 4
        %v4712 = vrot.slane %v3861, 5
        %v4713 = vsel %vm1375, %v4711, %v4712
        %v4714 = vrot.slane %v4712, 4
        %v4715 = vrot.slane %v3862, 5
        %v4716 = vsel %vm1375, %v4714, %v4715
        %v4717 = vrot.slane %v4599, 5
        %v4718 = vrot.slane %v4717, 4
        %v4719 = vrot.slane %v3864, 5
        %v4720 = vsel %vm1375, %v4718, %v4719
        %v4721 = vrot.slane %v4719, 4
        %v4722 = vrot.slane %v3865, 5
        %v4723 = vsel %vm1375, %v4721, %v4722
        %v4724 = vrot.slane %v4600, 5
        %v4725 = vrot.slane %v4724, 4
        %v4726 = vrot.slane %v3867, 5
        %v4727 = vsel %vm1375, %v4725, %v4726
        %v4728 = vrot.slane %v4726, 4
        %v4729 = vrot.slane %v3868, 5
        %v4730 = vsel %vm1375, %v4728, %v4729
        %v4731 = vrot.slane %v4601, 5
        %v4732 = vrot.slane %v4731, 4
        %v4733 = vrot.slane %v3870, 5
        %v4734 = vsel %vm1375, %v4732, %v4733
        %v4735 = vrot.slane %v4733, 4
        %v4736 = vrot.slane %v3871, 5
        %v4737 = vsel %vm1375, %v4735, %v4736
        %v4738 = vrot.slane %v4602, 5
        %v4739 = vrot.slane %v4738, 4
        %v4740 = vrot.slane %v3873, 5
        %v4741 = vsel %vm1375, %v4739, %v4740
        %v4742 = vrot.slane %v4740, 4
        %v4743 = vrot.slane %v3874, 5
        %v4744 = vsel %vm1375, %v4742, %v4743
        %v4745 = vrot.slane %v4603, 5
        %v4746 = vrot.slane %v4745, 4
        %v4747 = vrot.slane %v3876, 5
        %v4748 = vsel %vm1375, %v4746, %v4747
        %v4749 = vrot.slane %v4747, 4
        %v4750 = vrot.slane %v3877, 5
        %v4751 = vsel %vm1375, %v4749, %v4750
        %v4752 = vrot.slane %v4604, 5
        %v4753 = vrot.slane %v4752, 4
        %v4754 = vrot.slane %v3879, 5
        %v4755 = vsel %vm1375, %v4753, %v4754
        %v4756 = vrot.slane %v4754, 4
        %v4757 = vrot.slane %v3880, 5
        %v4758 = vsel %vm1375, %v4756, %v4757
        %v4759 = vrot.slane %v4605, 5
        %v4760 = vrot.slane %v4759, 4
        %v4761 = vrot.slane %v3882, 5
        %v4762 = vsel %vm1375, %v4760, %v4761
        %v4763 = vrot.slane %v4761, 4
        %v4764 = vrot.slane %v3883, 5
        %v4765 = vsel %vm1375, %v4763, %v4764
        %s4766 = scalar_lea.vmem %s1, 512
        %v4767 = vld [vmem:[%s4766] sm:$0xf]
        %v4768 = vld [vmem:[%s4766 + $0x4] sm:$0xf]
        %v4769 = vld [vmem:[%s4766 + $0x8] sm:$0xf]
        %v4770 = vld [vmem:[%s4766 + $0xc] sm:$0xf]
        %v4771 = vld [vmem:[%s4766 + $0x10] sm:$0xf]
        %v4772 = vld [vmem:[%s4766 + $0x14] sm:$0xf]
        %v4773 = vld [vmem:[%s4766 + $0x18] sm:$0xf]
        %v4774 = vld [vmem:[%s4766 + $0x1c] sm:$0xf]
        %v4775 = vld [vmem:[%s4766 + $0x20] sm:$0xf]
        %v4776 = vld [vmem:[%s4766 + $0x24] sm:$0xf]
        %v4777 = vld [vmem:[%s4766 + $0x28] sm:$0xf]
        %v4778 = vld [vmem:[%s4766 + $0x2c] sm:$0xf]
        %v4779 = vld [vmem:[%s4766 + $0x30] sm:$0xf]
        %v4780 = vld [vmem:[%s4766 + $0x34] sm:$0xf]
        %v4781 = vld [vmem:[%s4766 + $0x38] sm:$0xf]
        %v4782 = vld [vmem:[%s4766 + $0x3c] sm:$0xf]
        %v4783 = vunpack.c.l.b16 %v4657
        %v4784 = vunpack.c.l.b16 %v4660
        %v4785 = vunpack.c.l.b16 %v4664
        %v4786 = vunpack.c.l.b16 %v4667
        %v4787 = vunpack.c.l.b16 %v4671
        %v4788 = vunpack.c.l.b16 %v4674
        %v4789 = vunpack.c.l.b16 %v4678
        %v4790 = vunpack.c.l.b16 %v4681
        %v4791 = vunpack.c.l.b16 %v4685
        %v4792 = vunpack.c.l.b16 %v4688
        %v4793 = vunpack.c.l.b16 %v4692
        %v4794 = vunpack.c.l.b16 %v4695
        %v4795 = vunpack.c.l.b16 %v4699
        %v4796 = vunpack.c.l.b16 %v4702
        %v4797 = vunpack.c.l.b16 %v4706
        %v4798 = vunpack.c.l.b16 %v4709
        %v4799 = vunpack.c.l.b16 %v4713
        %v4800 = vunpack.c.l.b16 %v4716
        %v4801 = vunpack.c.l.b16 %v4720
        %v4802 = vunpack.c.l.b16 %v4723
        %v4803 = vunpack.c.l.b16 %v4727
        %v4804 = vunpack.c.l.b16 %v4730
        %v4805 = vunpack.c.l.b16 %v4734
        %v4806 = vunpack.c.l.b16 %v4737
        %v4807 = vunpack.c.l.b16 %v4741
        %v4808 = vunpack.c.l.b16 %v4744
        %v4809 = vunpack.c.l.b16 %v4748
        %v4810 = vunpack.c.l.b16 %v4751
        %v4811 = vunpack.c.l.b16 %v4755
        %v4812 = vunpack.c.l.b16 %v4758
        %v4813 = vunpack.c.l.b16 %v4762
        %v4814 = vunpack.c.l.b16 %v4765
        %v4815 = vpack.c.b16 %v4784, %v4783
        %v4816 = vpack.c.b16 %v4786, %v4785
        %v4817 = vpack.c.b16 %v4788, %v4787
        %v4818 = vpack.c.b16 %v4790, %v4789
        %v4819 = vpack.c.b16 %v4792, %v4791
        %v4820 = vpack.c.b16 %v4794, %v4793
        %v4821 = vpack.c.b16 %v4796, %v4795
        %v4822 = vpack.c.b16 %v4798, %v4797
        %v4823 = vpack.c.b16 %v4800, %v4799
        %v4824 = vpack.c.b16 %v4802, %v4801
        %v4825 = vpack.c.b16 %v4804, %v4803
        %v4826 = vpack.c.b16 %v4806, %v4805
        %v4827 = vpack.c.b16 %v4808, %v4807
        %v4828 = vpack.c.b16 %v4810, %v4809
        %v4829 = vpack.c.b16 %v4812, %v4811
        %v4830 = vpack.c.b16 %v4814, %v4813
        %v4863 = vunpack.c.l.b16 %v4767
        %v4864 = vunpack.c.l.b16 %v4768
        %v4865 = vunpack.c.l.b16 %v4769
        %v4866 = vunpack.c.l.b16 %v4770
        %v4867 = vunpack.c.l.b16 %v4771
        %v4868 = vunpack.c.l.b16 %v4772
        %v4869 = vunpack.c.l.b16 %v4773
        %v4870 = vunpack.c.l.b16 %v4774
        %v4871 = vunpack.c.l.b16 %v4775
        %v4872 = vunpack.c.l.b16 %v4776
        %v4873 = vunpack.c.l.b16 %v4777
        %v4874 = vunpack.c.l.b16 %v4778
        %v4875 = vunpack.c.l.b16 %v4779
        %v4876 = vunpack.c.l.b16 %v4780
        %v4877 = vunpack.c.l.b16 %v4781
        %v4878 = vunpack.c.l.b16 %v4782
        %v4879 = vpack.c.b16 %v4864, %v4863
        %v4880 = vpack.c.b16 %v4866, %v4865
        %v4881 = vpack.c.b16 %v4868, %v4867
        %v4882 = vpack.c.b16 %v4870, %v4869
        %v4883 = vpack.c.b16 %v4872, %v4871
        %v4884 = vpack.c.b16 %v4874, %v4873
        %v4885 = vpack.c.b16 %v4876, %v4875
        %v4886 = vpack.c.b16 %v4878, %v4877
        %4895 = vmatprep.subr.bf16.mxu0 0
        %4896 = vmatpush1.bf16.msra.mxu0 %v4879
        %4897 = vmatprep.subr.bf16.mxu0 0
        %4898 = vmatpush1.bf16.msra.mxu0 %v4880
        %4899 = vmatprep.subr.bf16.mxu0 0
        %4900 = vmatpush1.bf16.msra.mxu0 %v4881
        %4901 = vmatprep.subr.bf16.mxu0 0
        %4902 = vmatpush1.bf16.msra.mxu0 %v4882
        %4903 = vmatprep.subr.bf16.mxu0 0
        %4904 = vmatpush1.bf16.msra.mxu0 %v4883
        %4905 = vmatprep.subr.bf16.mxu0 0
        %4906 = vmatpush1.bf16.msra.mxu0 %v4884
        %4907 = vmatprep.subr.bf16.mxu0 0
        %4908 = vmatpush1.bf16.msra.mxu0 %v4885
        %4909 = vmatprep.subr.bf16.mxu0 0
        %4910 = vmatpush1.bf16.msra.mxu0 %v4886
        %4911 = vmatprep.subr.bf16.mxu0 0
        %4912 = vmatpush1.bf16.msra.mxu0 0
        %4913 = vmatprep.subr.bf16.mxu0 0
        %4914 = vmatpush1.bf16.msra.mxu0 0
        %4915 = vmatprep.subr.bf16.mxu0 0
        %4916 = vmatpush1.bf16.msra.mxu0 0
        %4917 = vmatprep.subr.bf16.mxu0 0
        %4918 = vmatpush1.bf16.msra.mxu0 0
        %4919 = vmatprep.subr.bf16.mxu0 0
        %4920 = vmatpush1.bf16.msra.mxu0 0
        %4921 = vmatprep.subr.bf16.mxu0 0
        %4922 = vmatpush1.bf16.msra.mxu0 0
        %4923 = vmatprep.subr.bf16.mxu0 0
        %4924 = vmatpush1.bf16.msra.mxu0 0
        %4925 = vmatprep.subr.bf16.mxu0 0
        %4926 = vmatpush1.bf16.msra.mxu0 0
        %4927 = vmatprep.mubr.bf16.mxu0 0
        %4928 = vmatmul.mubr.bf16.gmra.mrb[0].mxu0 %v4815
        %v4929 = vpop.f32.mrb[0].mxu0
        %v4930 = vadd.f32 0.0, %v4929
        %v4931 = vpop.f32.mrb[0].mxu0
        %v4932 = vpop.f32.mrb[0].mxu0
        %v4933 = vadd.f32 0.0, %v4932
        %v4934 = vpop.f32.mrb[0].mxu0
        %4935 = vmatprep.mubr.bf16.mxu0 0
        %4936 = vmatmul.mubr.bf16.gmra.mrb[0].mxu0 %v4816
        %v4937 = vpop.f32.mrb[0].mxu0
        %v4938 = vadd.f32 0.0, %v4937
        %v4939 = vpop.f32.mrb[0].mxu0
        %v4940 = vpop.f32.mrb[0].mxu0
        %v4941 = vadd.f32 0.0, %v4940
        %v4942 = vpop.f32.mrb[0].mxu0
        %4943 = vmatprep.mubr.bf16.mxu0 0
        %4944 = vmatmul.mubr.bf16.gmra.mrb[0].mxu0 %v4817
        %v4945 = vpop.f32.mrb[0].mxu0
        %v4946 = vadd.f32 0.0, %v4945
        %v4947 = vpop.f32.mrb[0].mxu0
        %v4948 = vpop.f32.mrb[0].mxu0
        %v4949 = vadd.f32 0.0, %v4948
        %v4950 = vpop.f32.mrb[0].mxu0
        %4951 = vmatprep.mubr.bf16.mxu0 0
        %4952 = vmatmul.mubr.bf16.gmra.mrb[0].mxu0 %v4818
        %v4953 = vpop.f32.mrb[0].mxu0
        %v4954 = vadd.f32 0.0, %v4953
        %v4955 = vpop.f32.mrb[0].mxu0
        %v4956 = vpop.f32.mrb[0].mxu0
        %v4957 = vadd.f32 0.0, %v4956
        %v4958 = vpop.f32.mrb[0].mxu0
        %4959 = vmatprep.mubr.bf16.mxu0 0
        %4960 = vmatmul.mubr.bf16.gmra.mrb[0].mxu0 %v4819
        %v4961 = vpop.f32.mrb[0].mxu0
        %v4962 = vadd.f32 0.0, %v4961
        %v4963 = vpop.f32.mrb[0].mxu0
        %v4964 = vpop.f32.mrb[0].mxu0
        %v4965 = vadd.f32 0.0, %v4964
        %v4966 = vpop.f32.mrb[0].mxu0
        %4967 = vmatprep.mubr.bf16.mxu0 0
        %4968 = vmatmul.mubr.bf16.gmra.mrb[0].mxu0 %v4820
        %v4969 = vpop.f32.mrb[0].mxu0
        %v4970 = vadd.f32 0.0, %v4969
        %v4971 = vpop.f32.mrb[0].mxu0
        %v4972 = vpop.f32.mrb[0].mxu0
        %v4973 = vadd.f32 0.0, %v4972
        %v4974 = vpop.f32.mrb[0].mxu0
        %4975 = vmatprep.mubr.bf16.mxu0 0
        %4976 = vmatmul.mubr.bf16.gmra.mrb[0].mxu0 %v4821
        %v4977 = vpop.f32.mrb[0].mxu0
        %v4978 = vadd.f32 0.0, %v4977
        %v4979 = vpop.f32.mrb[0].mxu0
        %v4980 = vpop.f32.mrb[0].mxu0
        %v4981 = vadd.f32 0.0, %v4980
        %v4982 = vpop.f32.mrb[0].mxu0
        %4983 = vmatprep.mubr.bf16.mxu0 0
        %4984 = vmatmul.mubr.bf16.gmra.mrb[0].mxu0 %v4822
        %v4985 = vpop.f32.mrb[0].mxu0
        %v4986 = vadd.f32 0.0, %v4985
        %v4987 = vpop.f32.mrb[0].mxu0
        %v4988 = vpop.f32.mrb[0].mxu0
        %v4989 = vadd.f32 0.0, %v4988
        %v4990 = vpop.f32.mrb[0].mxu0
        %4991 = vmatprep.mubr.bf16.mxu0 0
        %4992 = vmatmul.mubr.bf16.gmra.mrb[0].mxu0 %v4823
        %v4993 = vpop.f32.mrb[0].mxu0
        %v4994 = vadd.f32 0.0, %v4993
        %v4995 = vpop.f32.mrb[0].mxu0
        %v4996 = vpop.f32.mrb[0].mxu0
        %v4997 = vadd.f32 0.0, %v4996
        %v4998 = vpop.f32.mrb[0].mxu0
        %4999 = vmatprep.mubr.bf16.mxu0 0
        %5000 = vmatmul.mubr.bf16.gmra.mrb[0].mxu0 %v4824
        %v5001 = vpop.f32.mrb[0].mxu0
        %v5002 = vadd.f32 0.0, %v5001
        %v5003 = vpop.f32.mrb[0].mxu0
        %v5004 = vpop.f32.mrb[0].mxu0
        %v5005 = vadd.f32 0.0, %v5004
        %v5006 = vpop.f32.mrb[0].mxu0
        %5007 = vmatprep.mubr.bf16.mxu0 0
        %5008 = vmatmul.mubr.bf16.gmra.mrb[0].mxu0 %v4825
        %v5009 = vpop.f32.mrb[0].mxu0
        %v5010 = vadd.f32 0.0, %v5009
        %v5011 = vpop.f32.mrb[0].mxu0
        %v5012 = vpop.f32.mrb[0].mxu0
        %v5013 = vadd.f32 0.0, %v5012
        %v5014 = vpop.f32.mrb[0].mxu0
        %5015 = vmatprep.mubr.bf16.mxu0 0
        %5016 = vmatmul.mubr.bf16.gmra.mrb[0].mxu0 %v4826
        %v5017 = vpop.f32.mrb[0].mxu0
        %v5018 = vadd.f32 0.0, %v5017
        %v5019 = vpop.f32.mrb[0].mxu0
        %v5020 = vpop.f32.mrb[0].mxu0
        %v5021 = vadd.f32 0.0, %v5020
        %v5022 = vpop.f32.mrb[0].mxu0
        %5023 = vmatprep.mubr.bf16.mxu0 0
        %5024 = vmatmul.mubr.bf16.gmra.mrb[0].mxu0 %v4827
        %v5025 = vpop.f32.mrb[0].mxu0
        %v5026 = vadd.f32 0.0, %v5025
        %v5027 = vpop.f32.mrb[0].mxu0
        %v5028 = vpop.f32.mrb[0].mxu0
        %v5029 = vadd.f32 0.0, %v5028
        %v5030 = vpop.f32.mrb[0].mxu0
        %5031 = vmatprep.mubr.bf16.mxu0 0
        %5032 = vmatmul.mubr.bf16.gmra.mrb[0].mxu0 %v4828
        %v5033 = vpop.f32.mrb[0].mxu0
        %v5034 = vadd.f32 0.0, %v5033
        %v5035 = vpop.f32.mrb[0].mxu0
        %v5036 = vpop.f32.mrb[0].mxu0
        %v5037 = vadd.f32 0.0, %v5036
        %v5038 = vpop.f32.mrb[0].mxu0
        %5039 = vmatprep.mubr.bf16.mxu0 0
        %5040 = vmatmul.mubr.bf16.gmra.mrb[0].mxu0 %v4829
        %v5041 = vpop.f32.mrb[0].mxu0
        %v5042 = vadd.f32 0.0, %v5041
        %v5043 = vpop.f32.mrb[0].mxu0
        %v5044 = vpop.f32.mrb[0].mxu0
        %v5045 = vadd.f32 0.0, %v5044
        %v5046 = vpop.f32.mrb[0].mxu0
        %5047 = vmatprep.mubr.bf16.mxu0 0
        %5048 = vmatmul.mubr.bf16.gmra.mrb[0].mxu0 %v4830
        %v5049 = vpop.f32.mrb[0].mxu0
        %v5050 = vadd.f32 0.0, %v5049
        %v5051 = vpop.f32.mrb[0].mxu0
        %v5052 = vpop.f32.mrb[0].mxu0
        %v5053 = vadd.f32 0.0, %v5052
        %v5054 = vpop.f32.mrb[0].mxu0
        %5055 = vdwg.mxu0
        %v5056 = vadd.f32 %v4558, %v4930
        %v5057 = vadd.f32 %v4559, %v4933
        %v5058 = vadd.f32 %v4560, %v4938
        %v5059 = vadd.f32 %v4561, %v4941
        %v5060 = vadd.f32 %v4562, %v4946
        %v5061 = vadd.f32 %v4563, %v4949
        %v5062 = vadd.f32 %v4564, %v4954
        %v5063 = vadd.f32 %v4565, %v4957
        %v5064 = vadd.f32 %v4566, %v4962
        %v5065 = vadd.f32 %v4567, %v4965
        %v5066 = vadd.f32 %v4568, %v4970
        %v5067 = vadd.f32 %v4569, %v4973
        %v5068 = vadd.f32 %v4570, %v4978
        %v5069 = vadd.f32 %v4571, %v4981
        %v5070 = vadd.f32 %v4572, %v4986
        %v5071 = vadd.f32 %v4573, %v4989
        %v5072 = vadd.f32 %v4574, %v4994
        %v5073 = vadd.f32 %v4575, %v4997
        %v5074 = vadd.f32 %v4576, %v5002
        %v5075 = vadd.f32 %v4577, %v5005
        %v5076 = vadd.f32 %v4578, %v5010
        %v5077 = vadd.f32 %v4579, %v5013
        %v5078 = vadd.f32 %v4580, %v5018
        %v5079 = vadd.f32 %v4581, %v5021
        %v5080 = vadd.f32 %v4582, %v5026
        %v5081 = vadd.f32 %v4583, %v5029
        %v5082 = vadd.f32 %v4584, %v5034
        %v5083 = vadd.f32 %v4585, %v5037
        %v5084 = vadd.f32 %v4586, %v5042
        %v5085 = vadd.f32 %v4587, %v5045
        %v5086 = vadd.f32 %v4588, %v5050
        %v5087 = vadd.f32 %v4589, %v5053
        %5088 = vst [vmem:[%s251] sm:$0xff] %v5056
        %5089 = vst [vmem:[%s251 + $0x8] sm:$0xff] %v5057
        %5090 = vst [vmem:[%s251 + $0x10] sm:$0xff] %v5058
        %5091 = vst [vmem:[%s251 + $0x18] sm:$0xff] %v5059
        %5092 = vst [vmem:[%s251 + $0x20] sm:$0xff] %v5060
        %5093 = vst [vmem:[%s251 + $0x28] sm:$0xff] %v5061
        %5094 = vst [vmem:[%s251 + $0x30] sm:$0xff] %v5062
        %5095 = vst [vmem:[%s251 + $0x38] sm:$0xff] %v5063
        %5096 = vst [vmem:[%s251 + $0x40] sm:$0xff] %v5064
        %5097 = vst [vmem:[%s251 + $0x48] sm:$0xff] %v5065
        %5098 = vst [vmem:[%s251 + $0x50] sm:$0xff] %v5066
        %5099 = vst [vmem:[%s251 + $0x58] sm:$0xff] %v5067
        %5100 = vst [vmem:[%s251 + $0x60] sm:$0xff] %v5068
        %5101 = vst [vmem:[%s251 + $0x68] sm:$0xff] %v5069
        %5102 = vst [vmem:[%s251 + $0x70] sm:$0xff] %v5070
        %5103 = vst [vmem:[%s251 + $0x78] sm:$0xff] %v5071
        %5104 = vst [vmem:[%s251 + $0x80] sm:$0xff] %v5072
        %5105 = vst [vmem:[%s251 + $0x88] sm:$0xff] %v5073
        %5106 = vst [vmem:[%s251 + $0x90] sm:$0xff] %v5074
        %5107 = vst [vmem:[%s251 + $0x98] sm:$0xff] %v5075
        %5108 = vst [vmem:[%s251 + $0xa0] sm:$0xff] %v5076
        %5109 = vst [vmem:[%s251 + $0xa8] sm:$0xff] %v5077
        %5110 = vst [vmem:[%s251 + $0xb0] sm:$0xff] %v5078
        %5111 = vst [vmem:[%s251 + $0xb8] sm:$0xff] %v5079
        %5112 = vst [vmem:[%s251 + $0xc0] sm:$0xff] %v5080
        %5113 = vst [vmem:[%s251 + $0xc8] sm:$0xff] %v5081
        %5114 = vst [vmem:[%s251 + $0xd0] sm:$0xff] %v5082
        %5115 = vst [vmem:[%s251 + $0xd8] sm:$0xff] %v5083
        %5116 = vst [vmem:[%s251 + $0xe0] sm:$0xff] %v5084
        %5117 = vst [vmem:[%s251 + $0xe8] sm:$0xff] %v5085
        %5118 = vst [vmem:[%s251 + $0xf0] sm:$0xff] %v5086
        %5119 = vst [vmem:[%s251 + $0xf8] sm:$0xff] %v5087
        %v5120 = vadd.f32 %v5056, %v5057
        %v5121 = vadd.f32 %v5120, %v5058
        %v5122 = vadd.f32 %v5121, %v5059
        %v5123 = vadd.f32 %v5122, %v5060
        %v5124 = vadd.f32 %v5123, %v5061
        %v5125 = vadd.f32 %v5124, %v5062
        %v5126 = vadd.f32 %v5125, %v5063
        %v5127 = vadd.f32 %v5126, %v5064
        %v5128 = vadd.f32 %v5127, %v5065
        %v5129 = vadd.f32 %v5128, %v5066
        %v5130 = vadd.f32 %v5129, %v5067
        %v5131 = vadd.f32 %v5130, %v5068
        %v5132 = vadd.f32 %v5131, %v5069
        %v5133 = vadd.f32 %v5132, %v5070
        %v5134 = vadd.f32 %v5133, %v5071
        %v5135 = vadd.f32 %v5134, %v5072
        %v5136 = vadd.f32 %v5135, %v5073
        %v5137 = vadd.f32 %v5136, %v5074
        %v5138 = vadd.f32 %v5137, %v5075
        %v5139 = vadd.f32 %v5138, %v5076
        %v5140 = vadd.f32 %v5139, %v5077
        %v5141 = vadd.f32 %v5140, %v5078
        %v5142 = vadd.f32 %v5141, %v5079
        %v5143 = vadd.f32 %v5142, %v5080
        %v5144 = vadd.f32 %v5143, %v5081
        %v5145 = vadd.f32 %v5144, %v5082
        %v5146 = vadd.f32 %v5145, %v5083
        %v5147 = vadd.f32 %v5146, %v5084
        %v5148 = vadd.f32 %v5147, %v5085
        %v5149 = vadd.f32 %v5148, %v5086
        %v5150 = vadd.f32 %v5149, %v5087
        %v5151 = vrot.slane %v5150, 4
        %v5152 = vadd.f32 %v5150, %v5151
        %v5153 = vrot.slane %v5152, 2
        %v5154 = vadd.f32 %v5152, %v5153
        %v5155 = vrot.slane %v5154, 1
        %v5156 = vadd.f32 %v5154, %v5155
        %5157 = vst [vmem:[%s258] sm:$0x1] %v5156
        %v5158 = vmul.f32 %v5056, %v5056
        %v5159 = vmul.f32 %v5057, %v5057
        %v5160 = vmul.f32 %v5058, %v5058
        %v5161 = vmul.f32 %v5059, %v5059
        %v5162 = vmul.f32 %v5060, %v5060
        %v5163 = vmul.f32 %v5061, %v5061
        %v5164 = vmul.f32 %v5062, %v5062
        %v5165 = vmul.f32 %v5063, %v5063
        %v5166 = vmul.f32 %v5064, %v5064
        %v5167 = vmul.f32 %v5065, %v5065
        %v5168 = vmul.f32 %v5066, %v5066
        %v5169 = vmul.f32 %v5067, %v5067
        %v5170 = vmul.f32 %v5068, %v5068
        %v5171 = vmul.f32 %v5069, %v5069
        %v5172 = vmul.f32 %v5070, %v5070
        %v5173 = vmul.f32 %v5071, %v5071
        %v5174 = vmul.f32 %v5072, %v5072
        %v5175 = vmul.f32 %v5073, %v5073
        %v5176 = vmul.f32 %v5074, %v5074
        %v5177 = vmul.f32 %v5075, %v5075
        %v5178 = vmul.f32 %v5076, %v5076
        %v5179 = vmul.f32 %v5077, %v5077
        %v5180 = vmul.f32 %v5078, %v5078
        %v5181 = vmul.f32 %v5079, %v5079
        %v5182 = vmul.f32 %v5080, %v5080
        %v5183 = vmul.f32 %v5081, %v5081
        %v5184 = vmul.f32 %v5082, %v5082
        %v5185 = vmul.f32 %v5083, %v5083
        %v5186 = vmul.f32 %v5084, %v5084
        %v5187 = vmul.f32 %v5085, %v5085
        %v5188 = vmul.f32 %v5086, %v5086
        %v5189 = vmul.f32 %v5087, %v5087
        %v5190 = vadd.f32 %v5158, %v5159
        %v5191 = vadd.f32 %v5190, %v5160
        %v5192 = vadd.f32 %v5191, %v5161
        %v5193 = vadd.f32 %v5192, %v5162
        %v5194 = vadd.f32 %v5193, %v5163
        %v5195 = vadd.f32 %v5194, %v5164
        %v5196 = vadd.f32 %v5195, %v5165
        %v5197 = vadd.f32 %v5196, %v5166
        %v5198 = vadd.f32 %v5197, %v5167
        %v5199 = vadd.f32 %v5198, %v5168
        %v5200 = vadd.f32 %v5199, %v5169
        %v5201 = vadd.f32 %v5200, %v5170
        %v5202 = vadd.f32 %v5201, %v5171
        %v5203 = vadd.f32 %v5202, %v5172
        %v5204 = vadd.f32 %v5203, %v5173
        %v5205 = vadd.f32 %v5204, %v5174
        %v5206 = vadd.f32 %v5205, %v5175
        %v5207 = vadd.f32 %v5206, %v5176
        %v5208 = vadd.f32 %v5207, %v5177
        %v5209 = vadd.f32 %v5208, %v5178
        %v5210 = vadd.f32 %v5209, %v5179
        %v5211 = vadd.f32 %v5210, %v5180
        %v5212 = vadd.f32 %v5211, %v5181
        %v5213 = vadd.f32 %v5212, %v5182
        %v5214 = vadd.f32 %v5213, %v5183
        %v5215 = vadd.f32 %v5214, %v5184
        %v5216 = vadd.f32 %v5215, %v5185
        %v5217 = vadd.f32 %v5216, %v5186
        %v5218 = vadd.f32 %v5217, %v5187
        %v5219 = vadd.f32 %v5218, %v5188
        %v5220 = vadd.f32 %v5219, %v5189
        %v5221 = vrot.slane %v5220, 4
        %v5222 = vadd.f32 %v5220, %v5221
        %v5223 = vrot.slane %v5222, 2
        %v5224 = vadd.f32 %v5222, %v5223
        %v5225 = vrot.slane %v5224, 1
        %v5226 = vadd.f32 %v5224, %v5225
        %5227 = vst [vmem:[%s258 + $0x1] sm:$0x1] %v5226
        %v5228 = vld [vmem:[%s1810] sm:$0xf]
        %v5229 = vld [vmem:[%s1810 + $0x4] sm:$0xf]
        %v5230 = vld [vmem:[%s1810 + $0x8] sm:$0x1]
        %v5231 = vld [vmem:[%s1810 + $0xc] sm:$0xf]
        %v5232 = vld [vmem:[%s1810 + $0x10] sm:$0xf]
        %v5233 = vld [vmem:[%s1810 + $0x14] sm:$0x1]
        %v5234 = vld [vmem:[%s1810 + $0x18] sm:$0xf]
        %v5235 = vld [vmem:[%s1810 + $0x1c] sm:$0xf]
        %v5236 = vld [vmem:[%s1810 + $0x20] sm:$0x1]
        %v5237 = vld [vmem:[%s1810 + $0x24] sm:$0xf]
        %v5238 = vld [vmem:[%s1810 + $0x28] sm:$0xf]
        %v5239 = vld [vmem:[%s1810 + $0x2c] sm:$0x1]
        %v5240 = vld [vmem:[%s1810 + $0x30] sm:$0xf]
        %v5241 = vld [vmem:[%s1810 + $0x34] sm:$0xf]
        %v5242 = vld [vmem:[%s1810 + $0x38] sm:$0x1]
        %v5243 = vld [vmem:[%s1810 + $0x3c] sm:$0xf]
        %v5244 = vld [vmem:[%s1810 + $0x40] sm:$0xf]
        %v5245 = vld [vmem:[%s1810 + $0x44] sm:$0x1]
        %v5246 = vld [vmem:[%s1810 + $0x48] sm:$0xf]
        %v5247 = vld [vmem:[%s1810 + $0x4c] sm:$0xf]
        %v5248 = vld [vmem:[%s1810 + $0x50] sm:$0x1]
        %v5249 = vld [vmem:[%s1810 + $0x54] sm:$0xf]
        %v5250 = vld [vmem:[%s1810 + $0x58] sm:$0xf]
        %v5251 = vld [vmem:[%s1810 + $0x5c] sm:$0x1]
        %v5252 = vld [vmem:[%s1810 + $0x60] sm:$0xf]
        %v5253 = vld [vmem:[%s1810 + $0x64] sm:$0xf]
        %v5254 = vld [vmem:[%s1810 + $0x68] sm:$0x1]
        %v5255 = vld [vmem:[%s1810 + $0x6c] sm:$0xf]
        %v5256 = vld [vmem:[%s1810 + $0x70] sm:$0xf]
        %v5257 = vld [vmem:[%s1810 + $0x74] sm:$0x1]
        %v5258 = vld [vmem:[%s1810 + $0x78] sm:$0xf]
        %v5259 = vld [vmem:[%s1810 + $0x7c] sm:$0xf]
        %v5260 = vld [vmem:[%s1810 + $0x80] sm:$0x1]
        %v5261 = vld [vmem:[%s1810 + $0x84] sm:$0xf]
        %v5262 = vld [vmem:[%s1810 + $0x88] sm:$0xf]
        %v5263 = vld [vmem:[%s1810 + $0x8c] sm:$0x1]
        %v5264 = vld [vmem:[%s1810 + $0x90] sm:$0xf]
        %v5265 = vld [vmem:[%s1810 + $0x94] sm:$0xf]
        %v5266 = vld [vmem:[%s1810 + $0x98] sm:$0x1]
        %v5267 = vld [vmem:[%s1810 + $0x9c] sm:$0xf]
        %v5268 = vld [vmem:[%s1810 + $0xa0] sm:$0xf]
        %v5269 = vld [vmem:[%s1810 + $0xa4] sm:$0x1]
        %v5270 = vld [vmem:[%s1810 + $0xa8] sm:$0xf]
        %v5271 = vld [vmem:[%s1810 + $0xac] sm:$0xf]
        %v5272 = vld [vmem:[%s1810 + $0xb0] sm:$0x1]
        %v5273 = vld [vmem:[%s1810 + $0xb4] sm:$0xf]
        %v5274 = vld [vmem:[%s1810 + $0xb8] sm:$0xf]
        %v5275 = vld [vmem:[%s1810 + $0xbc] sm:$0x1]
        %v5277 = vshrl.u32 %v5228, 16
        %v5279 = vrot.slane %v5277, 4
        %v5280 = vshll.u32 %v5228, 16
        %v5282 = vrot.slane %v5280, 5
        %v5283 = vor.u32 %v5279, %v5282
        %v5284 = vrot.slane %v5283, 4
        %v5286 = vshll.u32 %v5229, 16
        %v5288 = vrot.slane %v5286, 5
        %v5289 = vsel %vm345, %v5284, %v5288
        %v5290 = vshrl.u32 %v5229, 16
        %v5292 = vrot.slane %v5290, 4
        %v5293 = vor.u32 %v5292, %v5288
        %v5294 = vrot.slane %v5293, 4
        %v5296 = vshll.u32 %v5230, 16
        %v5298 = vrot.slane %v5296, 5
        %v5299 = vsel %vm345, %v5294, %v5298
        %v5301 = vshrl.u32 %v5231, 16
        %v5303 = vrot.slane %v5301, 4
        %v5304 = vshll.u32 %v5231, 16
        %v5306 = vrot.slane %v5304, 5
        %v5307 = vor.u32 %v5303, %v5306
        %v5308 = vrot.slane %v5307, 4
        %v5310 = vshll.u32 %v5232, 16
        %v5312 = vrot.slane %v5310, 5
        %v5313 = vsel %vm345, %v5308, %v5312
        %v5314 = vshrl.u32 %v5232, 16
        %v5316 = vrot.slane %v5314, 4
        %v5317 = vor.u32 %v5316, %v5312
        %v5318 = vrot.slane %v5317, 4
        %v5320 = vshll.u32 %v5233, 16
        %v5322 = vrot.slane %v5320, 5
        %v5323 = vsel %vm345, %v5318, %v5322
        %v5325 = vshrl.u32 %v5234, 16
        %v5327 = vrot.slane %v5325, 4
        %v5328 = vshll.u32 %v5234, 16
        %v5330 = vrot.slane %v5328, 5
        %v5331 = vor.u32 %v5327, %v5330
        %v5332 = vrot.slane %v5331, 4
        %v5334 = vshll.u32 %v5235, 16
        %v5336 = vrot.slane %v5334, 5
        %v5337 = vsel %vm345, %v5332, %v5336
        %v5338 = vshrl.u32 %v5235, 16
        %v5340 = vrot.slane %v5338, 4
        %v5341 = vor.u32 %v5340, %v5336
        %v5342 = vrot.slane %v5341, 4
        %v5344 = vshll.u32 %v5236, 16
        %v5346 = vrot.slane %v5344, 5
        %v5347 = vsel %vm345, %v5342, %v5346
        %v5349 = vshrl.u32 %v5237, 16
        %v5351 = vrot.slane %v5349, 4
        %v5352 = vshll.u32 %v5237, 16
        %v5354 = vrot.slane %v5352, 5
        %v5355 = vor.u32 %v5351, %v5354
        %v5356 = vrot.slane %v5355, 4
        %v5358 = vshll.u32 %v5238, 16
        %v5360 = vrot.slane %v5358, 5
        %v5361 = vsel %vm345, %v5356, %v5360
        %v5362 = vshrl.u32 %v5238, 16
        %v5364 = vrot.slane %v5362, 4
        %v5365 = vor.u32 %v5364, %v5360
        %v5366 = vrot.slane %v5365, 4
        %v5368 = vshll.u32 %v5239, 16
        %v5370 = vrot.slane %v5368, 5
        %v5371 = vsel %vm345, %v5366, %v5370
        %v5373 = vshrl.u32 %v5240, 16
        %v5375 = vrot.slane %v5373, 4
        %v5376 = vshll.u32 %v5240, 16
        %v5378 = vrot.slane %v5376, 5
        %v5379 = vor.u32 %v5375, %v5378
        %v5380 = vrot.slane %v5379, 4
        %v5382 = vshll.u32 %v5241, 16
        %v5384 = vrot.slane %v5382, 5
        %v5385 = vsel %vm345, %v5380, %v5384
        %v5386 = vshrl.u32 %v5241, 16
        %v5388 = vrot.slane %v5386, 4
        %v5389 = vor.u32 %v5388, %v5384
        %v5390 = vrot.slane %v5389, 4
        %v5392 = vshll.u32 %v5242, 16
        %v5394 = vrot.slane %v5392, 5
        %v5395 = vsel %vm345, %v5390, %v5394
        %v5397 = vshrl.u32 %v5243, 16
        %v5399 = vrot.slane %v5397, 4
        %v5400 = vshll.u32 %v5243, 16
        %v5402 = vrot.slane %v5400, 5
        %v5403 = vor.u32 %v5399, %v5402
        %v5404 = vrot.slane %v5403, 4
        %v5406 = vshll.u32 %v5244, 16
        %v5408 = vrot.slane %v5406, 5
        %v5409 = vsel %vm345, %v5404, %v5408
        %v5410 = vshrl.u32 %v5244, 16
        %v5412 = vrot.slane %v5410, 4
        %v5413 = vor.u32 %v5412, %v5408
        %v5414 = vrot.slane %v5413, 4
        %v5416 = vshll.u32 %v5245, 16
        %v5418 = vrot.slane %v5416, 5
        %v5419 = vsel %vm345, %v5414, %v5418
        %v5421 = vshrl.u32 %v5246, 16
        %v5423 = vrot.slane %v5421, 4
        %v5424 = vshll.u32 %v5246, 16
        %v5426 = vrot.slane %v5424, 5
        %v5427 = vor.u32 %v5423, %v5426
        %v5428 = vrot.slane %v5427, 4
        %v5430 = vshll.u32 %v5247, 16
        %v5432 = vrot.slane %v5430, 5
        %v5433 = vsel %vm345, %v5428, %v5432
        %v5434 = vshrl.u32 %v5247, 16
        %v5436 = vrot.slane %v5434, 4
        %v5437 = vor.u32 %v5436, %v5432
        %v5438 = vrot.slane %v5437, 4
        %v5440 = vshll.u32 %v5248, 16
        %v5442 = vrot.slane %v5440, 5
        %v5443 = vsel %vm345, %v5438, %v5442
        %v5445 = vshrl.u32 %v5249, 16
        %v5447 = vrot.slane %v5445, 4
        %v5448 = vshll.u32 %v5249, 16
        %v5450 = vrot.slane %v5448, 5
        %v5451 = vor.u32 %v5447, %v5450
        %v5452 = vrot.slane %v5451, 4
        %v5454 = vshll.u32 %v5250, 16
        %v5456 = vrot.slane %v5454, 5
        %v5457 = vsel %vm345, %v5452, %v5456
        %v5458 = vshrl.u32 %v5250, 16
        %v5460 = vrot.slane %v5458, 4
        %v5461 = vor.u32 %v5460, %v5456
        %v5462 = vrot.slane %v5461, 4
        %v5464 = vshll.u32 %v5251, 16
        %v5466 = vrot.slane %v5464, 5
        %v5467 = vsel %vm345, %v5462, %v5466
        %v5469 = vshrl.u32 %v5252, 16
        %v5471 = vrot.slane %v5469, 4
        %v5472 = vshll.u32 %v5252, 16
        %v5474 = vrot.slane %v5472, 5
        %v5475 = vor.u32 %v5471, %v5474
        %v5476 = vrot.slane %v5475, 4
        %v5478 = vshll.u32 %v5253, 16
        %v5480 = vrot.slane %v5478, 5
        %v5481 = vsel %vm345, %v5476, %v5480
        %v5482 = vshrl.u32 %v5253, 16
        %v5484 = vrot.slane %v5482, 4
        %v5485 = vor.u32 %v5484, %v5480
        %v5486 = vrot.slane %v5485, 4
        %v5488 = vshll.u32 %v5254, 16
        %v5490 = vrot.slane %v5488, 5
        %v5491 = vsel %vm345, %v5486, %v5490
        %v5493 = vshrl.u32 %v5255, 16
        %v5495 = vrot.slane %v5493, 4
        %v5496 = vshll.u32 %v5255, 16
        %v5498 = vrot.slane %v5496, 5
        %v5499 = vor.u32 %v5495, %v5498
        %v5500 = vrot.slane %v5499, 4
        %v5502 = vshll.u32 %v5256, 16
        %v5504 = vrot.slane %v5502, 5
        %v5505 = vsel %vm345, %v5500, %v5504
        %v5506 = vshrl.u32 %v5256, 16
        %v5508 = vrot.slane %v5506, 4
        %v5509 = vor.u32 %v5508, %v5504
        %v5510 = vrot.slane %v5509, 4
        %v5512 = vshll.u32 %v5257, 16
        %v5514 = vrot.slane %v5512, 5
        %v5515 = vsel %vm345, %v5510, %v5514
        %v5517 = vshrl.u32 %v5258, 16
        %v5519 = vrot.slane %v5517, 4
        %v5520 = vshll.u32 %v5258, 16
        %v5522 = vrot.slane %v5520, 5
        %v5523 = vor.u32 %v5519, %v5522
        %v5524 = vrot.slane %v5523, 4
        %v5526 = vshll.u32 %v5259, 16
        %v5528 = vrot.slane %v5526, 5
        %v5529 = vsel %vm345, %v5524, %v5528
        %v5530 = vshrl.u32 %v5259, 16
        %v5532 = vrot.slane %v5530, 4
        %v5533 = vor.u32 %v5532, %v5528
        %v5534 = vrot.slane %v5533, 4
        %v5536 = vshll.u32 %v5260, 16
        %v5538 = vrot.slane %v5536, 5
        %v5539 = vsel %vm345, %v5534, %v5538
        %v5541 = vshrl.u32 %v5261, 16
        %v5543 = vrot.slane %v5541, 4
        %v5544 = vshll.u32 %v5261, 16
        %v5546 = vrot.slane %v5544, 5
        %v5547 = vor.u32 %v5543, %v5546
        %v5548 = vrot.slane %v5547, 4
        %v5550 = vshll.u32 %v5262, 16
        %v5552 = vrot.slane %v5550, 5
        %v5553 = vsel %vm345, %v5548, %v5552
        %v5554 = vshrl.u32 %v5262, 16
        %v5556 = vrot.slane %v5554, 4
        %v5557 = vor.u32 %v5556, %v5552
        %v5558 = vrot.slane %v5557, 4
        %v5560 = vshll.u32 %v5263, 16
        %v5562 = vrot.slane %v5560, 5
        %v5563 = vsel %vm345, %v5558, %v5562
        %v5565 = vshrl.u32 %v5264, 16
        %v5567 = vrot.slane %v5565, 4
        %v5568 = vshll.u32 %v5264, 16
        %v5570 = vrot.slane %v5568, 5
        %v5571 = vor.u32 %v5567, %v5570
        %v5572 = vrot.slane %v5571, 4
        %v5574 = vshll.u32 %v5265, 16
        %v5576 = vrot.slane %v5574, 5
        %v5577 = vsel %vm345, %v5572, %v5576
        %v5578 = vshrl.u32 %v5265, 16
        %v5580 = vrot.slane %v5578, 4
        %v5581 = vor.u32 %v5580, %v5576
        %v5582 = vrot.slane %v5581, 4
        %v5584 = vshll.u32 %v5266, 16
        %v5586 = vrot.slane %v5584, 5
        %v5587 = vsel %vm345, %v5582, %v5586
        %v5589 = vshrl.u32 %v5267, 16
        %v5591 = vrot.slane %v5589, 4
        %v5592 = vshll.u32 %v5267, 16
        %v5594 = vrot.slane %v5592, 5
        %v5595 = vor.u32 %v5591, %v5594
        %v5596 = vrot.slane %v5595, 4
        %v5598 = vshll.u32 %v5268, 16
        %v5600 = vrot.slane %v5598, 5
        %v5601 = vsel %vm345, %v5596, %v5600
        %v5602 = vshrl.u32 %v5268, 16
        %v5604 = vrot.slane %v5602, 4
        %v5605 = vor.u32 %v5604, %v5600
        %v5606 = vrot.slane %v5605, 4
        %v5608 = vshll.u32 %v5269, 16
        %v5610 = vrot.slane %v5608, 5
        %v5611 = vsel %vm345, %v5606, %v5610
        %v5613 = vshrl.u32 %v5270, 16
        %v5615 = vrot.slane %v5613, 4
        %v5616 = vshll.u32 %v5270, 16
        %v5618 = vrot.slane %v5616, 5
        %v5619 = vor.u32 %v5615, %v5618
        %v5620 = vrot.slane %v5619, 4
        %v5622 = vshll.u32 %v5271, 16
        %v5624 = vrot.slane %v5622, 5
        %v5625 = vsel %vm345, %v5620, %v5624
        %v5626 = vshrl.u32 %v5271, 16
        %v5628 = vrot.slane %v5626, 4
        %v5629 = vor.u32 %v5628, %v5624
        %v5630 = vrot.slane %v5629, 4
        %v5632 = vshll.u32 %v5272, 16
        %v5634 = vrot.slane %v5632, 5
        %v5635 = vsel %vm345, %v5630, %v5634
        %v5637 = vshrl.u32 %v5273, 16
        %v5639 = vrot.slane %v5637, 4
        %v5640 = vshll.u32 %v5273, 16
        %v5642 = vrot.slane %v5640, 5
        %v5643 = vor.u32 %v5639, %v5642
        %v5644 = vrot.slane %v5643, 4
        %v5646 = vshll.u32 %v5274, 16
        %v5648 = vrot.slane %v5646, 5
        %v5649 = vsel %vm345, %v5644, %v5648
        %v5650 = vshrl.u32 %v5274, 16
        %v5652 = vrot.slane %v5650, 4
        %v5653 = vor.u32 %v5652, %v5648
        %v5654 = vrot.slane %v5653, 4
        %v5656 = vshll.u32 %v5275, 16
        %v5658 = vrot.slane %v5656, 5
        %v5659 = vsel %vm345, %v5654, %v5658
        %v5660 = vld [vmem:[%s2] sm:$0xf]
        %v5661 = vld [vmem:[%s2 + $0x4] sm:$0xf]
        %v5662 = vld [vmem:[%s2 + $0x8] sm:$0xf]
        %v5663 = vld [vmem:[%s2 + $0xc] sm:$0xf]
        %v5664 = vld [vmem:[%s2 + $0x10] sm:$0xf]
        %v5665 = vld [vmem:[%s2 + $0x14] sm:$0xf]
        %v5666 = vld [vmem:[%s2 + $0x18] sm:$0xf]
        %v5667 = vld [vmem:[%s2 + $0x1c] sm:$0xf]
        %v5668 = vld [vmem:[%s2 + $0x20] sm:$0xf]
        %v5669 = vld [vmem:[%s2 + $0x24] sm:$0xf]
        %v5670 = vld [vmem:[%s2 + $0x28] sm:$0xf]
        %v5671 = vld [vmem:[%s2 + $0x2c] sm:$0xf]
        %v5672 = vld [vmem:[%s2 + $0x30] sm:$0xf]
        %v5673 = vld [vmem:[%s2 + $0x34] sm:$0xf]
        %v5674 = vld [vmem:[%s2 + $0x38] sm:$0xf]
        %v5675 = vld [vmem:[%s2 + $0x3c] sm:$0xf]
        %v5676 = vunpack.c.l.b16 %v5289
        %v5677 = vunpack.c.l.b16 %v5299
        %v5678 = vunpack.c.l.b16 %v5313
        %v5679 = vunpack.c.l.b16 %v5323
        %v5680 = vunpack.c.l.b16 %v5337
        %v5681 = vunpack.c.l.b16 %v5347
        %v5682 = vunpack.c.l.b16 %v5361
        %v5683 = vunpack.c.l.b16 %v5371
        %v5684 = vunpack.c.l.b16 %v5385
        %v5685 = vunpack.c.l.b16 %v5395
        %v5686 = vunpack.c.l.b16 %v5409
        %v5687 = vunpack.c.l.b16 %v5419
        %v5688 = vunpack.c.l.b16 %v5433
        %v5689 = vunpack.c.l.b16 %v5443
        %v5690 = vunpack.c.l.b16 %v5457
        %v5691 = vunpack.c.l.b16 %v5467
        %v5692 = vunpack.c.l.b16 %v5481
        %v5693 = vunpack.c.l.b16 %v5491
        %v5694 = vunpack.c.l.b16 %v5505
        %v5695 = vunpack.c.l.b16 %v5515
        %v5696 = vunpack.c.l.b16 %v5529
        %v5697 = vunpack.c.l.b16 %v5539
        %v5698 = vunpack.c.l.b16 %v5553
        %v5699 = vunpack.c.l.b16 %v5563
        %v5700 = vunpack.c.l.b16 %v5577
        %v5701 = vunpack.c.l.b16 %v5587
        %v5702 = vunpack.c.l.b16 %v5601
        %v5703 = vunpack.c.l.b16 %v5611
        %v5704 = vunpack.c.l.b16 %v5625
        %v5705 = vunpack.c.l.b16 %v5635
        %v5706 = vunpack.c.l.b16 %v5649
        %v5707 = vunpack.c.l.b16 %v5659
        %v5708 = vpack.c.b16 %v5677, %v5676
        %v5709 = vpack.c.b16 %v5679, %v5678
        %v5710 = vpack.c.b16 %v5681, %v5680
        %v5711 = vpack.c.b16 %v5683, %v5682
        %v5712 = vpack.c.b16 %v5685, %v5684
        %v5713 = vpack.c.b16 %v5687, %v5686
        %v5714 = vpack.c.b16 %v5689, %v5688
        %v5715 = vpack.c.b16 %v5691, %v5690
        %v5716 = vpack.c.b16 %v5693, %v5692
        %v5717 = vpack.c.b16 %v5695, %v5694
        %v5718 = vpack.c.b16 %v5697, %v5696
        %v5719 = vpack.c.b16 %v5699, %v5698
        %v5720 = vpack.c.b16 %v5701, %v5700
        %v5721 = vpack.c.b16 %v5703, %v5702
        %v5722 = vpack.c.b16 %v5705, %v5704
        %v5723 = vpack.c.b16 %v5707, %v5706
        %v5756 = vunpack.c.l.b16 %v5660
        %v5757 = vunpack.c.l.b16 %v5661
        %v5758 = vunpack.c.l.b16 %v5662
        %v5759 = vunpack.c.l.b16 %v5663
        %v5760 = vunpack.c.l.b16 %v5664
        %v5761 = vunpack.c.l.b16 %v5665
        %v5762 = vunpack.c.l.b16 %v5666
        %v5763 = vunpack.c.l.b16 %v5667
        %v5764 = vunpack.c.l.b16 %v5668
        %v5765 = vunpack.c.l.b16 %v5669
        %v5766 = vunpack.c.l.b16 %v5670
        %v5767 = vunpack.c.l.b16 %v5671
        %v5768 = vunpack.c.l.b16 %v5672
        %v5769 = vunpack.c.l.b16 %v5673
        %v5770 = vunpack.c.l.b16 %v5674
        %v5771 = vunpack.c.l.b16 %v5675
        %v5772 = vpack.c.b16 %v5757, %v5756
        %v5773 = vpack.c.b16 %v5759, %v5758
        %v5774 = vpack.c.b16 %v5761, %v5760
        %v5775 = vpack.c.b16 %v5763, %v5762
        %v5776 = vpack.c.b16 %v5765, %v5764
        %v5777 = vpack.c.b16 %v5767, %v5766
        %v5778 = vpack.c.b16 %v5769, %v5768
        %v5779 = vpack.c.b16 %v5771, %v5770
        %5788 = vmatprep.subr.bf16.mxu0 0
        %5789 = vmatpush1.bf16.msra.mxu0 %v5772
        %5790 = vmatprep.subr.bf16.mxu0 0
        %5791 = vmatpush1.bf16.msra.mxu0 %v5773
        %5792 = vmatprep.subr.bf16.mxu0 0
        %5793 = vmatpush1.bf16.msra.mxu0 %v5774
        %5794 = vmatprep.subr.bf16.mxu0 0
        %5795 = vmatpush1.bf16.msra.mxu0 %v5775
        %5796 = vmatprep.subr.bf16.mxu0 0
        %5797 = vmatpush1.bf16.msra.mxu0 %v5776
        %5798 = vmatprep.subr.bf16.mxu0 0
        %5799 = vmatpush1.bf16.msra.mxu0 %v5777
        %5800 = vmatprep.subr.bf16.mxu0 0
        %5801 = vmatpush1.bf16.msra.mxu0 %v5778
        %5802 = vmatprep.subr.bf16.mxu0 0
        %5803 = vmatpush1.bf16.msra.mxu0 %v5779
        %5804 = vmatprep.subr.bf16.mxu0 0
        %5805 = vmatpush1.bf16.msra.mxu0 0
        %5806 = vmatprep.subr.bf16.mxu0 0
        %5807 = vmatpush1.bf16.msra.mxu0 0
        %5808 = vmatprep.subr.bf16.mxu0 0
        %5809 = vmatpush1.bf16.msra.mxu0 0
        %5810 = vmatprep.subr.bf16.mxu0 0
        %5811 = vmatpush1.bf16.msra.mxu0 0
        %5812 = vmatprep.subr.bf16.mxu0 0
        %5813 = vmatpush1.bf16.msra.mxu0 0
        %5814 = vmatprep.subr.bf16.mxu0 0
        %5815 = vmatpush1.bf16.msra.mxu0 0
        %5816 = vmatprep.subr.bf16.mxu0 0
        %5817 = vmatpush1.bf16.msra.mxu0 0
        %5818 = vmatprep.subr.bf16.mxu0 0
        %5819 = vmatpush1.bf16.msra.mxu0 0
        %5820 = vmatprep.mubr.bf16.mxu0 0
        %5821 = vmatmul.mubr.bf16.gmra.mrb[0].mxu0 %v5708
        %v5822 = vpop.f32.mrb[0].mxu0
        %v5823 = vadd.f32 0.0, %v5822
        %v5824 = vpop.f32.mrb[0].mxu0
        %v5825 = vpop.f32.mrb[0].mxu0
        %v5826 = vadd.f32 0.0, %v5825
        %v5827 = vpop.f32.mrb[0].mxu0
        %5828 = vmatprep.mubr.bf16.mxu0 0
        %5829 = vmatmul.mubr.bf16.gmra.mrb[0].mxu0 %v5709
        %v5830 = vpop.f32.mrb[0].mxu0
        %v5831 = vadd.f32 0.0, %v5830
        %v5832 = vpop.f32.mrb[0].mxu0
        %v5833 = vpop.f32.mrb[0].mxu0
        %v5834 = vadd.f32 0.0, %v5833
        %v5835 = vpop.f32.mrb[0].mxu0
        %5836 = vmatprep.mubr.bf16.mxu0 0
        %5837 = vmatmul.mubr.bf16.gmra.mrb[0].mxu0 %v5710
        %v5838 = vpop.f32.mrb[0].mxu0
        %v5839 = vadd.f32 0.0, %v5838
        %v5840 = vpop.f32.mrb[0].mxu0
        %v5841 = vpop.f32.mrb[0].mxu0
        %v5842 = vadd.f32 0.0, %v5841
        %v5843 = vpop.f32.mrb[0].mxu0
        %5844 = vmatprep.mubr.bf16.mxu0 0
        %5845 = vmatmul.mubr.bf16.gmra.mrb[0].mxu0 %v5711
        %v5846 = vpop.f32.mrb[0].mxu0
        %v5847 = vadd.f32 0.0, %v5846
        %v5848 = vpop.f32.mrb[0].mxu0
        %v5849 = vpop.f32.mrb[0].mxu0
        %v5850 = vadd.f32 0.0, %v5849
        %v5851 = vpop.f32.mrb[0].mxu0
        %5852 = vmatprep.mubr.bf16.mxu0 0
        %5853 = vmatmul.mubr.bf16.gmra.mrb[0].mxu0 %v5712
        %v5854 = vpop.f32.mrb[0].mxu0
        %v5855 = vadd.f32 0.0, %v5854
        %v5856 = vpop.f32.mrb[0].mxu0
        %v5857 = vpop.f32.mrb[0].mxu0
        %v5858 = vadd.f32 0.0, %v5857
        %v5859 = vpop.f32.mrb[0].mxu0
        %5860 = vmatprep.mubr.bf16.mxu0 0
        %5861 = vmatmul.mubr.bf16.gmra.mrb[0].mxu0 %v5713
        %v5862 = vpop.f32.mrb[0].mxu0
        %v5863 = vadd.f32 0.0, %v5862
        %v5864 = vpop.f32.mrb[0].mxu0
        %v5865 = vpop.f32.mrb[0].mxu0
        %v5866 = vadd.f32 0.0, %v5865
        %v5867 = vpop.f32.mrb[0].mxu0
        %5868 = vmatprep.mubr.bf16.mxu0 0
        %5869 = vmatmul.mubr.bf16.gmra.mrb[0].mxu0 %v5714
        %v5870 = vpop.f32.mrb[0].mxu0
        %v5871 = vadd.f32 0.0, %v5870
        %v5872 = vpop.f32.mrb[0].mxu0
        %v5873 = vpop.f32.mrb[0].mxu0
        %v5874 = vadd.f32 0.0, %v5873
        %v5875 = vpop.f32.mrb[0].mxu0
        %5876 = vmatprep.mubr.bf16.mxu0 0
        %5877 = vmatmul.mubr.bf16.gmra.mrb[0].mxu0 %v5715
        %v5878 = vpop.f32.mrb[0].mxu0
        %v5879 = vadd.f32 0.0, %v5878
        %v5880 = vpop.f32.mrb[0].mxu0
        %v5881 = vpop.f32.mrb[0].mxu0
        %v5882 = vadd.f32 0.0, %v5881
        %v5883 = vpop.f32.mrb[0].mxu0
        %5884 = vmatprep.mubr.bf16.mxu0 0
        %5885 = vmatmul.mubr.bf16.gmra.mrb[0].mxu0 %v5716
        %v5886 = vpop.f32.mrb[0].mxu0
        %v5887 = vadd.f32 0.0, %v5886
        %v5888 = vpop.f32.mrb[0].mxu0
        %v5889 = vpop.f32.mrb[0].mxu0
        %v5890 = vadd.f32 0.0, %v5889
        %v5891 = vpop.f32.mrb[0].mxu0
        %5892 = vmatprep.mubr.bf16.mxu0 0
        %5893 = vmatmul.mubr.bf16.gmra.mrb[0].mxu0 %v5717
        %v5894 = vpop.f32.mrb[0].mxu0
        %v5895 = vadd.f32 0.0, %v5894
        %v5896 = vpop.f32.mrb[0].mxu0
        %v5897 = vpop.f32.mrb[0].mxu0
        %v5898 = vadd.f32 0.0, %v5897
        %v5899 = vpop.f32.mrb[0].mxu0
        %5900 = vmatprep.mubr.bf16.mxu0 0
        %5901 = vmatmul.mubr.bf16.gmra.mrb[0].mxu0 %v5718
        %v5902 = vpop.f32.mrb[0].mxu0
        %v5903 = vadd.f32 0.0, %v5902
        %v5904 = vpop.f32.mrb[0].mxu0
        %v5905 = vpop.f32.mrb[0].mxu0
        %v5906 = vadd.f32 0.0, %v5905
        %v5907 = vpop.f32.mrb[0].mxu0
        %5908 = vmatprep.mubr.bf16.mxu0 0
        %5909 = vmatmul.mubr.bf16.gmra.mrb[0].mxu0 %v5719
        %v5910 = vpop.f32.mrb[0].mxu0
        %v5911 = vadd.f32 0.0, %v5910
        %v5912 = vpop.f32.mrb[0].mxu0
        %v5913 = vpop.f32.mrb[0].mxu0
        %v5914 = vadd.f32 0.0, %v5913
        %v5915 = vpop.f32.mrb[0].mxu0
        %5916 = vmatprep.mubr.bf16.mxu0 0
        %5917 = vmatmul.mubr.bf16.gmra.mrb[0].mxu0 %v5720
        %v5918 = vpop.f32.mrb[0].mxu0
        %v5919 = vadd.f32 0.0, %v5918
        %v5920 = vpop.f32.mrb[0].mxu0
        %v5921 = vpop.f32.mrb[0].mxu0
        %v5922 = vadd.f32 0.0, %v5921
        %v5923 = vpop.f32.mrb[0].mxu0
        %5924 = vmatprep.mubr.bf16.mxu0 0
        %5925 = vmatmul.mubr.bf16.gmra.mrb[0].mxu0 %v5721
        %v5926 = vpop.f32.mrb[0].mxu0
        %v5927 = vadd.f32 0.0, %v5926
        %v5928 = vpop.f32.mrb[0].mxu0
        %v5929 = vpop.f32.mrb[0].mxu0
        %v5930 = vadd.f32 0.0, %v5929
        %v5931 = vpop.f32.mrb[0].mxu0
        %5932 = vmatprep.mubr.bf16.mxu0 0
        %5933 = vmatmul.mubr.bf16.gmra.mrb[0].mxu0 %v5722
        %v5934 = vpop.f32.mrb[0].mxu0
        %v5935 = vadd.f32 0.0, %v5934
        %v5936 = vpop.f32.mrb[0].mxu0
        %v5937 = vpop.f32.mrb[0].mxu0
        %v5938 = vadd.f32 0.0, %v5937
        %v5939 = vpop.f32.mrb[0].mxu0
        %5940 = vmatprep.mubr.bf16.mxu0 0
        %5941 = vmatmul.mubr.bf16.gmra.mrb[0].mxu0 %v5723
        %v5942 = vpop.f32.mrb[0].mxu0
        %v5943 = vadd.f32 0.0, %v5942
        %v5944 = vpop.f32.mrb[0].mxu0
        %v5945 = vpop.f32.mrb[0].mxu0
        %v5946 = vadd.f32 0.0, %v5945
        %v5947 = vpop.f32.mrb[0].mxu0
        %5948 = vdwg.mxu0
        %5949 = vst [vmem:[%s265] sm:$0xff] %v5823
        %5950 = vst [vmem:[%s265 + $0x8] sm:$0xff] %v5826
        %5951 = vst [vmem:[%s265 + $0x10] sm:$0xff] %v5831
        %5952 = vst [vmem:[%s265 + $0x18] sm:$0xff] %v5834
        %5953 = vst [vmem:[%s265 + $0x20] sm:$0xff] %v5839
        %5954 = vst [vmem:[%s265 + $0x28] sm:$0xff] %v5842
        %5955 = vst [vmem:[%s265 + $0x30] sm:$0xff] %v5847
        %5956 = vst [vmem:[%s265 + $0x38] sm:$0xff] %v5850
        %5957 = vst [vmem:[%s265 + $0x40] sm:$0xff] %v5855
        %5958 = vst [vmem:[%s265 + $0x48] sm:$0xff] %v5858
        %5959 = vst [vmem:[%s265 + $0x50] sm:$0xff] %v5863
        %5960 = vst [vmem:[%s265 + $0x58] sm:$0xff] %v5866
        %5961 = vst [vmem:[%s265 + $0x60] sm:$0xff] %v5871
        %5962 = vst [vmem:[%s265 + $0x68] sm:$0xff] %v5874
        %5963 = vst [vmem:[%s265 + $0x70] sm:$0xff] %v5879
        %5964 = vst [vmem:[%s265 + $0x78] sm:$0xff] %v5882
        %5965 = vst [vmem:[%s265 + $0x80] sm:$0xff] %v5887
        %5966 = vst [vmem:[%s265 + $0x88] sm:$0xff] %v5890
        %5967 = vst [vmem:[%s265 + $0x90] sm:$0xff] %v5895
        %5968 = vst [vmem:[%s265 + $0x98] sm:$0xff] %v5898
        %5969 = vst [vmem:[%s265 + $0xa0] sm:$0xff] %v5903
        %5970 = vst [vmem:[%s265 + $0xa8] sm:$0xff] %v5906
        %5971 = vst [vmem:[%s265 + $0xb0] sm:$0xff] %v5911
        %5972 = vst [vmem:[%s265 + $0xb8] sm:$0xff] %v5914
        %5973 = vst [vmem:[%s265 + $0xc0] sm:$0xff] %v5919
        %5974 = vst [vmem:[%s265 + $0xc8] sm:$0xff] %v5922
        %5975 = vst [vmem:[%s265 + $0xd0] sm:$0xff] %v5927
        %5976 = vst [vmem:[%s265 + $0xd8] sm:$0xff] %v5930
        %5977 = vst [vmem:[%s265 + $0xe0] sm:$0xff] %v5935
        %5978 = vst [vmem:[%s265 + $0xe8] sm:$0xff] %v5938
        %5979 = vst [vmem:[%s265 + $0xf0] sm:$0xff] %v5943
        %5980 = vst [vmem:[%s265 + $0xf8] sm:$0xff] %v5946
        %v5981 = vadd.f32 %v5823, %v5826
        %v5982 = vadd.f32 %v5981, %v5831
        %v5983 = vadd.f32 %v5982, %v5834
        %v5984 = vadd.f32 %v5983, %v5839
        %v5985 = vadd.f32 %v5984, %v5842
        %v5986 = vadd.f32 %v5985, %v5847
        %v5987 = vadd.f32 %v5986, %v5850
        %v5988 = vadd.f32 %v5987, %v5855
        %v5989 = vadd.f32 %v5988, %v5858
        %v5990 = vadd.f32 %v5989, %v5863
        %v5991 = vadd.f32 %v5990, %v5866
        %v5992 = vadd.f32 %v5991, %v5871
        %v5993 = vadd.f32 %v5992, %v5874
        %v5994 = vadd.f32 %v5993, %v5879
        %v5995 = vadd.f32 %v5994, %v5882
        %v5996 = vadd.f32 %v5995, %v5887
        %v5997 = vadd.f32 %v5996, %v5890
        %v5998 = vadd.f32 %v5997, %v5895
        %v5999 = vadd.f32 %v5998, %v5898
        %v6000 = vadd.f32 %v5999, %v5903
        %v6001 = vadd.f32 %v6000, %v5906
        %v6002 = vadd.f32 %v6001, %v5911
        %v6003 = vadd.f32 %v6002, %v5914
        %v6004 = vadd.f32 %v6003, %v5919
        %v6005 = vadd.f32 %v6004, %v5922
        %v6006 = vadd.f32 %v6005, %v5927
        %v6007 = vadd.f32 %v6006, %v5930
        %v6008 = vadd.f32 %v6007, %v5935
        %v6009 = vadd.f32 %v6008, %v5938
        %v6010 = vadd.f32 %v6009, %v5943
        %v6011 = vadd.f32 %v6010, %v5946
        %v6012 = vrot.slane %v6011, 4
        %v6013 = vadd.f32 %v6011, %v6012
        %v6014 = vrot.slane %v6013, 2
        %v6015 = vadd.f32 %v6013, %v6014
        %v6016 = vrot.slane %v6015, 1
        %v6017 = vadd.f32 %v6015, %v6016
        %6018 = vst [vmem:[%s272] sm:$0x1] %v6017
        %v6019 = vmul.f32 %v5823, %v5823
        %v6020 = vmul.f32 %v5826, %v5826
        %v6021 = vmul.f32 %v5831, %v5831
        %v6022 = vmul.f32 %v5834, %v5834
        %v6023 = vmul.f32 %v5839, %v5839
        %v6024 = vmul.f32 %v5842, %v5842
        %v6025 = vmul.f32 %v5847, %v5847
        %v6026 = vmul.f32 %v5850, %v5850
        %v6027 = vmul.f32 %v5855, %v5855
        %v6028 = vmul.f32 %v5858, %v5858
        %v6029 = vmul.f32 %v5863, %v5863
        %v6030 = vmul.f32 %v5866, %v5866
        %v6031 = vmul.f32 %v5871, %v5871
        %v6032 = vmul.f32 %v5874, %v5874
        %v6033 = vmul.f32 %v5879, %v5879
        %v6034 = vmul.f32 %v5882, %v5882
        %v6035 = vmul.f32 %v5887, %v5887
        %v6036 = vmul.f32 %v5890, %v5890
        %v6037 = vmul.f32 %v5895, %v5895
        %v6038 = vmul.f32 %v5898, %v5898
        %v6039 = vmul.f32 %v5903, %v5903
        %v6040 = vmul.f32 %v5906, %v5906
        %v6041 = vmul.f32 %v5911, %v5911
        %v6042 = vmul.f32 %v5914, %v5914
        %v6043 = vmul.f32 %v5919, %v5919
        %v6044 = vmul.f32 %v5922, %v5922
        %v6045 = vmul.f32 %v5927, %v5927
        %v6046 = vmul.f32 %v5930, %v5930
        %v6047 = vmul.f32 %v5935, %v5935
        %v6048 = vmul.f32 %v5938, %v5938
        %v6049 = vmul.f32 %v5943, %v5943
        %v6050 = vmul.f32 %v5946, %v5946
        %v6051 = vadd.f32 %v6019, %v6020
        %v6052 = vadd.f32 %v6051, %v6021
        %v6053 = vadd.f32 %v6052, %v6022
        %v6054 = vadd.f32 %v6053, %v6023
        %v6055 = vadd.f32 %v6054, %v6024
        %v6056 = vadd.f32 %v6055, %v6025
        %v6057 = vadd.f32 %v6056, %v6026
        %v6058 = vadd.f32 %v6057, %v6027
        %v6059 = vadd.f32 %v6058, %v6028
        %v6060 = vadd.f32 %v6059, %v6029
        %v6061 = vadd.f32 %v6060, %v6030
        %v6062 = vadd.f32 %v6061, %v6031
        %v6063 = vadd.f32 %v6062, %v6032
        %v6064 = vadd.f32 %v6063, %v6033
        %v6065 = vadd.f32 %v6064, %v6034
        %v6066 = vadd.f32 %v6065, %v6035
        %v6067 = vadd.f32 %v6066, %v6036
        %v6068 = vadd.f32 %v6067, %v6037
        %v6069 = vadd.f32 %v6068, %v6038
        %v6070 = vadd.f32 %v6069, %v6039
        %v6071 = vadd.f32 %v6070, %v6040
        %v6072 = vadd.f32 %v6071, %v6041
        %v6073 = vadd.f32 %v6072, %v6042
        %v6074 = vadd.f32 %v6073, %v6043
        %v6075 = vadd.f32 %v6074, %v6044
        %v6076 = vadd.f32 %v6075, %v6045
        %v6077 = vadd.f32 %v6076, %v6046
        %v6078 = vadd.f32 %v6077, %v6047
        %v6079 = vadd.f32 %v6078, %v6048
        %v6080 = vadd.f32 %v6079, %v6049
        %v6081 = vadd.f32 %v6080, %v6050
        %v6082 = vrot.slane %v6081, 4
        %v6083 = vadd.f32 %v6081, %v6082
        %v6084 = vrot.slane %v6083, 2
        %v6085 = vadd.f32 %v6083, %v6084
        %v6086 = vrot.slane %v6085, 1
        %v6087 = vadd.f32 %v6085, %v6086
        %6088 = vst [vmem:[%s272 + $0x1] sm:$0x1] %v6087
        %s6089 = sand.u32 %s103, 1
        %s6090 = scalar_lea.sflag [#allocation3], %s6089
        %s6091 = sand.u32 %s103, 1
        %s6092 = smul.addr %s6091, 256
        %s6093 = scalar_lea.vmem [#allocation2], %s6092
        %s6094 = sand.u32 %s27, 1
        %s6095 = scalar_lea.sflag [#allocation5], %s6094
        %s6096 = sand.u32 %s129, 1
        %s6097 = smul.addr %s6096, 2
        %s6098 = scalar_lea.vmem [#allocation4], %s6097
        %s6099 = sand.u32 %s27, 1
        %s6100 = scalar_lea.sflag [#allocation5], %s6099
        %s6101 = sand.u32 %s155, 1
        %s6102 = smul.addr %s6101, 256
        %s6103 = scalar_lea.vmem [#allocation6], %s6102
        %s6104 = sand.u32 %s181, 1
        %s6105 = scalar_lea.sflag [#allocation8], %s6104
        %s6106 = sand.u32 %s181, 1
        %s6107 = smul.addr %s6106, 2
        %s6108 = scalar_lea.vmem [#allocation7], %s6107
        // Predicated region
        $region33: #{tpu_custom_call.1} parent=31 // pred_check
          %p6109 = pneg %p113
        $region34: #{tpu_custom_call.1} parent=31 // pred_check_branch
          %6111 = sbr.rel (%p6109) target = $region36
        $region35: #{tpu_custom_call.1} parent=31 // pred_region
          %s6113 = ssub.s32 4096, 4096
          %6114 = vsyncadd %s6090, %s6113
          %s6115 = smul.addr %s27, 32
          %s6116 = smul.addr %s6115, 128
          %s6117 = scalar_lea.hbm %s3, %s6116
          %s6118 = sshll.u32 %s6093, 4
          %s6119 = int_to_ptr.vmem [resolvable:$true] %s6118
          %6124 = dma.vmem_to_hbm [thread:$0]  %s6119, 4096, %s6117, %s6090, 128, 128, 8
        $region36: #{tpu_custom_call.1} parent=31 // pred_fallthru
          _
        // Predicated region
        $region37: #{tpu_custom_call.1} parent=31 // pred_check
          %p6125 = pneg %p139
        $region38: #{tpu_custom_call.1} parent=31 // pred_check_branch
          %6127 = sbr.rel (%p6125) target = $region40
        $region39: #{tpu_custom_call.1} parent=31 // pred_region
          %s6129 = ssub.s32 32, 32
          %6130 = vsyncadd %s6095, %s6129
          %s6131 = smul.addr %s27, 32
          %s6132 = scalar_lea.hbm %s4, %s6131
          %s6134 = sshll.u32 %s6098, 4
          %s6135 = int_to_ptr.vmem [resolvable:$true] %s6134
          %6137 = dma.vmem_to_hbm [thread:$0]  %s6135, 32, %s6132, %s6095
        $region40: #{tpu_custom_call.1} parent=31 // pred_fallthru
          _
        // Predicated region
        $region41: #{tpu_custom_call.1} parent=31 // pred_check
          %p6138 = pneg %p165
        $region42: #{tpu_custom_call.1} parent=31 // pred_check_branch
          %6140 = sbr.rel (%p6138) target = $region44
        $region43: #{tpu_custom_call.1} parent=31 // pred_region
          %s6142 = ssub.s32 4096, 4096
          %6143 = vsyncadd %s6100, %s6142
          %s6144 = smul.addr %s27, 32
          %s6145 = smul.addr %s6144, 128
          %s6146 = scalar_lea.hbm %s5, %s6145
          %s6147 = sshll.u32 %s6103, 4
          %s6148 = int_to_ptr.vmem [resolvable:$true] %s6147
          %6153 = dma.vmem_to_hbm [thread:$0]  %s6148, 4096, %s6146, %s6100, 128, 128, 8
        $region44: #{tpu_custom_call.1} parent=31 // pred_fallthru
          _
        // Predicated region
        $region45: #{tpu_custom_call.1} parent=31 // pred_check
          %p6154 = pneg %p191
        $region46: #{tpu_custom_call.1} parent=31 // pred_check_branch
          %6156 = sbr.rel (%p6154) target = $region48
        $region47: #{tpu_custom_call.1} parent=31 // pred_region
          %s6158 = ssub.s32 32, 32
          %6159 = vsyncadd %s6105, %s6158
          %s6160 = smul.addr %s27, 32
          %s6161 = scalar_lea.hbm %s6, %s6160
          %s6163 = sshll.u32 %s6108, 4
          %s6164 = int_to_ptr.vmem [resolvable:$true] %s6163
          %6166 = dma.vmem_to_hbm [thread:$0]  %s6164, 32, %s6161, %s6105
        $region48: #{tpu_custom_call.1} parent=31 // pred_fallthru
          _
      $region32: #{tpu_custom_call.1} parent=5 // pred_fallthru
        _
      %p6167 = scmp.le.s32.totalorder 2, %s22
      // Predicated region
      $region49: #{tpu_custom_call.1} parent=5 // pred_check
        %p6168 = pneg %p6167
      $region50: #{tpu_custom_call.1} parent=5 // pred_check_branch
        %6170 = sbr.rel (%p6168) target = $region52
      $region51: #{tpu_custom_call.1} parent=5 // pred_region
        %s6171 = ssub.s32 %s22, 2
        // Predicated region
        $region53: #{tpu_custom_call.1} parent=51 // pred_check
          %p6172 = pneg %p119
        $region54: #{tpu_custom_call.1} parent=51 // pred_check_branch
          %6174 = sbr.rel (%p6172) target = $region56
        $region55: #{tpu_custom_call.1} parent=51 // pred_region
          %s6175 = sand.u32 %s104, 1
          %s6176 = scalar_lea.sflag [#allocation3], %s6175
          %s6177 = sand.u32 %s104, 1
          %s6178 = smul.addr %s6177, 256
          %s6179 = scalar_lea.vmem [#allocation2], %s6178
          %6180 = dma.done %s6176, 4096
        $region56: #{tpu_custom_call.1} parent=51 // pred_fallthru
          _
        // Predicated region
        $region57: #{tpu_custom_call.1} parent=51 // pred_check
          %p6181 = pneg %p145
        $region58: #{tpu_custom_call.1} parent=51 // pred_check_branch
          %6183 = sbr.rel (%p6181) target = $region60
        $region59: #{tpu_custom_call.1} parent=51 // pred_region
          %s6184 = sand.u32 %s28, 1
          %s6185 = scalar_lea.sflag [#allocation5], %s6184
          %s6186 = sand.u32 %s130, 1
          %s6187 = smul.addr %s6186, 2
          %s6188 = scalar_lea.vmem [#allocation4], %s6187
          %6189 = dma.done %s6185, 32
        $region60: #{tpu_custom_call.1} parent=51 // pred_fallthru
          _
        // Predicated region
        $region61: #{tpu_custom_call.1} parent=51 // pred_check
          %p6190 = pneg %p171
        $region62: #{tpu_custom_call.1} parent=51 // pred_check_branch
          %6192 = sbr.rel (%p6190) target = $region64
        $region63: #{tpu_custom_call.1} parent=51 // pred_region
          %s6193 = sand.u32 %s28, 1
          %s6194 = scalar_lea.sflag [#allocation5], %s6193
          %s6195 = sand.u32 %s156, 1
          %s6196 = smul.addr %s6195, 256
          %s6197 = scalar_lea.vmem [#allocation6], %s6196
          %6198 = dma.done %s6194, 4096
        $region64: #{tpu_custom_call.1} parent=51 // pred_fallthru
          _
        // Predicated region
        $region65: #{tpu_custom_call.1} parent=51 // pred_check
          %p6199 = pneg %p197
        $region66: #{tpu_custom_call.1} parent=51 // pred_check_branch
          %6201 = sbr.rel (%p6199) target = $region68
        $region67: #{tpu_custom_call.1} parent=51 // pred_region
          %s6202 = sand.u32 %s182, 1
          %s6203 = scalar_lea.sflag [#allocation8], %s6202
          %s6204 = sand.u32 %s182, 1
          %s6205 = smul.addr %s6204, 2
          %s6206 = scalar_lea.vmem [#allocation7], %s6205
          %6207 = dma.done %s6203, 32
        $region68: #{tpu_custom_call.1} parent=51 // pred_fallthru
          _
      $region52: #{tpu_custom_call.1} parent=5 // pred_fallthru
        _
    $region6: #{tpu_custom_call.1} parent=1 // loop_footer
      %s26 = sadd.s32 1, %s22
    $region7: #{tpu_custom_call.1} parent=1 // loop_footer_branch
      %21 = sbr.rel target = $region3
    $region8: #{tpu_custom_call.1} parent=1 // loop_exit
      _
    %6208 = vsyncpa [#allocation3], 1
    %s6209 = scalar_lea.sflag [#allocation3], 1
    %6210 = vsyncpa %s6209, 1
    %6211 = vsyncpa [#allocation5], 1
    %s6212 = scalar_lea.sflag [#allocation5], 1
    %6213 = vsyncpa %s6212, 1
    %6214 = vsyncpa [#allocation8], 1
    %s6215 = scalar_lea.sflag [#allocation8], 1
    %6216 = vsyncpa %s6215, 1

</llo_original>
